<compile_context>
chip_gen: v5e
topology: v5e:2x2
jax: 0.10.0
libtpu: 0.0.40
codegen_flags: <defaults>
</compile_context>

<pallas_src>
import numpy as np
import jax
import jax.numpy as jnp
from jax import lax
from jax.experimental import pallas as pl
from jax.experimental.pallas import tpu as pltpu


# ----------------------------------------------------------------------------
# Single fused kernel: gather + word attention + rationale heads +
#                      sentence attention + stance heads.
# All matmul operands are 2-D with D (=128) as the contraction dim on the MXU.
# ----------------------------------------------------------------------------
def _fused_kernel(
    score_b_ref,     # SMEM (1, 1)        f32   word-attention scorer bias (scalar)
    idx_ref,         # VMEM (B*S*T, 1)    int32 flat token indices into bert rows
    bert_ref,        # VMEM (B*SEQ, D)    f32   flattened BERT hidden states
    tok_mask_ref,    # VMEM (B*S, T)      f32   token mask
    sci_b_ref,       # VMEM (B, 1)        f32   1.0 where example's domain == scifact
    wp_ref, bp_ref, ws_ref,                          # word attention params
    rat_w1_ref, rat_b1_ref, rat_w2_ref, rat_b2_ref,  # rationale heads (merged)
    st_w1_ref, st_b1_ref, st_w2_ref, st_b2_ref,      # stance heads (merged)
    rat_out_ref,     # VMEM (B*S, 2) f32  domain-selected rationale logits
    stance_out_ref,  # VMEM (B, 3)   f32  domain-selected stance logits
):
    RS, T = tok_mask_ref.shape
    B = sci_b_ref.shape[0]
    S = RS // B
    BST = idx_ref.shape[0]
    NSEQ, D = bert_ref.shape

    # ---- 1) gather bert tokens via a one-hot matmul (fused gather, exact) ----
    onehot = (idx_ref[...] ==
              lax.broadcasted_iota(jnp.int32, (BST, NSEQ), 1)).astype(jnp.float32)
    x2d = jnp.dot(onehot, bert_ref[...], preferred_element_type=jnp.float32)   # (BST, D)

    # ---- 2) word attention: proj + tanh + scorer + masked token softmax + pool ----
    proj = jnp.tanh(
        jnp.dot(x2d, wp_ref[...], preferred_element_type=jnp.float32) + bp_ref[...]
    )                                                                            # (BST, D)
    proj3 = proj.reshape(RS, T, D)
    scores = jnp.sum(proj3 * ws_ref[...], axis=-1) + score_b_ref[0, 0]           # (RS, T)

    tmask = tok_mask_ref[...] > 0.0                                              # (RS, T)
    row_any = jnp.any(tmask, axis=-1, keepdims=True)
    m = jnp.max(jnp.where(tmask, scores, -jnp.inf), axis=-1, keepdims=True)
    m = jnp.where(row_any, m, 0.0)
    e = jnp.where(tmask, jnp.exp(scores - m), 0.0)
    denom = jnp.where(row_any, jnp.sum(e, axis=-1, keepdims=True), 1.0)
    att = e / denom                       # fully-masked rows -> 0 (torch nan->0 semantics)

    x3 = x2d.reshape(RS, T, D)
    sreps = jnp.sum(att[:, :, None] * x3, axis=1)                                # (RS, D)

    # ---- 3) rationale heads: merged dense stage (D -> 2D) + block-diag (2D -> 4) ----
    h = jnp.tanh(
        jnp.dot(sreps, rat_w1_ref[...], preferred_element_type=jnp.float32)
        + rat_b1_ref[...]
    )                                                                            # (RS, 2D)
    rat_all = (jnp.dot(h, rat_w2_ref[...], preferred_element_type=jnp.float32)
               + rat_b2_ref[...])                                                # (RS, 4)
    rat3 = rat_all.reshape(B, S, 4)
    sci3 = (sci_b_ref[...] > 0.0)[:, None, :]                                    # (B, 1, 1)
    rationale3 = jnp.where(sci3, rat3[:, :, 2:4], rat3[:, :, 0:2])               # (B, S, 2)
    rat_out_ref[...] = rationale3.reshape(RS, 2)

    # ---- 4) sentence attention: -10000 masked softmax over S + pooling ----
    sent_mask3 = (tok_mask_ref[:, 0:1] > 0.0).reshape(B, S, 1)                   # (B, S, 1)
    score_col = rationale3[:, :, 1:2]                                            # (B, S, 1)
    valid_col = rationale3[:, :, 1:2] > rationale3[:, :, 0:1]                    # (B, S, 1)
    keep = jnp.logical_and(sent_mask3, valid_col)
    masked = jnp.where(keep, score_col, jnp.float32(-10000.0))                   # (B, S, 1)
    m2 = jnp.max(masked, axis=1, keepdims=True)                                  # (B, 1, 1)
    e2 = jnp.exp(masked - m2)
    att_s = e2 / jnp.sum(e2, axis=1, keepdims=True)                              # (B, S, 1)
    prep = jnp.sum(att_s * sreps.reshape(B, S, D), axis=1)                       # (B, D)

    # ---- 5) stance heads: merged dense stage (D -> 2D) + block-diag (2D -> 6) ----
    hs = jnp.tanh(
        jnp.dot(prep, st_w1_ref[...], preferred_element_type=jnp.float32)
        + st_b1_ref[...]
    )                                                                            # (B, 2D)
    st_all = (jnp.dot(hs, st_w2_ref[...], preferred_element_type=jnp.float32)
              + st_b2_ref[...])                                                  # (B, 6)
    sci_bb = sci_b_ref[...] > 0.0                                                # (B, 1)
    stance_out_ref[...] = jnp.where(sci_bb, st_all[:, 3:6], st_all[:, 0:3])      # (B, 3)


# ----------------------------------------------------------------------------
# One-time parameter prep (outside jit): fever/scifact weight merges.
# ----------------------------------------------------------------------------
def prepare_params(p):
    D = p["wa_proj_w"].shape[0]
    z2 = jnp.zeros((D, 2), jnp.float32)
    z3 = jnp.zeros((D, 3), jnp.float32)
    return {
        # WordAttention
        "wa_proj_w": p["wa_proj_w"],
        "wa_proj_b": p["wa_proj_b"],
        "wa_score_w": p["wa_score_w"],
        "wa_score_b": p["wa_score_b"].reshape(1, 1),
        # rationale: lane-concat first layer, block-diagonal second layer
        "rat_w1": jnp.concatenate([p["rf_w1"], p["rs_w1"]], axis=1),             # (D, 2D)
        "rat_b1": jnp.concatenate([p["rf_b1"], p["rs_b1"]], axis=1),             # (1, 2D)
        "rat_w2": jnp.concatenate(
            [jnp.concatenate([p["rf_w2"], z2], axis=1),
             jnp.concatenate([z2, p["rs_w2"]], axis=1)], axis=0),                # (2D, 4)
        "rat_b2": jnp.concatenate([p["rf_b2"], p["rs_b2"]], axis=1),             # (1, 4)
        # stance: same structure
        "st_w1": jnp.concatenate([p["sf_w1"], p["ss_w1"]], axis=1),              # (D, 2D)
        "st_b1": jnp.concatenate([p["sf_b1"], p["ss_b1"]], axis=1),              # (1, 2D)
        "st_w2": jnp.concatenate(
            [jnp.concatenate([p["sf_w2"], z3], axis=1),
             jnp.concatenate([z3, p["ss_w2"]], axis=1)], axis=0),                # (2D, 6)
        "st_b2": jnp.concatenate([p["sf_b2"], p["ss_b2"]], axis=1),              # (1, 6)
    }


# ----------------------------------------------------------------------------
# Full forward (inference path: labels=None, sample_p=1 so torch.rand(1)<1 is True)
# ----------------------------------------------------------------------------
def forward(prepped, bert_out, batch_indices, indices_by_batch, token_mask, domain_indices):
    B, SEQ, D = bert_out.shape
    _, S, T = token_mask.shape
    RS, BST = B * S, B * S * T

    # Guard the one-hot gather footprint (f32 (B*S*T) x (B*SEQ) matrix in VMEM).
    assert BST * (B * SEQ) * 4 <= 8 * 1024 * 1024, (
        "one-hot gather too large for the single-block kernel; switch to a "
        "per-example grid or a DMA row-gather (PrefetchScalarGridSpec).")

    # Cheap XLA glue (everything heavy happens in the kernel).
    bert_flat = bert_out.reshape(B * SEQ, D)
    flat_idx = (batch_indices * SEQ + indices_by_batch).reshape(BST, 1).astype(jnp.int32)
    tok_mask2d = token_mask.reshape(RS, T).astype(jnp.float32)
    sentence_mask = token_mask[:, :, 0]                       # returned (original order)
    sci_b = (domain_indices == 1).astype(jnp.float32)[:, None]   # (B, 1)

    kernel_args = (
        prepped["wa_score_b"],                  # SMEM scalar
        flat_idx, bert_flat, tok_mask2d, sci_b,
        prepped["wa_proj_w"], prepped["wa_proj_b"], prepped["wa_score_w"],
        prepped["rat_w1"], prepped["rat_b1"], prepped["rat_w2"], prepped["rat_b2"],
        prepped["st_w1"], prepped["st_b1"], prepped["st_w2"], prepped["st_b2"],
    )

    smem_spec = pl.BlockSpec(memory_space=pltpu.MemorySpace.SMEM)
    vmem_spec = pl.BlockSpec(memory_space=pltpu.MemorySpace.VMEM)
    in_specs = [smem_spec] + [vmem_spec] * (len(kernel_args) - 1)

    # No grid: single invocation, whole-array VMEM operands, no pipeline scaffolding.
    # TODO(synk): on v7x with large B, add a leading "parallel" batch grid axis so the
    #             second TensorCore is used; at B=4 it is a wash.
    rationale_flat, stance_all = pl.pallas_call(
        _fused_kernel,
        out_shape=(
            jax.ShapeDtypeStruct((RS, 2), jnp.float32),
            jax.ShapeDtypeStruct((B, 3), jnp.float32),
        ),
        in_specs=in_specs,
        out_specs=(vmem_spec, vmem_spec),
        compiler_params=pltpu.CompilerParams(vmem_limit_bytes=32 * 1024 * 1024),
    )(*kernel_args)

    rationale_all = rationale_flat.reshape(B, S, 2)

    # Reproduce torch's  cat([fever, scifact])[original_indices]  ordering exactly:
    # perm = [fever_indices..., scifact_indices...]; indexing the concatenation with
    # original_indices (= perm) yields a double permutation.
    perm = jnp.argsort(domain_indices, stable=True)
    idx2 = perm[perm]
    stance_out = stance_all[idx2]
    rationale_out = rationale_all[idx2]

    stance_pred = jnp.argmax(stance_out, axis=-1)
    rationale_pred = jnp.argmax(rationale_out, axis=-1)
    return rationale_pred, stance_pred, sentence_mask


if __name__ == "__main__":
    B, S, T, D, SEQ = 4, 8, 16, 128, 32   # batch, n_sentence, n_token, bert_dim, bert seq len

    key = jax.random.PRNGKey(0)
    keys = jax.random.split(key, 32)

    def nrm(k, shape, scale=0.05):
        return jax.random.normal(k, shape, dtype=jnp.float32) * scale

    params = {
        # WordAttention
        "wa_proj_w": nrm(keys[0], (D, D)), "wa_proj_b": nrm(keys[1], (1, D)),
        "wa_score_w": nrm(keys[2], (1, D)), "wa_score_b": nrm(keys[3], (1, 1)),
        # rationale_linear_fever (D->D, D->2)
        "rf_w1": nrm(keys[4], (D, D)), "rf_b1": nrm(keys[5], (1, D)),
        "rf_w2": nrm(keys[6], (D, 2)), "rf_b2": nrm(keys[7], (1, 2)),
        # rationale_linear_scifact
        "rs_w1": nrm(keys[8], (D, D)), "rs_b1": nrm(keys[9], (1, D)),
        "rs_w2": nrm(keys[10], (D, 2)), "rs_b2": nrm(keys[11], (1, 2)),
        # stance_linear_fever (D->D, D->3)
        "sf_w1": nrm(keys[12], (D, D)), "sf_b1": nrm(keys[13], (1, D)),
        "sf_w2": nrm(keys[14], (D, 3)), "sf_b2": nrm(keys[15], (1, 3)),
        # stance_linear_scifact
        "ss_w1": nrm(keys[16], (D, D)), "ss_b1": nrm(keys[17], (1, D)),
        "ss_w2": nrm(keys[18], (D, 3)), "ss_b2": nrm(keys[19], (1, 3)),
    }

    # One-time param prep (outside the jitted forward).
    prepped = jax.tree_util.tree_map(jnp.asarray, prepare_params(params))

    # Inputs (bert_out stands in for the pretrained encoder's last hidden state).
    bert_out = jax.random.normal(keys[20], (B, SEQ, D), dtype=jnp.float32)
    batch_indices = jnp.broadcast_to(jnp.arange(B, dtype=jnp.int32)[:, None, None], (B, S, T))
    indices_by_batch = jax.random.randint(keys[21], (B, S, T), 0, SEQ, dtype=jnp.int32)
    token_mask = (jax.random.uniform(keys[22], (B, S, T)) < 0.7).astype(jnp.float32)
    domain_indices = jnp.array([0, 1, 0, 1], dtype=jnp.int32)   # both domains present

    fwd = jax.jit(forward)
    rationale_pred, stance_pred, sentence_mask = jax.block_until_ready(
        fwd(prepped, bert_out, batch_indices, indices_by_batch, token_mask, domain_indices)
    )

    # Host-side list building (matches the torch post-processing).
    rp = np.asarray(rationale_pred)
    sm = np.asarray(sentence_mask) > 0          # original-order sentence mask (as in torch zip)
    rationale_out = [r[m].tolist() for r, m in zip(rp, sm)]
    stance_out = np.asarray(stance_pred).tolist()
    rationale_loss, stance_loss = None, None    # labels not provided

    assert len(stance_out) == B and len(rationale_out) == B
    print("KERNEL_OK")
</pallas_src>

<mosaic_0001>
module attributes {stable_mosaic.version = 11 : i64} {
  func.func @_fused_kernel(%arg0: memref<1x1xf32, #tpu.memory_space<smem>>, %arg1: memref<512x1xi32, #tpu.memory_space<vmem>>, %arg2: memref<128x128xf32, #tpu.memory_space<vmem>>, %arg3: memref<32x16xf32, #tpu.memory_space<vmem>>, %arg4: memref<4x1xf32, #tpu.memory_space<vmem>>, %arg5: memref<128x128xf32, #tpu.memory_space<vmem>>, %arg6: memref<1x128xf32, #tpu.memory_space<vmem>>, %arg7: memref<1x128xf32, #tpu.memory_space<vmem>>, %arg8: memref<128x256xf32, #tpu.memory_space<vmem>>, %arg9: memref<1x256xf32, #tpu.memory_space<vmem>>, %arg10: memref<256x4xf32, #tpu.memory_space<vmem>>, %arg11: memref<1x4xf32, #tpu.memory_space<vmem>>, %arg12: memref<128x256xf32, #tpu.memory_space<vmem>>, %arg13: memref<1x256xf32, #tpu.memory_space<vmem>>, %arg14: memref<256x6xf32, #tpu.memory_space<vmem>>, %arg15: memref<1x6xf32, #tpu.memory_space<vmem>>, %arg16: memref<32x2xf32, #tpu.memory_space<vmem>>, %arg17: memref<4x3xf32, #tpu.memory_space<vmem>>) attributes {dimension_semantics = [], scalar_prefetch = 0 : i64, scratch_operands = 0 : i64, tpu.core_type = #tpu.core_type<tc>} {
    %c0 = arith.constant 0 : index
    %c0_0 = arith.constant 0 : index
    %0 = vector.load %arg1[%c0, %c0_0] : memref<512x1xi32, #tpu.memory_space<vmem>>, vector<512x1xi32>
    %1 = tpu.iota {dimensions = array<i32: 1>} : vector<512x128xi32>
    %2 = vector.broadcast %0 : vector<512x1xi32> to vector<512x128xi32>
    %3 = arith.cmpi eq, %2, %1 : vector<512x128xi32>
    %4 = arith.extui %3 : vector<512x128xi1> to vector<512x128xi32>
    %5 = arith.sitofp %4 : vector<512x128xi32> to vector<512x128xf32>
    %c0_1 = arith.constant 0 : index
    %c0_2 = arith.constant 0 : index
    %6 = vector.load %arg2[%c0_1, %c0_2] : memref<128x128xf32, #tpu.memory_space<vmem>>, vector<128x128xf32>
    %cst = arith.constant dense<0.000000e+00> : vector<512x128xf32>
    %7 = tpu.matmul %5, %6, %cst {dimension_numbers = #tpu.dot_dimension_numbers<[1], [0], [0], [1], [0, 0, 1, 1], [], []>} : vector<512x128xf32>, vector<128x128xf32>, vector<512x128xf32> -> vector<512x128xf32>
    %c0_3 = arith.constant 0 : index
    %c0_4 = arith.constant 0 : index
    %8 = vector.load %arg5[%c0_3, %c0_4] : memref<128x128xf32, #tpu.memory_space<vmem>>, vector<128x128xf32>
    %cst_5 = arith.constant dense<0.000000e+00> : vector<512x128xf32>
    %9 = tpu.matmul %7, %8, %cst_5 {dimension_numbers = #tpu.dot_dimension_numbers<[1], [0], [0], [1], [0, 0, 1, 1], [], []>} : vector<512x128xf32>, vector<128x128xf32>, vector<512x128xf32> -> vector<512x128xf32>
    %c0_6 = arith.constant 0 : index
    %c0_7 = arith.constant 0 : index
    %10 = vector.load %arg6[%c0_6, %c0_7] : memref<1x128xf32, #tpu.memory_space<vmem>>, vector<1x128xf32>
    %11 = vector.broadcast %10 : vector<1x128xf32> to vector<512x128xf32>
    %12 = arith.addf %9, %11 : vector<512x128xf32>
    %13 = math.tanh %12 : vector<512x128xf32>
    %14 = vector.shape_cast %13 : vector<512x128xf32> to vector<32x16x128xf32>
    %c0_8 = arith.constant 0 : index
    %c0_9 = arith.constant 0 : index
    %15 = vector.load %arg7[%c0_8, %c0_9] : memref<1x128xf32, #tpu.memory_space<vmem>>, vector<1x128xf32>
    %16 = vector.shape_cast %15 : vector<1x128xf32> to vector<1x1x128xf32>
    %17 = vector.broadcast %16 : vector<1x1x128xf32> to vector<32x16x128xf32>
    %18 = arith.mulf %14, %17 : vector<32x16x128xf32>
    %cst_10 = arith.constant dense<0.000000e+00> : vector<32x16xf32>
    %19 = vector.multi_reduction <add>, %18, %cst_10 [2] : vector<32x16x128xf32> to vector<32x16xf32>
    %c0_11 = arith.constant 0 : index
    %c0_12 = arith.constant 0 : index
    %20 = memref.load %arg0[%c0_11, %c0_12] : memref<1x1xf32, #tpu.memory_space<smem>>
    %21 = vector.broadcast %20 : f32 to vector<32x16xf32>
    %22 = arith.addf %19, %21 : vector<32x16xf32>
    %c0_13 = arith.constant 0 : index
    %c0_14 = arith.constant 0 : index
    %23 = vector.load %arg3[%c0_13, %c0_14] : memref<32x16xf32, #tpu.memory_space<vmem>>, vector<32x16xf32>
    %cst_15 = arith.constant 0.000000e+00 : f32
    %24 = vector.broadcast %cst_15 : f32 to vector<32x16xf32>
    %25 = arith.cmpf ogt, %23, %24 : vector<32x16xf32>
    %cst_16 = arith.constant 1.000000e+00 : f32
    %cst_17 = arith.constant 0.000000e+00 : f32
    %26 = vector.broadcast %cst_16 : f32 to vector<32x16xf32>
    %27 = vector.broadcast %cst_17 : f32 to vector<32x16xf32>
    %28 = arith.select %25, %26, %27 : vector<32x16xi1>, vector<32x16xf32>
    %cst_18 = arith.constant dense<0xFF800000> : vector<32xf32>
    %29 = vector.multi_reduction <maximumf>, %28, %cst_18 [1] : vector<32x16xf32> to vector<32xf32>
    %cst_19 = arith.constant 0.000000e+00 : f32
    %30 = vector.broadcast %cst_19 : f32 to vector<32xf32>
    %31 = arith.cmpf ogt, %29, %30 : vector<32xf32>
    %32 = vector.shape_cast %31 : vector<32xi1> to vector<32x1xi1>
    %cst_20 = arith.constant 0xFF800000 : f32
    %33 = vector.broadcast %cst_20 : f32 to vector<32x16xf32>
    %34 = arith.select %25, %22, %33 : vector<32x16xi1>, vector<32x16xf32>
    %cst_21 = arith.constant dense<0xFF800000> : vector<32xf32>
    %35 = vector.multi_reduction <maximumf>, %34, %cst_21 [1] : vector<32x16xf32> to vector<32xf32>
    %36 = vector.shape_cast %35 : vector<32xf32> to vector<32x1xf32>
    %cst_22 = arith.constant 0.000000e+00 : f32
    %37 = vector.broadcast %cst_22 : f32 to vector<32x1xf32>
    %38 = arith.select %32, %36, %37 : vector<32x1xi1>, vector<32x1xf32>
    %39 = vector.broadcast %38 : vector<32x1xf32> to vector<32x16xf32>
    %40 = arith.subf %22, %39 : vector<32x16xf32>
    %41 = math.exp %40 : vector<32x16xf32>
    %cst_23 = arith.constant 0.000000e+00 : f32
    %42 = vector.broadcast %cst_23 : f32 to vector<32x16xf32>
    %43 = arith.select %25, %41, %42 : vector<32x16xi1>, vector<32x16xf32>
    %cst_24 = arith.constant dense<0.000000e+00> : vector<32xf32>
    %44 = vector.multi_reduction <add>, %43, %cst_24 [1] : vector<32x16xf32> to vector<32xf32>
    %45 = vector.shape_cast %44 : vector<32xf32> to vector<32x1xf32>
    %cst_25 = arith.constant 1.000000e+00 : f32
    %46 = vector.broadcast %cst_25 : f32 to vector<32x1xf32>
    %47 = arith.select %32, %45, %46 : vector<32x1xi1>, vector<32x1xf32>
    %48 = vector.broadcast %47 : vector<32x1xf32> to vector<32x16xf32>
    %49 = arith.divf %43, %48 : vector<32x16xf32>
    %50 = vector.shape_cast %7 : vector<512x128xf32> to vector<32x16x128xf32>
    %51 = vector.shape_cast %49 : vector<32x16xf32> to vector<32x16x1xf32>
    %52 = vector.broadcast %51 : vector<32x16x1xf32> to vector<32x16x128xf32>
    %53 = arith.mulf %52, %50 : vector<32x16x128xf32>
    %cst_26 = arith.constant dense<0.000000e+00> : vector<32x128xf32>
    %54 = vector.multi_reduction <add>, %53, %cst_26 [1] : vector<32x16x128xf32> to vector<32x128xf32>
    %c0_27 = arith.constant 0 : index
    %c0_28 = arith.constant 0 : index
    %55 = vector.load %arg8[%c0_27, %c0_28] : memref<128x256xf32, #tpu.memory_space<vmem>>, vector<128x256xf32>
    %cst_29 = arith.constant dense<0.000000e+00> : vector<32x256xf32>
    %56 = tpu.matmul %54, %55, %cst_29 {dimension_numbers = #tpu.dot_dimension_numbers<[1], [0], [0], [1], [0, 0, 1, 1], [], []>} : vector<32x128xf32>, vector<128x256xf32>, vector<32x256xf32> -> vector<32x256xf32>
    %c0_30 = arith.constant 0 : index
    %c0_31 = arith.constant 0 : index
    %57 = vector.load %arg9[%c0_30, %c0_31] : memref<1x256xf32, #tpu.memory_space<vmem>>, vector<1x256xf32>
    %58 = vector.broadcast %57 : vector<1x256xf32> to vector<32x256xf32>
    %59 = arith.addf %56, %58 : vector<32x256xf32>
    %60 = math.tanh %59 : vector<32x256xf32>
    %c0_32 = arith.constant 0 : index
    %c0_33 = arith.constant 0 : index
    %61 = vector.load %arg10[%c0_32, %c0_33] : memref<256x4xf32, #tpu.memory_space<vmem>>, vector<256x4xf32>
    %cst_34 = arith.constant dense<0.000000e+00> : vector<32x4xf32>
    %62 = tpu.matmul %60, %61, %cst_34 {dimension_numbers = #tpu.dot_dimension_numbers<[1], [0], [0], [1], [0, 0, 1, 1], [], []>} : vector<32x256xf32>, vector<256x4xf32>, vector<32x4xf32> -> vector<32x4xf32>
    %c0_35 = arith.constant 0 : index
    %c0_36 = arith.constant 0 : index
    %63 = vector.load %arg11[%c0_35, %c0_36] : memref<1x4xf32, #tpu.memory_space<vmem>>, vector<1x4xf32>
    %64 = vector.broadcast %63 : vector<1x4xf32> to vector<32x4xf32>
    %65 = arith.addf %62, %64 : vector<32x4xf32>
    %66 = vector.shape_cast %65 : vector<32x4xf32> to vector<4x8x4xf32>
    %c0_37 = arith.constant 0 : index
    %c0_38 = arith.constant 0 : index
    %67 = vector.load %arg4[%c0_37, %c0_38] : memref<4x1xf32, #tpu.memory_space<vmem>>, vector<4x1xf32>
    %cst_39 = arith.constant 0.000000e+00 : f32
    %68 = vector.broadcast %cst_39 : f32 to vector<4x1xf32>
    %69 = arith.cmpf ogt, %67, %68 : vector<4x1xf32>
    %70 = vector.shape_cast %69 : vector<4x1xi1> to vector<4x1x1xi1>
    %71 = vector.extract_strided_slice %66 {offsets = [0, 0, 2], sizes = [4, 8, 2], strides = [1, 1, 1]} : vector<4x8x4xf32> to vector<4x8x2xf32>
    %72 = vector.extract_strided_slice %66 {offsets = [0, 0, 0], sizes = [4, 8, 2], strides = [1, 1, 1]} : vector<4x8x4xf32> to vector<4x8x2xf32>
    %73 = vector.shape_cast %70 : vector<4x1x1xi1> to vector<4x1x1xi1>
    %74 = vector.broadcast %73 : vector<4x1x1xi1> to vector<4x8x2xi1>
    %75 = arith.select %74, %71, %72 : vector<4x8x2xi1>, vector<4x8x2xf32>
    %76 = vector.shape_cast %75 : vector<4x8x2xf32> to vector<32x2xf32>
    %c0_40 = arith.constant 0 : index
    %c0_41 = arith.constant 0 : index
    %77 = vector.load %arg16[%c0_40, %c0_41] : memref<32x2xf32, #tpu.memory_space<vmem>>, vector<32x2xf32>
    tpu.vector_store %arg16[%c0_40, %c0_41], %76 {strides = array<i32>} : memref<32x2xf32, #tpu.memory_space<vmem>>, vector<32x2xf32>,
    %c0_42 = arith.constant 0 : index
    %c0_43 = arith.constant 0 : index
    %78 = vector.load %arg3[%c0_42, %c0_43] : memref<32x16xf32, #tpu.memory_space<vmem>>, vector<32x1xf32>
    %cst_44 = arith.constant 0.000000e+00 : f32
    %79 = vector.broadcast %cst_44 : f32 to vector<32x1xf32>
    %80 = arith.cmpf ogt, %78, %79 : vector<32x1xf32>
    %81 = vector.shape_cast %80 : vector<32x1xi1> to vector<4x8x1xi1>
    %82 = vector.extract_strided_slice %75 {offsets = [0, 0, 1], sizes = [4, 8, 1], strides = [1, 1, 1]} : vector<4x8x2xf32> to vector<4x8x1xf32>
    %83 = vector.extract_strided_slice %75 {offsets = [0, 0, 1], sizes = [4, 8, 1], strides = [1, 1, 1]} : vector<4x8x2xf32> to vector<4x8x1xf32>
    %84 = vector.extract_strided_slice %75 {offsets = [0, 0, 0], sizes = [4, 8, 1], strides = [1, 1, 1]} : vector<4x8x2xf32> to vector<4x8x1xf32>
    %85 = arith.cmpf ogt, %83, %84 : vector<4x8x1xf32>
    %86 = arith.andi %81, %85 : vector<4x8x1xi1>
    %cst_45 = arith.constant -1.000000e+04 : f32
    %87 = vector.broadcast %cst_45 : f32 to vector<4x8x1xf32>
    %88 = arith.select %86, %82, %87 : vector<4x8x1xi1>, vector<4x8x1xf32>
    %cst_46 = arith.constant dense<0xFF800000> : vector<4x1xf32>
    %89 = vector.multi_reduction <maximumf>, %88, %cst_46 [1] : vector<4x8x1xf32> to vector<4x1xf32>
    %90 = vector.shape_cast %89 : vector<4x1xf32> to vector<4x1x1xf32>
    %91 = vector.broadcast %90 : vector<4x1x1xf32> to vector<4x8x1xf32>
    %92 = arith.subf %88, %91 : vector<4x8x1xf32>
    %93 = math.exp %92 : vector<4x8x1xf32>
    %cst_47 = arith.constant dense<0.000000e+00> : vector<4x1xf32>
    %94 = vector.multi_reduction <add>, %93, %cst_47 [1] : vector<4x8x1xf32> to vector<4x1xf32>
    %95 = vector.shape_cast %94 : vector<4x1xf32> to vector<4x1x1xf32>
    %96 = vector.broadcast %95 : vector<4x1x1xf32> to vector<4x8x1xf32>
    %97 = arith.divf %93, %96 : vector<4x8x1xf32>
    %98 = vector.shape_cast %54 : vector<32x128xf32> to vector<4x8x128xf32>
    %99 = vector.broadcast %97 : vector<4x8x1xf32> to vector<4x8x128xf32>
    %100 = arith.mulf %99, %98 : vector<4x8x128xf32>
    %cst_48 = arith.constant dense<0.000000e+00> : vector<4x128xf32>
    %101 = vector.multi_reduction <add>, %100, %cst_48 [1] : vector<4x8x128xf32> to vector<4x128xf32>
    %c0_49 = arith.constant 0 : index
    %c0_50 = arith.constant 0 : index
    %102 = vector.load %arg12[%c0_49, %c0_50] : memref<128x256xf32, #tpu.memory_space<vmem>>, vector<128x256xf32>
    %cst_51 = arith.constant dense<0.000000e+00> : vector<4x256xf32>
    %103 = tpu.matmul %101, %102, %cst_51 {dimension_numbers = #tpu.dot_dimension_numbers<[1], [0], [0], [1], [0, 0, 1, 1], [], []>} : vector<4x128xf32>, vector<128x256xf32>, vector<4x256xf32> -> vector<4x256xf32>
    %c0_52 = arith.constant 0 : index
    %c0_53 = arith.constant 0 : index
    %104 = vector.load %arg13[%c0_52, %c0_53] : memref<1x256xf32, #tpu.memory_space<vmem>>, vector<1x256xf32>
    %105 = vector.broadcast %104 : vector<1x256xf32> to vector<4x256xf32>
    %106 = arith.addf %103, %105 : vector<4x256xf32>
    %107 = math.tanh %106 : vector<4x256xf32>
    %c0_54 = arith.constant 0 : index
    %c0_55 = arith.constant 0 : index
    %108 = vector.load %arg14[%c0_54, %c0_55] : memref<256x6xf32, #tpu.memory_space<vmem>>, vector<256x6xf32>
    %cst_56 = arith.constant dense<0.000000e+00> : vector<4x6xf32>
    %109 = tpu.matmul %107, %108, %cst_56 {dimension_numbers = #tpu.dot_dimension_numbers<[1], [0], [0], [1], [0, 0, 1, 1], [], []>} : vector<4x256xf32>, vector<256x6xf32>, vector<4x6xf32> -> vector<4x6xf32>
    %c0_57 = arith.constant 0 : index
    %c0_58 = arith.constant 0 : index
    %110 = vector.load %arg15[%c0_57, %c0_58] : memref<1x6xf32, #tpu.memory_space<vmem>>, vector<1x6xf32>
    %111 = vector.broadcast %110 : vector<1x6xf32> to vector<4x6xf32>
    %112 = arith.addf %109, %111 : vector<4x6xf32>
    %c0_59 = arith.constant 0 : index
    %c0_60 = arith.constant 0 : index
    %113 = vector.load %arg4[%c0_59, %c0_60] : memref<4x1xf32, #tpu.memory_space<vmem>>, vector<4x1xf32>
    %cst_61 = arith.constant 0.000000e+00 : f32
    %114 = vector.broadcast %cst_61 : f32 to vector<4x1xf32>
    %115 = arith.cmpf ogt, %113, %114 : vector<4x1xf32>
    %116 = vector.extract_strided_slice %112 {offsets = [0, 3], sizes = [4, 3], strides = [1, 1]} : vector<4x6xf32> to vector<4x3xf32>
    %117 = vector.extract_strided_slice %112 {offsets = [0, 0], sizes = [4, 3], strides = [1, 1]} : vector<4x6xf32> to vector<4x3xf32>
    %118 = vector.shape_cast %115 : vector<4x1xi1> to vector<4x1xi1>
    %119 = vector.broadcast %118 : vector<4x1xi1> to vector<4x3xi1>
    %120 = arith.select %119, %116, %117 : vector<4x3xi1>, vector<4x3xf32>
    %c0_62 = arith.constant 0 : index
    %c0_63 = arith.constant 0 : index
    %121 = vector.load %arg17[%c0_62, %c0_63] : memref<4x3xf32, #tpu.memory_space<vmem>>, vector<4x3xf32>
    tpu.vector_store %arg17[%c0_62, %c0_63], %120 {strides = array<i32>} : memref<4x3xf32, #tpu.memory_space<vmem>>, vector<4x3xf32>,
    return
  }
}

</mosaic_0001>

<llo_original>
// kernel: forward.1
$region0: #{forward.1}
  #allocation0 [shape = 'u32[]', space=smem, size = 0x4, offset = 0x4, fixed_abs, tag = 'smem constant byte address 0x4 - core index']
  #allocation1 [shape = 'u32[72,128]{1,0:T(1,128)}', space=vmem, size = 0x9000, scoped, tag = 'internal scratch']
  #allocation2 [shape = 'f32[1,1]{1,0:T(1,128)S(6)}', space=smem, size = 0x200, scoped, tag = 'scoped memory for forward.1']
  %s0 = inlined_call_operand.<no memory space> [shape: f32[1,1], index: 0, kind: input, shape index: {}]
  %s1 = inlined_call_operand.vmem [shape: s32[512,1], index: 1, kind: input, shape index: {}]
  %s2 = inlined_call_operand.vmem [shape: f32[128,128], index: 2, kind: input, shape index: {}]
  %s3 = inlined_call_operand.vmem [shape: f32[32,16], index: 3, kind: input, shape index: {}]
  %s4 = inlined_call_operand.vmem [shape: f32[4,1], index: 4, kind: input, shape index: {}]
  %s5 = inlined_call_operand.vmem [shape: f32[128,128], index: 5, kind: input, shape index: {}]
  %s6 = inlined_call_operand.vmem [shape: f32[1,128], index: 6, kind: input, shape index: {}]
  %s7 = inlined_call_operand.vmem [shape: f32[1,128], index: 7, kind: input, shape index: {}]
  %s8 = inlined_call_operand.vmem [shape: f32[128,256], index: 8, kind: input, shape index: {}]
  %s9 = inlined_call_operand.vmem [shape: f32[1,256], index: 9, kind: input, shape index: {}]
  %s10 = inlined_call_operand.vmem [shape: f32[256,4], index: 10, kind: input, shape index: {}]
  %s11 = inlined_call_operand.vmem [shape: f32[1,4], index: 11, kind: input, shape index: {}]
  %s12 = inlined_call_operand.vmem [shape: f32[128,256], index: 12, kind: input, shape index: {}]
  %s13 = inlined_call_operand.vmem [shape: f32[1,256], index: 13, kind: input, shape index: {}]
  %s14 = inlined_call_operand.vmem [shape: f32[256,6], index: 14, kind: input, shape index: {}]
  %s15 = inlined_call_operand.vmem [shape: f32[1,6], index: 15, kind: input, shape index: {}]
  %s16 = inlined_call_operand.vmem [shape: f32[32,2], index: 16, kind: output, shape index: {0}]
  %s17 = inlined_call_operand.vmem [shape: f32[4,3], index: 17, kind: output, shape index: {1}]
  %18 = xla_tuple %s16, %s17
  %s19 = sld [smem:[#allocation0]]
  $region82: #{forward.1} parent=0
    _
  %s21 = ssub.s32 1, %s19
  %s22 = scalar_select 0, %s21, %s19
  %23 = sst [smem:[#allocation2]] %s0
  // Predicated region
  $region2: #{forward.1} parent=0 // pred_check
    _
  $region3: #{forward.1} parent=0 // pred_check_branch
    %25 = sbr.rel (0) target = $region5
  $region4: #{forward.1} parent=0 // pred_region
    _
  $region5: #{forward.1} parent=0 // pred_fallthru
    _
  // Predicated region
  $region6: #{forward.1} parent=0 // pred_check
    _
  $region7: #{forward.1} parent=0 // pred_check_branch
    %27 = sbr.rel (0) target = $region9
  $region8: #{forward.1} parent=0 // pred_region
    _
  $region9: #{forward.1} parent=0 // pred_fallthru
    _
  // Predicated region
  $region10: #{forward.1} parent=0 // pred_check
    _
  $region11: #{forward.1} parent=0 // pred_check_branch
    %29 = sbr.rel (0) target = $region13
  $region12: #{forward.1} parent=0 // pred_region
    _
  $region13: #{forward.1} parent=0 // pred_fallthru
    _
  // Predicated region
  $region14: #{forward.1} parent=0 // pred_check
    _
  $region15: #{forward.1} parent=0 // pred_check_branch
    %31 = sbr.rel (0) target = $region17
  $region16: #{forward.1} parent=0 // pred_region
    _
  $region17: #{forward.1} parent=0 // pred_fallthru
    _
  // Predicated region
  $region18: #{forward.1} parent=0 // pred_check
    _
  $region19: #{forward.1} parent=0 // pred_check_branch
    %33 = sbr.rel (0) target = $region21
  $region20: #{forward.1} parent=0 // pred_region
    _
  $region21: #{forward.1} parent=0 // pred_fallthru
    _
  // Predicated region
  $region22: #{forward.1} parent=0 // pred_check
    _
  $region23: #{forward.1} parent=0 // pred_check_branch
    %35 = sbr.rel (0) target = $region25
  $region24: #{forward.1} parent=0 // pred_region
    _
  $region25: #{forward.1} parent=0 // pred_fallthru
    _
  // Predicated region
  $region26: #{forward.1} parent=0 // pred_check
    _
  $region27: #{forward.1} parent=0 // pred_check_branch
    %37 = sbr.rel (0) target = $region29
  $region28: #{forward.1} parent=0 // pred_region
    _
  $region29: #{forward.1} parent=0 // pred_fallthru
    _
  // Predicated region
  $region30: #{forward.1} parent=0 // pred_check
    _
  $region31: #{forward.1} parent=0 // pred_check_branch
    %39 = sbr.rel (0) target = $region33
  $region32: #{forward.1} parent=0 // pred_region
    _
  $region33: #{forward.1} parent=0 // pred_fallthru
    _
  // Predicated region
  $region34: #{forward.1} parent=0 // pred_check
    _
  $region35: #{forward.1} parent=0 // pred_check_branch
    %41 = sbr.rel (0) target = $region37
  $region36: #{forward.1} parent=0 // pred_region
    _
  $region37: #{forward.1} parent=0 // pred_fallthru
    _
  // Predicated region
  $region38: #{forward.1} parent=0 // pred_check
    _
  $region39: #{forward.1} parent=0 // pred_check_branch
    %43 = sbr.rel (0) target = $region41
  $region40: #{forward.1} parent=0 // pred_region
    _
  $region41: #{forward.1} parent=0 // pred_fallthru
    _
  // Predicated region
  $region42: #{forward.1} parent=0 // pred_check
    _
  $region43: #{forward.1} parent=0 // pred_check_branch
    %45 = sbr.rel (0) target = $region45
  $region44: #{forward.1} parent=0 // pred_region
    _
  $region45: #{forward.1} parent=0 // pred_fallthru
    _
  // Predicated region
  $region46: #{forward.1} parent=0 // pred_check
    _
  $region47: #{forward.1} parent=0 // pred_check_branch
    %47 = sbr.rel (0) target = $region49
  $region48: #{forward.1} parent=0 // pred_region
    _
  $region49: #{forward.1} parent=0 // pred_fallthru
    _
  // Predicated region
  $region50: #{forward.1} parent=0 // pred_check
    _
  $region51: #{forward.1} parent=0 // pred_check_branch
    %49 = sbr.rel (0) target = $region53
  $region52: #{forward.1} parent=0 // pred_region
    _
  $region53: #{forward.1} parent=0 // pred_fallthru
    _
  // Predicated region
  $region54: #{forward.1} parent=0 // pred_check
    _
  $region55: #{forward.1} parent=0 // pred_check_branch
    %51 = sbr.rel (0) target = $region57
  $region56: #{forward.1} parent=0 // pred_region
    _
  $region57: #{forward.1} parent=0 // pred_fallthru
    _
  // Predicated region
  $region58: #{forward.1} parent=0 // pred_check
    _
  $region59: #{forward.1} parent=0 // pred_check_branch
    %53 = sbr.rel (0) target = $region61
  $region60: #{forward.1} parent=0 // pred_region
    _
  $region61: #{forward.1} parent=0 // pred_fallthru
    _
  // Predicated region
  $region62: #{forward.1} parent=0 // pred_check
    _
  $region63: #{forward.1} parent=0 // pred_check_branch
    %55 = sbr.rel (0) target = $region65
  $region64: #{forward.1} parent=0 // pred_region
    _
  $region65: #{forward.1} parent=0 // pred_fallthru
    _
  %v56 = vld [vmem:[%s1] sm:$0xff]
  %v57 = vld [vmem:[%s1 + $0x8] sm:$0xff]
  %v58 = vld [vmem:[%s1 + $0x10] sm:$0xff]
  %v59 = vld [vmem:[%s1 + $0x18] sm:$0xff]
  %v60 = vld [vmem:[%s1 + $0x20] sm:$0xff]
  %v61 = vld [vmem:[%s1 + $0x28] sm:$0xff]
  %v62 = vld [vmem:[%s1 + $0x30] sm:$0xff]
  %v63 = vld [vmem:[%s1 + $0x38] sm:$0xff]
  %v64 = vld [vmem:[%s1 + $0x40] sm:$0xff]
  %v65 = vld [vmem:[%s1 + $0x48] sm:$0xff]
  %v66 = vld [vmem:[%s1 + $0x50] sm:$0xff]
  %v67 = vld [vmem:[%s1 + $0x58] sm:$0xff]
  %v68 = vld [vmem:[%s1 + $0x60] sm:$0xff]
  %v69 = vld [vmem:[%s1 + $0x68] sm:$0xff]
  %v70 = vld [vmem:[%s1 + $0x70] sm:$0xff]
  %v71 = vld [vmem:[%s1 + $0x78] sm:$0xff]
  %v72 = vld [vmem:[%s1 + $0x80] sm:$0xff]
  %v73 = vld [vmem:[%s1 + $0x88] sm:$0xff]
  %v74 = vld [vmem:[%s1 + $0x90] sm:$0xff]
  %v75 = vld [vmem:[%s1 + $0x98] sm:$0xff]
  %v76 = vld [vmem:[%s1 + $0xa0] sm:$0xff]
  %v77 = vld [vmem:[%s1 + $0xa8] sm:$0xff]
  %v78 = vld [vmem:[%s1 + $0xb0] sm:$0xff]
  %v79 = vld [vmem:[%s1 + $0xb8] sm:$0xff]
  %v80 = vld [vmem:[%s1 + $0xc0] sm:$0xff]
  %v81 = vld [vmem:[%s1 + $0xc8] sm:$0xff]
  %v82 = vld [vmem:[%s1 + $0xd0] sm:$0xff]
  %v83 = vld [vmem:[%s1 + $0xd8] sm:$0xff]
  %v84 = vld [vmem:[%s1 + $0xe0] sm:$0xff]
  %v85 = vld [vmem:[%s1 + $0xe8] sm:$0xff]
  %v86 = vld [vmem:[%s1 + $0xf0] sm:$0xff]
  %v87 = vld [vmem:[%s1 + $0xf8] sm:$0xff]
  %v88 = vld [vmem:[%s1 + $0x100] sm:$0xff]
  %v89 = vld [vmem:[%s1 + $0x108] sm:$0xff]
  %v90 = vld [vmem:[%s1 + $0x110] sm:$0xff]
  %v91 = vld [vmem:[%s1 + $0x118] sm:$0xff]
  %v92 = vld [vmem:[%s1 + $0x120] sm:$0xff]
  %v93 = vld [vmem:[%s1 + $0x128] sm:$0xff]
  %v94 = vld [vmem:[%s1 + $0x130] sm:$0xff]
  %v95 = vld [vmem:[%s1 + $0x138] sm:$0xff]
  %v96 = vld [vmem:[%s1 + $0x140] sm:$0xff]
  %v97 = vld [vmem:[%s1 + $0x148] sm:$0xff]
  %v98 = vld [vmem:[%s1 + $0x150] sm:$0xff]
  %v99 = vld [vmem:[%s1 + $0x158] sm:$0xff]
  %v100 = vld [vmem:[%s1 + $0x160] sm:$0xff]
  %v101 = vld [vmem:[%s1 + $0x168] sm:$0xff]
  %v102 = vld [vmem:[%s1 + $0x170] sm:$0xff]
  %v103 = vld [vmem:[%s1 + $0x178] sm:$0xff]
  %v104 = vld [vmem:[%s1 + $0x180] sm:$0xff]
  %v105 = vld [vmem:[%s1 + $0x188] sm:$0xff]
  %v106 = vld [vmem:[%s1 + $0x190] sm:$0xff]
  %v107 = vld [vmem:[%s1 + $0x198] sm:$0xff]
  %v108 = vld [vmem:[%s1 + $0x1a0] sm:$0xff]
  %v109 = vld [vmem:[%s1 + $0x1a8] sm:$0xff]
  %v110 = vld [vmem:[%s1 + $0x1b0] sm:$0xff]
  %v111 = vld [vmem:[%s1 + $0x1b8] sm:$0xff]
  %v112 = vld [vmem:[%s1 + $0x1c0] sm:$0xff]
  %v113 = vld [vmem:[%s1 + $0x1c8] sm:$0xff]
  %v114 = vld [vmem:[%s1 + $0x1d0] sm:$0xff]
  %v115 = vld [vmem:[%s1 + $0x1d8] sm:$0xff]
  %v116 = vld [vmem:[%s1 + $0x1e0] sm:$0xff]
  %v117 = vld [vmem:[%s1 + $0x1e8] sm:$0xff]
  %v118 = vld [vmem:[%s1 + $0x1f0] sm:$0xff]
  %v119 = vld [vmem:[%s1 + $0x1f8] sm:$0xff]
  %v120 = vlaneseq
  %v121 = vand.u32 %v120, 127
  %122 = vset.pattern.permute.xlu0 0
  %123 = vperm.xlu0 %122, %v56
  %v124 = vpop.permute.xlu0 %123
  %125 = vset.pattern.permute.xlu0 0
  %126 = vperm.xlu0 %125, %v57
  %v127 = vpop.permute.xlu0 %126
  %128 = vset.pattern.permute.xlu0 0
  %129 = vperm.xlu0 %128, %v58
  %v130 = vpop.permute.xlu0 %129
  %131 = vset.pattern.permute.xlu0 0
  %132 = vperm.xlu0 %131, %v59
  %v133 = vpop.permute.xlu0 %132
  %134 = vset.pattern.permute.xlu0 0
  %135 = vperm.xlu0 %134, %v60
  %v136 = vpop.permute.xlu0 %135
  %137 = vset.pattern.permute.xlu0 0
  %138 = vperm.xlu0 %137, %v61
  %v139 = vpop.permute.xlu0 %138
  %140 = vset.pattern.permute.xlu0 0
  %141 = vperm.xlu0 %140, %v62
  %v142 = vpop.permute.xlu0 %141
  %143 = vset.pattern.permute.xlu0 0
  %144 = vperm.xlu0 %143, %v63
  %v145 = vpop.permute.xlu0 %144
  %146 = vset.pattern.permute.xlu0 0
  %147 = vperm.xlu0 %146, %v64
  %v148 = vpop.permute.xlu0 %147
  %149 = vset.pattern.permute.xlu0 0
  %150 = vperm.xlu0 %149, %v65
  %v151 = vpop.permute.xlu0 %150
  %152 = vset.pattern.permute.xlu0 0
  %153 = vperm.xlu0 %152, %v66
  %v154 = vpop.permute.xlu0 %153
  %155 = vset.pattern.permute.xlu0 0
  %156 = vperm.xlu0 %155, %v67
  %v157 = vpop.permute.xlu0 %156
  %158 = vset.pattern.permute.xlu0 0
  %159 = vperm.xlu0 %158, %v68
  %v160 = vpop.permute.xlu0 %159
  %161 = vset.pattern.permute.xlu0 0
  %162 = vperm.xlu0 %161, %v69
  %v163 = vpop.permute.xlu0 %162
  %164 = vset.pattern.permute.xlu0 0
  %165 = vperm.xlu0 %164, %v70
  %v166 = vpop.permute.xlu0 %165
  %167 = vset.pattern.permute.xlu0 0
  %168 = vperm.xlu0 %167, %v71
  %v169 = vpop.permute.xlu0 %168
  %170 = vset.pattern.permute.xlu0 0
  %171 = vperm.xlu0 %170, %v72
  %v172 = vpop.permute.xlu0 %171
  %173 = vset.pattern.permute.xlu0 0
  %174 = vperm.xlu0 %173, %v73
  %v175 = vpop.permute.xlu0 %174
  %176 = vset.pattern.permute.xlu0 0
  %177 = vperm.xlu0 %176, %v74
  %v178 = vpop.permute.xlu0 %177
  %179 = vset.pattern.permute.xlu0 0
  %180 = vperm.xlu0 %179, %v75
  %v181 = vpop.permute.xlu0 %180
  %182 = vset.pattern.permute.xlu0 0
  %183 = vperm.xlu0 %182, %v76
  %v184 = vpop.permute.xlu0 %183
  %185 = vset.pattern.permute.xlu0 0
  %186 = vperm.xlu0 %185, %v77
  %v187 = vpop.permute.xlu0 %186
  %188 = vset.pattern.permute.xlu0 0
  %189 = vperm.xlu0 %188, %v78
  %v190 = vpop.permute.xlu0 %189
  %191 = vset.pattern.permute.xlu0 0
  %192 = vperm.xlu0 %191, %v79
  %v193 = vpop.permute.xlu0 %192
  %194 = vset.pattern.permute.xlu0 0
  %195 = vperm.xlu0 %194, %v80
  %v196 = vpop.permute.xlu0 %195
  %197 = vset.pattern.permute.xlu0 0
  %198 = vperm.xlu0 %197, %v81
  %v199 = vpop.permute.xlu0 %198
  %200 = vset.pattern.permute.xlu0 0
  %201 = vperm.xlu0 %200, %v82
  %v202 = vpop.permute.xlu0 %201
  %203 = vset.pattern.permute.xlu0 0
  %204 = vperm.xlu0 %203, %v83
  %v205 = vpop.permute.xlu0 %204
  %206 = vset.pattern.permute.xlu0 0
  %207 = vperm.xlu0 %206, %v84
  %v208 = vpop.permute.xlu0 %207
  %209 = vset.pattern.permute.xlu0 0
  %210 = vperm.xlu0 %209, %v85
  %v211 = vpop.permute.xlu0 %210
  %212 = vset.pattern.permute.xlu0 0
  %213 = vperm.xlu0 %212, %v86
  %v214 = vpop.permute.xlu0 %213
  %215 = vset.pattern.permute.xlu0 0
  %216 = vperm.xlu0 %215, %v87
  %v217 = vpop.permute.xlu0 %216
  %218 = vset.pattern.permute.xlu0 0
  %219 = vperm.xlu0 %218, %v88
  %v220 = vpop.permute.xlu0 %219
  %221 = vset.pattern.permute.xlu0 0
  %222 = vperm.xlu0 %221, %v89
  %v223 = vpop.permute.xlu0 %222
  %224 = vset.pattern.permute.xlu0 0
  %225 = vperm.xlu0 %224, %v90
  %v226 = vpop.permute.xlu0 %225
  %227 = vset.pattern.permute.xlu0 0
  %228 = vperm.xlu0 %227, %v91
  %v229 = vpop.permute.xlu0 %228
  %230 = vset.pattern.permute.xlu0 0
  %231 = vperm.xlu0 %230, %v92
  %v232 = vpop.permute.xlu0 %231
  %233 = vset.pattern.permute.xlu0 0
  %234 = vperm.xlu0 %233, %v93
  %v235 = vpop.permute.xlu0 %234
  %236 = vset.pattern.permute.xlu0 0
  %237 = vperm.xlu0 %236, %v94
  %v238 = vpop.permute.xlu0 %237
  %239 = vset.pattern.permute.xlu0 0
  %240 = vperm.xlu0 %239, %v95
  %v241 = vpop.permute.xlu0 %240
  %242 = vset.pattern.permute.xlu0 0
  %243 = vperm.xlu0 %242, %v96
  %v244 = vpop.permute.xlu0 %243
  %245 = vset.pattern.permute.xlu0 0
  %246 = vperm.xlu0 %245, %v97
  %v247 = vpop.permute.xlu0 %246
  %248 = vset.pattern.permute.xlu0 0
  %249 = vperm.xlu0 %248, %v98
  %v250 = vpop.permute.xlu0 %249
  %251 = vset.pattern.permute.xlu0 0
  %252 = vperm.xlu0 %251, %v99
  %v253 = vpop.permute.xlu0 %252
  %254 = vset.pattern.permute.xlu0 0
  %255 = vperm.xlu0 %254, %v100
  %v256 = vpop.permute.xlu0 %255
  %257 = vset.pattern.permute.xlu0 0
  %258 = vperm.xlu0 %257, %v101
  %v259 = vpop.permute.xlu0 %258
  %260 = vset.pattern.permute.xlu0 0
  %261 = vperm.xlu0 %260, %v102
  %v262 = vpop.permute.xlu0 %261
  %263 = vset.pattern.permute.xlu0 0
  %264 = vperm.xlu0 %263, %v103
  %v265 = vpop.permute.xlu0 %264
  %266 = vset.pattern.permute.xlu0 0
  %267 = vperm.xlu0 %266, %v104
  %v268 = vpop.permute.xlu0 %267
  %269 = vset.pattern.permute.xlu0 0
  %270 = vperm.xlu0 %269, %v105
  %v271 = vpop.permute.xlu0 %270
  %272 = vset.pattern.permute.xlu0 0
  %273 = vperm.xlu0 %272, %v106
  %v274 = vpop.permute.xlu0 %273
  %275 = vset.pattern.permute.xlu0 0
  %276 = vperm.xlu0 %275, %v107
  %v277 = vpop.permute.xlu0 %276
  %278 = vset.pattern.permute.xlu0 0
  %279 = vperm.xlu0 %278, %v108
  %v280 = vpop.permute.xlu0 %279
  %281 = vset.pattern.permute.xlu0 0
  %282 = vperm.xlu0 %281, %v109
  %v283 = vpop.permute.xlu0 %282
  %284 = vset.pattern.permute.xlu0 0
  %285 = vperm.xlu0 %284, %v110
  %v286 = vpop.permute.xlu0 %285
  %287 = vset.pattern.permute.xlu0 0
  %288 = vperm.xlu0 %287, %v111
  %v289 = vpop.permute.xlu0 %288
  %290 = vset.pattern.permute.xlu0 0
  %291 = vperm.xlu0 %290, %v112
  %v292 = vpop.permute.xlu0 %291
  %293 = vset.pattern.permute.xlu0 0
  %294 = vperm.xlu0 %293, %v113
  %v295 = vpop.permute.xlu0 %294
  %296 = vset.pattern.permute.xlu0 0
  %297 = vperm.xlu0 %296, %v114
  %v298 = vpop.permute.xlu0 %297
  %299 = vset.pattern.permute.xlu0 0
  %300 = vperm.xlu0 %299, %v115
  %v301 = vpop.permute.xlu0 %300
  %302 = vset.pattern.permute.xlu0 0
  %303 = vperm.xlu0 %302, %v116
  %v304 = vpop.permute.xlu0 %303
  %305 = vset.pattern.permute.xlu0 0
  %306 = vperm.xlu0 %305, %v117
  %v307 = vpop.permute.xlu0 %306
  %308 = vset.pattern.permute.xlu0 0
  %309 = vperm.xlu0 %308, %v118
  %v310 = vpop.permute.xlu0 %309
  %311 = vset.pattern.permute.xlu0 0
  %312 = vperm.xlu0 %311, %v119
  %v313 = vpop.permute.xlu0 %312
  %vm314 = vcmp.eq.s32.totalorder %v124, %v121
  %vm315 = vcmp.eq.s32.totalorder %v127, %v121
  %vm316 = vcmp.eq.s32.totalorder %v130, %v121
  %vm317 = vcmp.eq.s32.totalorder %v133, %v121
  %vm318 = vcmp.eq.s32.totalorder %v136, %v121
  %vm319 = vcmp.eq.s32.totalorder %v139, %v121
  %vm320 = vcmp.eq.s32.totalorder %v142, %v121
  %vm321 = vcmp.eq.s32.totalorder %v145, %v121
  %vm322 = vcmp.eq.s32.totalorder %v148, %v121
  %vm323 = vcmp.eq.s32.totalorder %v151, %v121
  %vm324 = vcmp.eq.s32.totalorder %v154, %v121
  %vm325 = vcmp.eq.s32.totalorder %v157, %v121
  %vm326 = vcmp.eq.s32.totalorder %v160, %v121
  %vm327 = vcmp.eq.s32.totalorder %v163, %v121
  %vm328 = vcmp.eq.s32.totalorder %v166, %v121
  %vm329 = vcmp.eq.s32.totalorder %v169, %v121
  %vm330 = vcmp.eq.s32.totalorder %v172, %v121
  %vm331 = vcmp.eq.s32.totalorder %v175, %v121
  %vm332 = vcmp.eq.s32.totalorder %v178, %v121
  %vm333 = vcmp.eq.s32.totalorder %v181, %v121
  %vm334 = vcmp.eq.s32.totalorder %v184, %v121
  %vm335 = vcmp.eq.s32.totalorder %v187, %v121
  %vm336 = vcmp.eq.s32.totalorder %v190, %v121
  %vm337 = vcmp.eq.s32.totalorder %v193, %v121
  %vm338 = vcmp.eq.s32.totalorder %v196, %v121
  %vm339 = vcmp.eq.s32.totalorder %v199, %v121
  %vm340 = vcmp.eq.s32.totalorder %v202, %v121
  %vm341 = vcmp.eq.s32.totalorder %v205, %v121
  %vm342 = vcmp.eq.s32.totalorder %v208, %v121
  %vm343 = vcmp.eq.s32.totalorder %v211, %v121
  %vm344 = vcmp.eq.s32.totalorder %v214, %v121
  %vm345 = vcmp.eq.s32.totalorder %v217, %v121
  %vm346 = vcmp.eq.s32.totalorder %v220, %v121
  %vm347 = vcmp.eq.s32.totalorder %v223, %v121
  %vm348 = vcmp.eq.s32.totalorder %v226, %v121
  %vm349 = vcmp.eq.s32.totalorder %v229, %v121
  %vm350 = vcmp.eq.s32.totalorder %v232, %v121
  %vm351 = vcmp.eq.s32.totalorder %v235, %v121
  %vm352 = vcmp.eq.s32.totalorder %v238, %v121
  %vm353 = vcmp.eq.s32.totalorder %v241, %v121
  %vm354 = vcmp.eq.s32.totalorder %v244, %v121
  %vm355 = vcmp.eq.s32.totalorder %v247, %v121
  %vm356 = vcmp.eq.s32.totalorder %v250, %v121
  %vm357 = vcmp.eq.s32.totalorder %v253, %v121
  %vm358 = vcmp.eq.s32.totalorder %v256, %v121
  %vm359 = vcmp.eq.s32.totalorder %v259, %v121
  %vm360 = vcmp.eq.s32.totalorder %v262, %v121
  %vm361 = vcmp.eq.s32.totalorder %v265, %v121
  %vm362 = vcmp.eq.s32.totalorder %v268, %v121
  %vm363 = vcmp.eq.s32.totalorder %v271, %v121
  %vm364 = vcmp.eq.s32.totalorder %v274, %v121
  %vm365 = vcmp.eq.s32.totalorder %v277, %v121
  %vm366 = vcmp.eq.s32.totalorder %v280, %v121
  %vm367 = vcmp.eq.s32.totalorder %v283, %v121
  %vm368 = vcmp.eq.s32.totalorder %v286, %v121
  %vm369 = vcmp.eq.s32.totalorder %v289, %v121
  %vm370 = vcmp.eq.s32.totalorder %v292, %v121
  %vm371 = vcmp.eq.s32.totalorder %v295, %v121
  %vm372 = vcmp.eq.s32.totalorder %v298, %v121
  %vm373 = vcmp.eq.s32.totalorder %v301, %v121
  %vm374 = vcmp.eq.s32.totalorder %v304, %v121
  %vm375 = vcmp.eq.s32.totalorder %v307, %v121
  %vm376 = vcmp.eq.s32.totalorder %v310, %v121
  %vm377 = vcmp.eq.s32.totalorder %v313, %v121
  %v378 = vsel %vm314, 1, 0
  %v379 = vsel %vm315, 1, 0
  %v380 = vsel %vm316, 1, 0
  %v381 = vsel %vm317, 1, 0
  %v382 = vsel %vm318, 1, 0
  %v383 = vsel %vm319, 1, 0
  %v384 = vsel %vm320, 1, 0
  %v385 = vsel %vm321, 1, 0
  %v386 = vsel %vm322, 1, 0
  %v387 = vsel %vm323, 1, 0
  %v388 = vsel %vm324, 1, 0
  %v389 = vsel %vm325, 1, 0
  %v390 = vsel %vm326, 1, 0
  %v391 = vsel %vm327, 1, 0
  %v392 = vsel %vm328, 1, 0
  %v393 = vsel %vm329, 1, 0
  %v394 = vsel %vm330, 1, 0
  %v395 = vsel %vm331, 1, 0
  %v396 = vsel %vm332, 1, 0
  %v397 = vsel %vm333, 1, 0
  %v398 = vsel %vm334, 1, 0
  %v399 = vsel %vm335, 1, 0
  %v400 = vsel %vm336, 1, 0
  %v401 = vsel %vm337, 1, 0
  %v402 = vsel %vm338, 1, 0
  %v403 = vsel %vm339, 1, 0
  %v404 = vsel %vm340, 1, 0
  %v405 = vsel %vm341, 1, 0
  %v406 = vsel %vm342, 1, 0
  %v407 = vsel %vm343, 1, 0
  %v408 = vsel %vm344, 1, 0
  %v409 = vsel %vm345, 1, 0
  %v410 = vsel %vm346, 1, 0
  %v411 = vsel %vm347, 1, 0
  %v412 = vsel %vm348, 1, 0
  %v413 = vsel %vm349, 1, 0
  %v414 = vsel %vm350, 1, 0
  %v415 = vsel %vm351, 1, 0
  %v416 = vsel %vm352, 1, 0
  %v417 = vsel %vm353, 1, 0
  %v418 = vsel %vm354, 1, 0
  %v419 = vsel %vm355, 1, 0
  %v420 = vsel %vm356, 1, 0
  %v421 = vsel %vm357, 1, 0
  %v422 = vsel %vm358, 1, 0
  %v423 = vsel %vm359, 1, 0
  %v424 = vsel %vm360, 1, 0
  %v425 = vsel %vm361, 1, 0
  %v426 = vsel %vm362, 1, 0
  %v427 = vsel %vm363, 1, 0
  %v428 = vsel %vm364, 1, 0
  %v429 = vsel %vm365, 1, 0
  %v430 = vsel %vm366, 1, 0
  %v431 = vsel %vm367, 1, 0
  %v432 = vsel %vm368, 1, 0
  %v433 = vsel %vm369, 1, 0
  %v434 = vsel %vm370, 1, 0
  %v435 = vsel %vm371, 1, 0
  %v436 = vsel %vm372, 1, 0
  %v437 = vsel %vm373, 1, 0
  %v438 = vsel %vm374, 1, 0
  %v439 = vsel %vm375, 1, 0
  %v440 = vsel %vm376, 1, 0
  %v441 = vsel %vm377, 1, 0
  %v442 = vcvt.s32.f32 %v378
  %v443 = vcvt.s32.f32 %v379
  %v444 = vcvt.s32.f32 %v380
  %v445 = vcvt.s32.f32 %v381
  %v446 = vcvt.s32.f32 %v382
  %v447 = vcvt.s32.f32 %v383
  %v448 = vcvt.s32.f32 %v384
  %v449 = vcvt.s32.f32 %v385
  %v450 = vcvt.s32.f32 %v386
  %v451 = vcvt.s32.f32 %v387
  %v452 = vcvt.s32.f32 %v388
  %v453 = vcvt.s32.f32 %v389
  %v454 = vcvt.s32.f32 %v390
  %v455 = vcvt.s32.f32 %v391
  %v456 = vcvt.s32.f32 %v392
  %v457 = vcvt.s32.f32 %v393
  %v458 = vcvt.s32.f32 %v394
  %v459 = vcvt.s32.f32 %v395
  %v460 = vcvt.s32.f32 %v396
  %v461 = vcvt.s32.f32 %v397
  %v462 = vcvt.s32.f32 %v398
  %v463 = vcvt.s32.f32 %v399
  %v464 = vcvt.s32.f32 %v400
  %v465 = vcvt.s32.f32 %v401
  %v466 = vcvt.s32.f32 %v402
  %v467 = vcvt.s32.f32 %v403
  %v468 = vcvt.s32.f32 %v404
  %v469 = vcvt.s32.f32 %v405
  %v470 = vcvt.s32.f32 %v406
  %v471 = vcvt.s32.f32 %v407
  %v472 = vcvt.s32.f32 %v408
  %v473 = vcvt.s32.f32 %v409
  %v474 = vcvt.s32.f32 %v410
  %v475 = vcvt.s32.f32 %v411
  %v476 = vcvt.s32.f32 %v412
  %v477 = vcvt.s32.f32 %v413
  %v478 = vcvt.s32.f32 %v414
  %v479 = vcvt.s32.f32 %v415
  %v480 = vcvt.s32.f32 %v416
  %v481 = vcvt.s32.f32 %v417
  %v482 = vcvt.s32.f32 %v418
  %v483 = vcvt.s32.f32 %v419
  %v484 = vcvt.s32.f32 %v420
  %v485 = vcvt.s32.f32 %v421
  %v486 = vcvt.s32.f32 %v422
  %v487 = vcvt.s32.f32 %v423
  %v488 = vcvt.s32.f32 %v424
  %v489 = vcvt.s32.f32 %v425
  %v490 = vcvt.s32.f32 %v426
  %v491 = vcvt.s32.f32 %v427
  %v492 = vcvt.s32.f32 %v428
  %v493 = vcvt.s32.f32 %v429
  %v494 = vcvt.s32.f32 %v430
  %v495 = vcvt.s32.f32 %v431
  %v496 = vcvt.s32.f32 %v432
  %v497 = vcvt.s32.f32 %v433
  %v498 = vcvt.s32.f32 %v434
  %v499 = vcvt.s32.f32 %v435
  %v500 = vcvt.s32.f32 %v436
  %v501 = vcvt.s32.f32 %v437
  %v502 = vcvt.s32.f32 %v438
  %v503 = vcvt.s32.f32 %v439
  %v504 = vcvt.s32.f32 %v440
  %v505 = vcvt.s32.f32 %v441
  %v506 = vld [vmem:[%s2] sm:$0xff]
  %v507 = vld [vmem:[%s2 + $0x8] sm:$0xff]
  %v508 = vld [vmem:[%s2 + $0x10] sm:$0xff]
  %v509 = vld [vmem:[%s2 + $0x18] sm:$0xff]
  %v510 = vld [vmem:[%s2 + $0x20] sm:$0xff]
  %v511 = vld [vmem:[%s2 + $0x28] sm:$0xff]
  %v512 = vld [vmem:[%s2 + $0x30] sm:$0xff]
  %v513 = vld [vmem:[%s2 + $0x38] sm:$0xff]
  %v514 = vld [vmem:[%s2 + $0x40] sm:$0xff]
  %v515 = vld [vmem:[%s2 + $0x48] sm:$0xff]
  %v516 = vld [vmem:[%s2 + $0x50] sm:$0xff]
  %v517 = vld [vmem:[%s2 + $0x58] sm:$0xff]
  %v518 = vld [vmem:[%s2 + $0x60] sm:$0xff]
  %v519 = vld [vmem:[%s2 + $0x68] sm:$0xff]
  %v520 = vld [vmem:[%s2 + $0x70] sm:$0xff]
  %v521 = vld [vmem:[%s2 + $0x78] sm:$0xff]
  %522 = vmatpush.msra.mxu0 %v521
  %523 = vmatpush.msra.mxu0 %v520
  %524 = vmatpush.msra.mxu0 %v519
  %525 = vmatpush.msra.mxu0 %v518
  %526 = vmatpush.msra.mxu0 %v517
  %527 = vmatpush.msra.mxu0 %v516
  %528 = vmatpush.msra.mxu0 %v515
  %529 = vmatpush.msra.mxu0 %v514
  %530 = vmatpush.msra.mxu0 %v513
  %531 = vmatpush.msra.mxu0 %v512
  %532 = vmatpush.msra.mxu0 %v511
  %533 = vmatpush.msra.mxu0 %v510
  %534 = vmatpush.msra.mxu0 %v509
  %535 = vmatpush.msra.mxu0 %v508
  %536 = vmatpush.msra.mxu0 %v507
  %537 = vmatpush.msra.mxu0 %v506
  %538 = vmatmul.f32.gmra.mxu0 %v442
  %v539 = vpop.f32.mrf.mxu0
  %v540 = vadd.f32 0.0, %v539
  %541 = vmatmul.f32.gmra.mxu0 %v443
  %v542 = vpop.f32.mrf.mxu0
  %v543 = vadd.f32 0.0, %v542
  %544 = vmatmul.f32.gmra.mxu0 %v444
  %v545 = vpop.f32.mrf.mxu0
  %v546 = vadd.f32 0.0, %v545
  %547 = vmatmul.f32.gmra.mxu0 %v445
  %v548 = vpop.f32.mrf.mxu0
  %v549 = vadd.f32 0.0, %v548
  %550 = vmatmul.f32.gmra.mxu0 %v446
  %v551 = vpop.f32.mrf.mxu0
  %v552 = vadd.f32 0.0, %v551
  %553 = vmatmul.f32.gmra.mxu0 %v447
  %v554 = vpop.f32.mrf.mxu0
  %v555 = vadd.f32 0.0, %v554
  %556 = vmatmul.f32.gmra.mxu0 %v448
  %v557 = vpop.f32.mrf.mxu0
  %v558 = vadd.f32 0.0, %v557
  %559 = vmatmul.f32.gmra.mxu0 %v449
  %v560 = vpop.f32.mrf.mxu0
  %v561 = vadd.f32 0.0, %v560
  %562 = vmatmul.f32.gmra.mxu0 %v450
  %v563 = vpop.f32.mrf.mxu0
  %v564 = vadd.f32 0.0, %v563
  %565 = vmatmul.f32.gmra.mxu0 %v451
  %v566 = vpop.f32.mrf.mxu0
  %v567 = vadd.f32 0.0, %v566
  %568 = vmatmul.f32.gmra.mxu0 %v452
  %v569 = vpop.f32.mrf.mxu0
  %v570 = vadd.f32 0.0, %v569
  %571 = vmatmul.f32.gmra.mxu0 %v453
  %v572 = vpop.f32.mrf.mxu0
  %v573 = vadd.f32 0.0, %v572
  %574 = vmatmul.f32.gmra.mxu0 %v454
  %v575 = vpop.f32.mrf.mxu0
  %v576 = vadd.f32 0.0, %v575
  %577 = vmatmul.f32.gmra.mxu0 %v455
  %v578 = vpop.f32.mrf.mxu0
  %v579 = vadd.f32 0.0, %v578
  %580 = vmatmul.f32.gmra.mxu0 %v456
  %v581 = vpop.f32.mrf.mxu0
  %v582 = vadd.f32 0.0, %v581
  %583 = vmatmul.f32.gmra.mxu0 %v457
  %v584 = vpop.f32.mrf.mxu0
  %v585 = vadd.f32 0.0, %v584
  %586 = vmatmul.f32.gmra.mxu0 %v458
  %v587 = vpop.f32.mrf.mxu0
  %v588 = vadd.f32 0.0, %v587
  %589 = vmatmul.f32.gmra.mxu0 %v459
  %v590 = vpop.f32.mrf.mxu0
  %v591 = vadd.f32 0.0, %v590
  %592 = vmatmul.f32.gmra.mxu0 %v460
  %v593 = vpop.f32.mrf.mxu0
  %v594 = vadd.f32 0.0, %v593
  %595 = vmatmul.f32.gmra.mxu0 %v461
  %v596 = vpop.f32.mrf.mxu0
  %v597 = vadd.f32 0.0, %v596
  %598 = vmatmul.f32.gmra.mxu0 %v462
  %v599 = vpop.f32.mrf.mxu0
  %v600 = vadd.f32 0.0, %v599
  %601 = vmatmul.f32.gmra.mxu0 %v463
  %v602 = vpop.f32.mrf.mxu0
  %v603 = vadd.f32 0.0, %v602
  %604 = vmatmul.f32.gmra.mxu0 %v464
  %v605 = vpop.f32.mrf.mxu0
  %v606 = vadd.f32 0.0, %v605
  %607 = vmatmul.f32.gmra.mxu0 %v465
  %v608 = vpop.f32.mrf.mxu0
  %v609 = vadd.f32 0.0, %v608
  %610 = vmatmul.f32.gmra.mxu0 %v466
  %v611 = vpop.f32.mrf.mxu0
  %v612 = vadd.f32 0.0, %v611
  %613 = vmatmul.f32.gmra.mxu0 %v467
  %v614 = vpop.f32.mrf.mxu0
  %v615 = vadd.f32 0.0, %v614
  %616 = vmatmul.f32.gmra.mxu0 %v468
  %v617 = vpop.f32.mrf.mxu0
  %v618 = vadd.f32 0.0, %v617
  %619 = vmatmul.f32.gmra.mxu0 %v469
  %v620 = vpop.f32.mrf.mxu0
  %v621 = vadd.f32 0.0, %v620
  %622 = vmatmul.f32.gmra.mxu0 %v470
  %v623 = vpop.f32.mrf.mxu0
  %v624 = vadd.f32 0.0, %v623
  %625 = vmatmul.f32.gmra.mxu0 %v471
  %v626 = vpop.f32.mrf.mxu0
  %v627 = vadd.f32 0.0, %v626
  %628 = vmatmul.f32.gmra.mxu0 %v472
  %v629 = vpop.f32.mrf.mxu0
  %v630 = vadd.f32 0.0, %v629
  %631 = vmatmul.f32.gmra.mxu0 %v473
  %v632 = vpop.f32.mrf.mxu0
  %v633 = vadd.f32 0.0, %v632
  %634 = vmatmul.f32.gmra.mxu0 %v474
  %v635 = vpop.f32.mrf.mxu0
  %v636 = vadd.f32 0.0, %v635
  %637 = vmatmul.f32.gmra.mxu0 %v475
  %v638 = vpop.f32.mrf.mxu0
  %v639 = vadd.f32 0.0, %v638
  %640 = vmatmul.f32.gmra.mxu0 %v476
  %v641 = vpop.f32.mrf.mxu0
  %v642 = vadd.f32 0.0, %v641
  %643 = vmatmul.f32.gmra.mxu0 %v477
  %v644 = vpop.f32.mrf.mxu0
  %v645 = vadd.f32 0.0, %v644
  %646 = vmatmul.f32.gmra.mxu0 %v478
  %v647 = vpop.f32.mrf.mxu0
  %v648 = vadd.f32 0.0, %v647
  %649 = vmatmul.f32.gmra.mxu0 %v479
  %v650 = vpop.f32.mrf.mxu0
  %v651 = vadd.f32 0.0, %v650
  %652 = vmatmul.f32.gmra.mxu0 %v480
  %v653 = vpop.f32.mrf.mxu0
  %v654 = vadd.f32 0.0, %v653
  %655 = vmatmul.f32.gmra.mxu0 %v481
  %v656 = vpop.f32.mrf.mxu0
  %v657 = vadd.f32 0.0, %v656
  %658 = vmatmul.f32.gmra.mxu0 %v482
  %v659 = vpop.f32.mrf.mxu0
  %v660 = vadd.f32 0.0, %v659
  %661 = vmatmul.f32.gmra.mxu0 %v483
  %v662 = vpop.f32.mrf.mxu0
  %v663 = vadd.f32 0.0, %v662
  %664 = vmatmul.f32.gmra.mxu0 %v484
  %v665 = vpop.f32.mrf.mxu0
  %v666 = vadd.f32 0.0, %v665
  %667 = vmatmul.f32.gmra.mxu0 %v485
  %v668 = vpop.f32.mrf.mxu0
  %v669 = vadd.f32 0.0, %v668
  %670 = vmatmul.f32.gmra.mxu0 %v486
  %v671 = vpop.f32.mrf.mxu0
  %v672 = vadd.f32 0.0, %v671
  %673 = vmatmul.f32.gmra.mxu0 %v487
  %v674 = vpop.f32.mrf.mxu0
  %v675 = vadd.f32 0.0, %v674
  %676 = vmatmul.f32.gmra.mxu0 %v488
  %v677 = vpop.f32.mrf.mxu0
  %v678 = vadd.f32 0.0, %v677
  %679 = vmatmul.f32.gmra.mxu0 %v489
  %v680 = vpop.f32.mrf.mxu0
  %v681 = vadd.f32 0.0, %v680
  %682 = vmatmul.f32.gmra.mxu0 %v490
  %v683 = vpop.f32.mrf.mxu0
  %v684 = vadd.f32 0.0, %v683
  %685 = vmatmul.f32.gmra.mxu0 %v491
  %v686 = vpop.f32.mrf.mxu0
  %v687 = vadd.f32 0.0, %v686
  %688 = vmatmul.f32.gmra.mxu0 %v492
  %v689 = vpop.f32.mrf.mxu0
  %v690 = vadd.f32 0.0, %v689
  %691 = vmatmul.f32.gmra.mxu0 %v493
  %v692 = vpop.f32.mrf.mxu0
  %v693 = vadd.f32 0.0, %v692
  %694 = vmatmul.f32.gmra.mxu0 %v494
  %v695 = vpop.f32.mrf.mxu0
  %v696 = vadd.f32 0.0, %v695
  %697 = vmatmul.f32.gmra.mxu0 %v495
  %v698 = vpop.f32.mrf.mxu0
  %v699 = vadd.f32 0.0, %v698
  %700 = vmatmul.f32.gmra.mxu0 %v496
  %v701 = vpop.f32.mrf.mxu0
  %v702 = vadd.f32 0.0, %v701
  %703 = vmatmul.f32.gmra.mxu0 %v497
  %v704 = vpop.f32.mrf.mxu0
  %v705 = vadd.f32 0.0, %v704
  %706 = vmatmul.f32.gmra.mxu0 %v498
  %v707 = vpop.f32.mrf.mxu0
  %v708 = vadd.f32 0.0, %v707
  %709 = vmatmul.f32.gmra.mxu0 %v499
  %v710 = vpop.f32.mrf.mxu0
  %v711 = vadd.f32 0.0, %v710
  %712 = vmatmul.f32.gmra.mxu0 %v500
  %v713 = vpop.f32.mrf.mxu0
  %v714 = vadd.f32 0.0, %v713
  %715 = vmatmul.f32.gmra.mxu0 %v501
  %v716 = vpop.f32.mrf.mxu0
  %v717 = vadd.f32 0.0, %v716
  %718 = vmatmul.f32.gmra.mxu0 %v502
  %v719 = vpop.f32.mrf.mxu0
  %v720 = vadd.f32 0.0, %v719
  %721 = vmatmul.f32.gmra.mxu0 %v503
  %v722 = vpop.f32.mrf.mxu0
  %v723 = vadd.f32 0.0, %v722
  %724 = vmatmul.f32.gmra.mxu0 %v504
  %v725 = vpop.f32.mrf.mxu0
  %v726 = vadd.f32 0.0, %v725
  %727 = vmatmul.f32.gmra.mxu0 %v505
  %v728 = vpop.f32.mrf.mxu0
  %v729 = vadd.f32 0.0, %v728
  %730 = vdwg.mxu0
  %v731 = vld [vmem:[%s5] sm:$0xff]
  %v732 = vld [vmem:[%s5 + $0x8] sm:$0xff]
  %v733 = vld [vmem:[%s5 + $0x10] sm:$0xff]
  %v734 = vld [vmem:[%s5 + $0x18] sm:$0xff]
  %v735 = vld [vmem:[%s5 + $0x20] sm:$0xff]
  %v736 = vld [vmem:[%s5 + $0x28] sm:$0xff]
  %v737 = vld [vmem:[%s5 + $0x30] sm:$0xff]
  %v738 = vld [vmem:[%s5 + $0x38] sm:$0xff]
  %v739 = vld [vmem:[%s5 + $0x40] sm:$0xff]
  %v740 = vld [vmem:[%s5 + $0x48] sm:$0xff]
  %v741 = vld [vmem:[%s5 + $0x50] sm:$0xff]
  %v742 = vld [vmem:[%s5 + $0x58] sm:$0xff]
  %v743 = vld [vmem:[%s5 + $0x60] sm:$0xff]
  %v744 = vld [vmem:[%s5 + $0x68] sm:$0xff]
  %v745 = vld [vmem:[%s5 + $0x70] sm:$0xff]
  %v746 = vld [vmem:[%s5 + $0x78] sm:$0xff]
  %v747 = vld [vmem:[%s6] sm:$0x1]
  %v749 = vperm.slane %v747, 0
  %751 = vmatpush.msra.mxu0 %v746
  %752 = vmatpush.msra.mxu0 %v745
  %753 = vmatpush.msra.mxu0 %v744
  %754 = vmatpush.msra.mxu0 %v743
  %755 = vmatpush.msra.mxu0 %v742
  %756 = vmatpush.msra.mxu0 %v741
  %757 = vmatpush.msra.mxu0 %v740
  %758 = vmatpush.msra.mxu0 %v739
  %759 = vmatpush.msra.mxu0 %v738
  %760 = vmatpush.msra.mxu0 %v737
  %761 = vmatpush.msra.mxu0 %v736
  %762 = vmatpush.msra.mxu0 %v735
  %763 = vmatpush.msra.mxu0 %v734
  %764 = vmatpush.msra.mxu0 %v733
  %765 = vmatpush.msra.mxu0 %v732
  %766 = vmatpush.msra.mxu0 %v731
  %767 = vmatmul.f32.gmra.mxu0 %v540
  %v768 = vpop.f32.mrf.mxu0
  %v769 = vadd.f32 %v749, %v768
  %770 = vmatmul.f32.gmra.mxu0 %v543
  %v771 = vpop.f32.mrf.mxu0
  %v772 = vadd.f32 %v749, %v771
  %773 = vmatmul.f32.gmra.mxu0 %v546
  %v774 = vpop.f32.mrf.mxu0
  %v775 = vadd.f32 %v749, %v774
  %776 = vmatmul.f32.gmra.mxu0 %v549
  %v777 = vpop.f32.mrf.mxu0
  %v778 = vadd.f32 %v749, %v777
  %779 = vmatmul.f32.gmra.mxu0 %v552
  %v780 = vpop.f32.mrf.mxu0
  %v781 = vadd.f32 %v749, %v780
  %782 = vmatmul.f32.gmra.mxu0 %v555
  %v783 = vpop.f32.mrf.mxu0
  %v784 = vadd.f32 %v749, %v783
  %785 = vmatmul.f32.gmra.mxu0 %v558
  %v786 = vpop.f32.mrf.mxu0
  %v787 = vadd.f32 %v749, %v786
  %788 = vmatmul.f32.gmra.mxu0 %v561
  %v789 = vpop.f32.mrf.mxu0
  %v790 = vadd.f32 %v749, %v789
  %791 = vmatmul.f32.gmra.mxu0 %v564
  %v792 = vpop.f32.mrf.mxu0
  %v793 = vadd.f32 %v749, %v792
  %794 = vmatmul.f32.gmra.mxu0 %v567
  %v795 = vpop.f32.mrf.mxu0
  %v796 = vadd.f32 %v749, %v795
  %797 = vmatmul.f32.gmra.mxu0 %v570
  %v798 = vpop.f32.mrf.mxu0
  %v799 = vadd.f32 %v749, %v798
  %800 = vmatmul.f32.gmra.mxu0 %v573
  %v801 = vpop.f32.mrf.mxu0
  %v802 = vadd.f32 %v749, %v801
  %803 = vmatmul.f32.gmra.mxu0 %v576
  %v804 = vpop.f32.mrf.mxu0
  %v805 = vadd.f32 %v749, %v804
  %806 = vmatmul.f32.gmra.mxu0 %v579
  %v807 = vpop.f32.mrf.mxu0
  %v808 = vadd.f32 %v749, %v807
  %809 = vmatmul.f32.gmra.mxu0 %v582
  %v810 = vpop.f32.mrf.mxu0
  %v811 = vadd.f32 %v749, %v810
  %812 = vmatmul.f32.gmra.mxu0 %v585
  %v813 = vpop.f32.mrf.mxu0
  %v814 = vadd.f32 %v749, %v813
  %815 = vmatmul.f32.gmra.mxu0 %v588
  %v816 = vpop.f32.mrf.mxu0
  %v817 = vadd.f32 %v749, %v816
  %818 = vmatmul.f32.gmra.mxu0 %v591
  %v819 = vpop.f32.mrf.mxu0
  %v820 = vadd.f32 %v749, %v819
  %821 = vmatmul.f32.gmra.mxu0 %v594
  %v822 = vpop.f32.mrf.mxu0
  %v823 = vadd.f32 %v749, %v822
  %824 = vmatmul.f32.gmra.mxu0 %v597
  %v825 = vpop.f32.mrf.mxu0
  %v826 = vadd.f32 %v749, %v825
  %827 = vmatmul.f32.gmra.mxu0 %v600
  %v828 = vpop.f32.mrf.mxu0
  %v829 = vadd.f32 %v749, %v828
  %830 = vmatmul.f32.gmra.mxu0 %v603
  %v831 = vpop.f32.mrf.mxu0
  %v832 = vadd.f32 %v749, %v831
  %833 = vmatmul.f32.gmra.mxu0 %v606
  %v834 = vpop.f32.mrf.mxu0
  %v835 = vadd.f32 %v749, %v834
  %836 = vmatmul.f32.gmra.mxu0 %v609
  %v837 = vpop.f32.mrf.mxu0
  %v838 = vadd.f32 %v749, %v837
  %839 = vmatmul.f32.gmra.mxu0 %v612
  %v840 = vpop.f32.mrf.mxu0
  %v841 = vadd.f32 %v749, %v840
  %842 = vmatmul.f32.gmra.mxu0 %v615
  %v843 = vpop.f32.mrf.mxu0
  %v844 = vadd.f32 %v749, %v843
  %845 = vmatmul.f32.gmra.mxu0 %v618
  %v846 = vpop.f32.mrf.mxu0
  %v847 = vadd.f32 %v749, %v846
  %848 = vmatmul.f32.gmra.mxu0 %v621
  %v849 = vpop.f32.mrf.mxu0
  %v850 = vadd.f32 %v749, %v849
  %851 = vmatmul.f32.gmra.mxu0 %v624
  %v852 = vpop.f32.mrf.mxu0
  %v853 = vadd.f32 %v749, %v852
  %854 = vmatmul.f32.gmra.mxu0 %v627
  %v855 = vpop.f32.mrf.mxu0
  %v856 = vadd.f32 %v749, %v855
  %857 = vmatmul.f32.gmra.mxu0 %v630
  %v858 = vpop.f32.mrf.mxu0
  %v859 = vadd.f32 %v749, %v858
  %860 = vmatmul.f32.gmra.mxu0 %v633
  %v861 = vpop.f32.mrf.mxu0
  %v862 = vadd.f32 %v749, %v861
  %863 = vmatmul.f32.gmra.mxu0 %v636
  %v864 = vpop.f32.mrf.mxu0
  %v865 = vadd.f32 %v749, %v864
  %866 = vmatmul.f32.gmra.mxu0 %v639
  %v867 = vpop.f32.mrf.mxu0
  %v868 = vadd.f32 %v749, %v867
  %869 = vmatmul.f32.gmra.mxu0 %v642
  %v870 = vpop.f32.mrf.mxu0
  %v871 = vadd.f32 %v749, %v870
  %872 = vmatmul.f32.gmra.mxu0 %v645
  %v873 = vpop.f32.mrf.mxu0
  %v874 = vadd.f32 %v749, %v873
  %875 = vmatmul.f32.gmra.mxu0 %v648
  %v876 = vpop.f32.mrf.mxu0
  %v877 = vadd.f32 %v749, %v876
  %878 = vmatmul.f32.gmra.mxu0 %v651
  %v879 = vpop.f32.mrf.mxu0
  %v880 = vadd.f32 %v749, %v879
  %881 = vmatmul.f32.gmra.mxu0 %v654
  %v882 = vpop.f32.mrf.mxu0
  %v883 = vadd.f32 %v749, %v882
  %884 = vmatmul.f32.gmra.mxu0 %v657
  %v885 = vpop.f32.mrf.mxu0
  %v886 = vadd.f32 %v749, %v885
  %887 = vmatmul.f32.gmra.mxu0 %v660
  %v888 = vpop.f32.mrf.mxu0
  %v889 = vadd.f32 %v749, %v888
  %890 = vmatmul.f32.gmra.mxu0 %v663
  %v891 = vpop.f32.mrf.mxu0
  %v892 = vadd.f32 %v749, %v891
  %893 = vmatmul.f32.gmra.mxu0 %v666
  %v894 = vpop.f32.mrf.mxu0
  %v895 = vadd.f32 %v749, %v894
  %896 = vmatmul.f32.gmra.mxu0 %v669
  %v897 = vpop.f32.mrf.mxu0
  %v898 = vadd.f32 %v749, %v897
  %899 = vmatmul.f32.gmra.mxu0 %v672
  %v900 = vpop.f32.mrf.mxu0
  %v901 = vadd.f32 %v749, %v900
  %902 = vmatmul.f32.gmra.mxu0 %v675
  %v903 = vpop.f32.mrf.mxu0
  %v904 = vadd.f32 %v749, %v903
  %905 = vmatmul.f32.gmra.mxu0 %v678
  %v906 = vpop.f32.mrf.mxu0
  %v907 = vadd.f32 %v749, %v906
  %908 = vmatmul.f32.gmra.mxu0 %v681
  %v909 = vpop.f32.mrf.mxu0
  %v910 = vadd.f32 %v749, %v909
  %911 = vmatmul.f32.gmra.mxu0 %v684
  %v912 = vpop.f32.mrf.mxu0
  %v913 = vadd.f32 %v749, %v912
  %914 = vmatmul.f32.gmra.mxu0 %v687
  %v915 = vpop.f32.mrf.mxu0
  %v916 = vadd.f32 %v749, %v915
  %917 = vmatmul.f32.gmra.mxu0 %v690
  %v918 = vpop.f32.mrf.mxu0
  %v919 = vadd.f32 %v749, %v918
  %920 = vmatmul.f32.gmra.mxu0 %v693
  %v921 = vpop.f32.mrf.mxu0
  %v922 = vadd.f32 %v749, %v921
  %923 = vmatmul.f32.gmra.mxu0 %v696
  %v924 = vpop.f32.mrf.mxu0
  %v925 = vadd.f32 %v749, %v924
  %926 = vmatmul.f32.gmra.mxu0 %v699
  %v927 = vpop.f32.mrf.mxu0
  %v928 = vadd.f32 %v749, %v927
  %929 = vmatmul.f32.gmra.mxu0 %v702
  %v930 = vpop.f32.mrf.mxu0
  %v931 = vadd.f32 %v749, %v930
  %932 = vmatmul.f32.gmra.mxu0 %v705
  %v933 = vpop.f32.mrf.mxu0
  %v934 = vadd.f32 %v749, %v933
  %935 = vmatmul.f32.gmra.mxu0 %v708
  %v936 = vpop.f32.mrf.mxu0
  %v937 = vadd.f32 %v749, %v936
  %938 = vmatmul.f32.gmra.mxu0 %v711
  %v939 = vpop.f32.mrf.mxu0
  %v940 = vadd.f32 %v749, %v939
  %941 = vmatmul.f32.gmra.mxu0 %v714
  %v942 = vpop.f32.mrf.mxu0
  %v943 = vadd.f32 %v749, %v942
  %944 = vmatmul.f32.gmra.mxu0 %v717
  %v945 = vpop.f32.mrf.mxu0
  %v946 = vadd.f32 %v749, %v945
  %947 = vmatmul.f32.gmra.mxu0 %v720
  %v948 = vpop.f32.mrf.mxu0
  %v949 = vadd.f32 %v749, %v948
  %950 = vmatmul.f32.gmra.mxu0 %v723
  %v951 = vpop.f32.mrf.mxu0
  %v952 = vadd.f32 %v749, %v951
  %953 = vmatmul.f32.gmra.mxu0 %v726
  %v954 = vpop.f32.mrf.mxu0
  %v955 = vadd.f32 %v749, %v954
  %956 = vmatmul.f32.gmra.mxu0 %v729
  %v957 = vpop.f32.mrf.mxu0
  %v958 = vadd.f32 %v749, %v957
  %959 = vdwg.mxu0
  %v960 = vtanh.pop %v769
  %v961 = vtanh.pop %v772
  %v962 = vtanh.pop %v775
  %v963 = vtanh.pop %v778
  %v964 = vtanh.pop %v781
  %v965 = vtanh.pop %v784
  %v966 = vtanh.pop %v787
  %v967 = vtanh.pop %v790
  %v968 = vtanh.pop %v793
  %v969 = vtanh.pop %v796
  %v970 = vtanh.pop %v799
  %v971 = vtanh.pop %v802
  %v972 = vtanh.pop %v805
  %v973 = vtanh.pop %v808
  %v974 = vtanh.pop %v811
  %v975 = vtanh.pop %v814
  %v976 = vtanh.pop %v817
  %v977 = vtanh.pop %v820
  %v978 = vtanh.pop %v823
  %v979 = vtanh.pop %v826
  %v980 = vtanh.pop %v829
  %v981 = vtanh.pop %v832
  %v982 = vtanh.pop %v835
  %v983 = vtanh.pop %v838
  %v984 = vtanh.pop %v841
  %v985 = vtanh.pop %v844
  %v986 = vtanh.pop %v847
  %v987 = vtanh.pop %v850
  %v988 = vtanh.pop %v853
  %v989 = vtanh.pop %v856
  %v990 = vtanh.pop %v859
  %v991 = vtanh.pop %v862
  %v992 = vtanh.pop %v865
  %v993 = vtanh.pop %v868
  %v994 = vtanh.pop %v871
  %v995 = vtanh.pop %v874
  %v996 = vtanh.pop %v877
  %v997 = vtanh.pop %v880
  %v998 = vtanh.pop %v883
  %v999 = vtanh.pop %v886
  %v1000 = vtanh.pop %v889
  %v1001 = vtanh.pop %v892
  %v1002 = vtanh.pop %v895
  %v1003 = vtanh.pop %v898
  %v1004 = vtanh.pop %v901
  %v1005 = vtanh.pop %v904
  %v1006 = vtanh.pop %v907
  %v1007 = vtanh.pop %v910
  %v1008 = vtanh.pop %v913
  %v1009 = vtanh.pop %v916
  %v1010 = vtanh.pop %v919
  %v1011 = vtanh.pop %v922
  %v1012 = vtanh.pop %v925
  %v1013 = vtanh.pop %v928
  %v1014 = vtanh.pop %v931
  %v1015 = vtanh.pop %v934
  %v1016 = vtanh.pop %v937
  %v1017 = vtanh.pop %v940
  %v1018 = vtanh.pop %v943
  %v1019 = vtanh.pop %v946
  %v1020 = vtanh.pop %v949
  %v1021 = vtanh.pop %v952
  %v1022 = vtanh.pop %v955
  %v1023 = vtanh.pop %v958
  %v1024 = vld [vmem:[%s7] sm:$0x1]
  %v1026 = vperm.slane %v1024, 0
  %v1028 = vmul.f32 %v960, %v1026
  %v1029 = vmul.f32 %v961, %v1026
  %v1030 = vmul.f32 %v962, %v1026
  %v1031 = vmul.f32 %v963, %v1026
  %v1032 = vmul.f32 %v964, %v1026
  %v1033 = vmul.f32 %v965, %v1026
  %v1034 = vmul.f32 %v966, %v1026
  %v1035 = vmul.f32 %v967, %v1026
  %v1036 = vmul.f32 %v968, %v1026
  %v1037 = vmul.f32 %v969, %v1026
  %v1038 = vmul.f32 %v970, %v1026
  %v1039 = vmul.f32 %v971, %v1026
  %v1040 = vmul.f32 %v972, %v1026
  %v1041 = vmul.f32 %v973, %v1026
  %v1042 = vmul.f32 %v974, %v1026
  %v1043 = vmul.f32 %v975, %v1026
  %v1044 = vmul.f32 %v976, %v1026
  %v1045 = vmul.f32 %v977, %v1026
  %v1046 = vmul.f32 %v978, %v1026
  %v1047 = vmul.f32 %v979, %v1026
  %v1048 = vmul.f32 %v980, %v1026
  %v1049 = vmul.f32 %v981, %v1026
  %v1050 = vmul.f32 %v982, %v1026
  %v1051 = vmul.f32 %v983, %v1026
  %v1052 = vmul.f32 %v984, %v1026
  %v1053 = vmul.f32 %v985, %v1026
  %v1054 = vmul.f32 %v986, %v1026
  %v1055 = vmul.f32 %v987, %v1026
  %v1056 = vmul.f32 %v988, %v1026
  %v1057 = vmul.f32 %v989, %v1026
  %v1058 = vmul.f32 %v990, %v1026
  %v1059 = vmul.f32 %v991, %v1026
  %v1060 = vmul.f32 %v992, %v1026
  %v1061 = vmul.f32 %v993, %v1026
  %v1062 = vmul.f32 %v994, %v1026
  %v1063 = vmul.f32 %v995, %v1026
  %v1064 = vmul.f32 %v996, %v1026
  %v1065 = vmul.f32 %v997, %v1026
  %v1066 = vmul.f32 %v998, %v1026
  %v1067 = vmul.f32 %v999, %v1026
  %v1068 = vmul.f32 %v1000, %v1026
  %v1069 = vmul.f32 %v1001, %v1026
  %v1070 = vmul.f32 %v1002, %v1026
  %v1071 = vmul.f32 %v1003, %v1026
  %v1072 = vmul.f32 %v1004, %v1026
  %v1073 = vmul.f32 %v1005, %v1026
  %v1074 = vmul.f32 %v1006, %v1026
  %v1075 = vmul.f32 %v1007, %v1026
  %v1076 = vmul.f32 %v1008, %v1026
  %v1077 = vmul.f32 %v1009, %v1026
  %v1078 = vmul.f32 %v1010, %v1026
  %v1079 = vmul.f32 %v1011, %v1026
  %v1080 = vmul.f32 %v1012, %v1026
  %v1081 = vmul.f32 %v1013, %v1026
  %v1082 = vmul.f32 %v1014, %v1026
  %v1083 = vmul.f32 %v1015, %v1026
  %v1084 = vmul.f32 %v1016, %v1026
  %v1085 = vmul.f32 %v1017, %v1026
  %v1086 = vmul.f32 %v1018, %v1026
  %v1087 = vmul.f32 %v1019, %v1026
  %v1088 = vmul.f32 %v1020, %v1026
  %v1089 = vmul.f32 %v1021, %v1026
  %v1090 = vmul.f32 %v1022, %v1026
  %v1091 = vmul.f32 %v1023, %v1026
  %1092 = vadd.xlane.f32.xlu0 %v1028
  %v1093 = vpop.xlane.xlu0 %1092
  %1094 = vadd.xlane.f32.xlu0 %v1029
  %v1095 = vpop.xlane.xlu0 %1094
  %1096 = vadd.xlane.f32.xlu0 %v1030
  %v1097 = vpop.xlane.xlu0 %1096
  %1098 = vadd.xlane.f32.xlu0 %v1031
  %v1099 = vpop.xlane.xlu0 %1098
  %1100 = vadd.xlane.f32.xlu0 %v1032
  %v1101 = vpop.xlane.xlu0 %1100
  %1102 = vadd.xlane.f32.xlu0 %v1033
  %v1103 = vpop.xlane.xlu0 %1102
  %1104 = vadd.xlane.f32.xlu0 %v1034
  %v1105 = vpop.xlane.xlu0 %1104
  %1106 = vadd.xlane.f32.xlu0 %v1035
  %v1107 = vpop.xlane.xlu0 %1106
  %1108 = vadd.xlane.f32.xlu0 %v1036
  %v1109 = vpop.xlane.xlu0 %1108
  %1110 = vadd.xlane.f32.xlu0 %v1037
  %v1111 = vpop.xlane.xlu0 %1110
  %1112 = vadd.xlane.f32.xlu0 %v1038
  %v1113 = vpop.xlane.xlu0 %1112
  %1114 = vadd.xlane.f32.xlu0 %v1039
  %v1115 = vpop.xlane.xlu0 %1114
  %1116 = vadd.xlane.f32.xlu0 %v1040
  %v1117 = vpop.xlane.xlu0 %1116
  %1118 = vadd.xlane.f32.xlu0 %v1041
  %v1119 = vpop.xlane.xlu0 %1118
  %1120 = vadd.xlane.f32.xlu0 %v1042
  %v1121 = vpop.xlane.xlu0 %1120
  %1122 = vadd.xlane.f32.xlu0 %v1043
  %v1123 = vpop.xlane.xlu0 %1122
  %1124 = vadd.xlane.f32.xlu0 %v1044
  %v1125 = vpop.xlane.xlu0 %1124
  %1126 = vadd.xlane.f32.xlu0 %v1045
  %v1127 = vpop.xlane.xlu0 %1126
  %1128 = vadd.xlane.f32.xlu0 %v1046
  %v1129 = vpop.xlane.xlu0 %1128
  %1130 = vadd.xlane.f32.xlu0 %v1047
  %v1131 = vpop.xlane.xlu0 %1130
  %1132 = vadd.xlane.f32.xlu0 %v1048
  %v1133 = vpop.xlane.xlu0 %1132
  %1134 = vadd.xlane.f32.xlu0 %v1049
  %v1135 = vpop.xlane.xlu0 %1134
  %1136 = vadd.xlane.f32.xlu0 %v1050
  %v1137 = vpop.xlane.xlu0 %1136
  %1138 = vadd.xlane.f32.xlu0 %v1051
  %v1139 = vpop.xlane.xlu0 %1138
  %1140 = vadd.xlane.f32.xlu0 %v1052
  %v1141 = vpop.xlane.xlu0 %1140
  %1142 = vadd.xlane.f32.xlu0 %v1053
  %v1143 = vpop.xlane.xlu0 %1142
  %1144 = vadd.xlane.f32.xlu0 %v1054
  %v1145 = vpop.xlane.xlu0 %1144
  %1146 = vadd.xlane.f32.xlu0 %v1055
  %v1147 = vpop.xlane.xlu0 %1146
  %1148 = vadd.xlane.f32.xlu0 %v1056
  %v1149 = vpop.xlane.xlu0 %1148
  %1150 = vadd.xlane.f32.xlu0 %v1057
  %v1151 = vpop.xlane.xlu0 %1150
  %1152 = vadd.xlane.f32.xlu0 %v1058
  %v1153 = vpop.xlane.xlu0 %1152
  %1154 = vadd.xlane.f32.xlu0 %v1059
  %v1155 = vpop.xlane.xlu0 %1154
  %1156 = vadd.xlane.f32.xlu0 %v1060
  %v1157 = vpop.xlane.xlu0 %1156
  %1158 = vadd.xlane.f32.xlu0 %v1061
  %v1159 = vpop.xlane.xlu0 %1158
  %1160 = vadd.xlane.f32.xlu0 %v1062
  %v1161 = vpop.xlane.xlu0 %1160
  %1162 = vadd.xlane.f32.xlu0 %v1063
  %v1163 = vpop.xlane.xlu0 %1162
  %1164 = vadd.xlane.f32.xlu0 %v1064
  %v1165 = vpop.xlane.xlu0 %1164
  %1166 = vadd.xlane.f32.xlu0 %v1065
  %v1167 = vpop.xlane.xlu0 %1166
  %1168 = vadd.xlane.f32.xlu0 %v1066
  %v1169 = vpop.xlane.xlu0 %1168
  %1170 = vadd.xlane.f32.xlu0 %v1067
  %v1171 = vpop.xlane.xlu0 %1170
  %1172 = vadd.xlane.f32.xlu0 %v1068
  %v1173 = vpop.xlane.xlu0 %1172
  %1174 = vadd.xlane.f32.xlu0 %v1069
  %v1175 = vpop.xlane.xlu0 %1174
  %1176 = vadd.xlane.f32.xlu0 %v1070
  %v1177 = vpop.xlane.xlu0 %1176
  %1178 = vadd.xlane.f32.xlu0 %v1071
  %v1179 = vpop.xlane.xlu0 %1178
  %1180 = vadd.xlane.f32.xlu0 %v1072
  %v1181 = vpop.xlane.xlu0 %1180
  %1182 = vadd.xlane.f32.xlu0 %v1073
  %v1183 = vpop.xlane.xlu0 %1182
  %1184 = vadd.xlane.f32.xlu0 %v1074
  %v1185 = vpop.xlane.xlu0 %1184
  %1186 = vadd.xlane.f32.xlu0 %v1075
  %v1187 = vpop.xlane.xlu0 %1186
  %1188 = vadd.xlane.f32.xlu0 %v1076
  %v1189 = vpop.xlane.xlu0 %1188
  %1190 = vadd.xlane.f32.xlu0 %v1077
  %v1191 = vpop.xlane.xlu0 %1190
  %1192 = vadd.xlane.f32.xlu0 %v1078
  %v1193 = vpop.xlane.xlu0 %1192
  %1194 = vadd.xlane.f32.xlu0 %v1079
  %v1195 = vpop.xlane.xlu0 %1194
  %1196 = vadd.xlane.f32.xlu0 %v1080
  %v1197 = vpop.xlane.xlu0 %1196
  %1198 = vadd.xlane.f32.xlu0 %v1081
  %v1199 = vpop.xlane.xlu0 %1198
  %1200 = vadd.xlane.f32.xlu0 %v1082
  %v1201 = vpop.xlane.xlu0 %1200
  %1202 = vadd.xlane.f32.xlu0 %v1083
  %v1203 = vpop.xlane.xlu0 %1202
  %1204 = vadd.xlane.f32.xlu0 %v1084
  %v1205 = vpop.xlane.xlu0 %1204
  %1206 = vadd.xlane.f32.xlu0 %v1085
  %v1207 = vpop.xlane.xlu0 %1206
  %1208 = vadd.xlane.f32.xlu0 %v1086
  %v1209 = vpop.xlane.xlu0 %1208
  %1210 = vadd.xlane.f32.xlu0 %v1087
  %v1211 = vpop.xlane.xlu0 %1210
  %1212 = vadd.xlane.f32.xlu0 %v1088
  %v1213 = vpop.xlane.xlu0 %1212
  %1214 = vadd.xlane.f32.xlu0 %v1089
  %v1215 = vpop.xlane.xlu0 %1214
  %1216 = vadd.xlane.f32.xlu0 %v1090
  %v1217 = vpop.xlane.xlu0 %1216
  %1218 = vadd.xlane.f32.xlu0 %v1091
  %v1219 = vpop.xlane.xlu0 %1218
  %s1220 = sld [smem:[#allocation2]]
  %v1221 = vstv %s1220
  %v1222 = vadd.f32 %v1093, %v1221
  %v1223 = vadd.f32 %v1095, %v1221
  %v1224 = vadd.f32 %v1097, %v1221
  %v1225 = vadd.f32 %v1099, %v1221
  %v1226 = vadd.f32 %v1101, %v1221
  %v1227 = vadd.f32 %v1103, %v1221
  %v1228 = vadd.f32 %v1105, %v1221
  %v1229 = vadd.f32 %v1107, %v1221
  %v1230 = vadd.f32 %v1109, %v1221
  %v1231 = vadd.f32 %v1111, %v1221
  %v1232 = vadd.f32 %v1113, %v1221
  %v1233 = vadd.f32 %v1115, %v1221
  %v1234 = vadd.f32 %v1117, %v1221
  %v1235 = vadd.f32 %v1119, %v1221
  %v1236 = vadd.f32 %v1121, %v1221
  %v1237 = vadd.f32 %v1123, %v1221
  %v1238 = vadd.f32 %v1125, %v1221
  %v1239 = vadd.f32 %v1127, %v1221
  %v1240 = vadd.f32 %v1129, %v1221
  %v1241 = vadd.f32 %v1131, %v1221
  %v1242 = vadd.f32 %v1133, %v1221
  %v1243 = vadd.f32 %v1135, %v1221
  %v1244 = vadd.f32 %v1137, %v1221
  %v1245 = vadd.f32 %v1139, %v1221
  %v1246 = vadd.f32 %v1141, %v1221
  %v1247 = vadd.f32 %v1143, %v1221
  %v1248 = vadd.f32 %v1145, %v1221
  %v1249 = vadd.f32 %v1147, %v1221
  %v1250 = vadd.f32 %v1149, %v1221
  %v1251 = vadd.f32 %v1151, %v1221
  %v1252 = vadd.f32 %v1153, %v1221
  %v1253 = vadd.f32 %v1155, %v1221
  %v1254 = vadd.f32 %v1157, %v1221
  %v1255 = vadd.f32 %v1159, %v1221
  %v1256 = vadd.f32 %v1161, %v1221
  %v1257 = vadd.f32 %v1163, %v1221
  %v1258 = vadd.f32 %v1165, %v1221
  %v1259 = vadd.f32 %v1167, %v1221
  %v1260 = vadd.f32 %v1169, %v1221
  %v1261 = vadd.f32 %v1171, %v1221
  %v1262 = vadd.f32 %v1173, %v1221
  %v1263 = vadd.f32 %v1175, %v1221
  %v1264 = vadd.f32 %v1177, %v1221
  %v1265 = vadd.f32 %v1179, %v1221
  %v1266 = vadd.f32 %v1181, %v1221
  %v1267 = vadd.f32 %v1183, %v1221
  %v1268 = vadd.f32 %v1185, %v1221
  %v1269 = vadd.f32 %v1187, %v1221
  %v1270 = vadd.f32 %v1189, %v1221
  %v1271 = vadd.f32 %v1191, %v1221
  %v1272 = vadd.f32 %v1193, %v1221
  %v1273 = vadd.f32 %v1195, %v1221
  %v1274 = vadd.f32 %v1197, %v1221
  %v1275 = vadd.f32 %v1199, %v1221
  %v1276 = vadd.f32 %v1201, %v1221
  %v1277 = vadd.f32 %v1203, %v1221
  %v1278 = vadd.f32 %v1205, %v1221
  %v1279 = vadd.f32 %v1207, %v1221
  %v1280 = vadd.f32 %v1209, %v1221
  %v1281 = vadd.f32 %v1211, %v1221
  %v1282 = vadd.f32 %v1213, %v1221
  %v1283 = vadd.f32 %v1215, %v1221
  %v1284 = vadd.f32 %v1217, %v1221
  %v1285 = vadd.f32 %v1219, %v1221
  %v1286 = vld [vmem:[%s3] sm:$0xff]
  %v1287 = vld [vmem:[%s3 + $0x8] sm:$0xff]
  %v1288 = vld [vmem:[%s3 + $0x10] sm:$0xff]
  %v1289 = vld [vmem:[%s3 + $0x18] sm:$0xff]
  %vm1290 = vcmp.gt.f32.partialorder %v1286, 0.0
  %vm1291 = vcmp.gt.f32.partialorder %v1287, 0.0
  %vm1292 = vcmp.gt.f32.partialorder %v1288, 0.0
  %vm1293 = vcmp.gt.f32.partialorder %v1289, 0.0
  %v1294 = vsel %vm1290, 1.0, 0.0
  %v1295 = vsel %vm1291, 1.0, 0.0
  %v1296 = vsel %vm1292, 1.0, 0.0
  %v1297 = vsel %vm1293, 1.0, 0.0
  %vm1298 = vcmask 130048
  %v1299 = vsel %vm1298, %v1294, -inf
  %1300 = vmax.xlane.f32.xlu0 %v1299
  %v1301 = vpop.xlane.xlu0 %1300
  %v1302 = vsel %vm1298, %v1295, -inf
  %1303 = vmax.xlane.f32.xlu0 %v1302
  %v1304 = vpop.xlane.xlu0 %1303
  %v1305 = vsel %vm1298, %v1296, -inf
  %1306 = vmax.xlane.f32.xlu0 %v1305
  %v1307 = vpop.xlane.xlu0 %1306
  %v1308 = vsel %vm1298, %v1297, -inf
  %1309 = vmax.xlane.f32.xlu0 %v1308
  %v1310 = vpop.xlane.xlu0 %1309
  %vm1311 = vcmp.gt.f32.partialorder %v1301, 0.0
  %vm1312 = vcmp.gt.f32.partialorder %v1304, 0.0
  %vm1313 = vcmp.gt.f32.partialorder %v1307, 0.0
  %vm1314 = vcmp.gt.f32.partialorder %v1310, 0.0
  %v1379 = vperm.slane %v1222, %v121
  %v1380 = vadd.s32 %v121, 4294967288
  %v1381 = vperm.slane %v1223, %v1380
  %vm1382 = vcmask 130112
  %v1383 = vsel %vm1382, %v1381, %v1379
  %v1384 = vperm.slane %v1224, %v121
  %v1385 = vperm.slane %v1225, %v1380
  %v1386 = vsel %vm1382, %v1385, %v1384
  %v1387 = vperm.slane %v1226, %v121
  %v1388 = vperm.slane %v1227, %v1380
  %v1389 = vsel %vm1382, %v1388, %v1387
  %v1390 = vperm.slane %v1228, %v121
  %v1391 = vperm.slane %v1229, %v1380
  %v1392 = vsel %vm1382, %v1391, %v1390
  %v1393 = vperm.slane %v1230, %v121
  %v1394 = vperm.slane %v1231, %v1380
  %v1395 = vsel %vm1382, %v1394, %v1393
  %v1396 = vperm.slane %v1232, %v121
  %v1397 = vperm.slane %v1233, %v1380
  %v1398 = vsel %vm1382, %v1397, %v1396
  %v1399 = vperm.slane %v1234, %v121
  %v1400 = vperm.slane %v1235, %v1380
  %v1401 = vsel %vm1382, %v1400, %v1399
  %v1402 = vperm.slane %v1236, %v121
  %v1403 = vperm.slane %v1237, %v1380
  %v1404 = vsel %vm1382, %v1403, %v1402
  %v1405 = vperm.slane %v1238, %v121
  %v1406 = vperm.slane %v1239, %v1380
  %v1407 = vsel %vm1382, %v1406, %v1405
  %v1408 = vperm.slane %v1240, %v121
  %v1409 = vperm.slane %v1241, %v1380
  %v1410 = vsel %vm1382, %v1409, %v1408
  %v1411 = vperm.slane %v1242, %v121
  %v1412 = vperm.slane %v1243, %v1380
  %v1413 = vsel %vm1382, %v1412, %v1411
  %v1414 = vperm.slane %v1244, %v121
  %v1415 = vperm.slane %v1245, %v1380
  %v1416 = vsel %vm1382, %v1415, %v1414
  %v1417 = vperm.slane %v1246, %v121
  %v1418 = vperm.slane %v1247, %v1380
  %v1419 = vsel %vm1382, %v1418, %v1417
  %v1420 = vperm.slane %v1248, %v121
  %v1421 = vperm.slane %v1249, %v1380
  %v1422 = vsel %vm1382, %v1421, %v1420
  %v1423 = vperm.slane %v1250, %v121
  %v1424 = vperm.slane %v1251, %v1380
  %v1425 = vsel %vm1382, %v1424, %v1423
  %v1426 = vperm.slane %v1252, %v121
  %v1427 = vperm.slane %v1253, %v1380
  %v1428 = vsel %vm1382, %v1427, %v1426
  %v1429 = vperm.slane %v1254, %v121
  %v1430 = vperm.slane %v1255, %v1380
  %v1431 = vsel %vm1382, %v1430, %v1429
  %v1432 = vperm.slane %v1256, %v121
  %v1433 = vperm.slane %v1257, %v1380
  %v1434 = vsel %vm1382, %v1433, %v1432
  %v1435 = vperm.slane %v1258, %v121
  %v1436 = vperm.slane %v1259, %v1380
  %v1437 = vsel %vm1382, %v1436, %v1435
  %v1438 = vperm.slane %v1260, %v121
  %v1439 = vperm.slane %v1261, %v1380
  %v1440 = vsel %vm1382, %v1439, %v1438
  %v1441 = vperm.slane %v1262, %v121
  %v1442 = vperm.slane %v1263, %v1380
  %v1443 = vsel %vm1382, %v1442, %v1441
  %v1444 = vperm.slane %v1264, %v121
  %v1445 = vperm.slane %v1265, %v1380
  %v1446 = vsel %vm1382, %v1445, %v1444
  %v1447 = vperm.slane %v1266, %v121
  %v1448 = vperm.slane %v1267, %v1380
  %v1449 = vsel %vm1382, %v1448, %v1447
  %v1450 = vperm.slane %v1268, %v121
  %v1451 = vperm.slane %v1269, %v1380
  %v1452 = vsel %vm1382, %v1451, %v1450
  %v1453 = vperm.slane %v1270, %v121
  %v1454 = vperm.slane %v1271, %v1380
  %v1455 = vsel %vm1382, %v1454, %v1453
  %v1456 = vperm.slane %v1272, %v121
  %v1457 = vperm.slane %v1273, %v1380
  %v1458 = vsel %vm1382, %v1457, %v1456
  %v1459 = vperm.slane %v1274, %v121
  %v1460 = vperm.slane %v1275, %v1380
  %v1461 = vsel %vm1382, %v1460, %v1459
  %v1462 = vperm.slane %v1276, %v121
  %v1463 = vperm.slane %v1277, %v1380
  %v1464 = vsel %vm1382, %v1463, %v1462
  %v1465 = vperm.slane %v1278, %v121
  %v1466 = vperm.slane %v1279, %v1380
  %v1467 = vsel %vm1382, %v1466, %v1465
  %v1468 = vperm.slane %v1280, %v121
  %v1469 = vperm.slane %v1281, %v1380
  %v1470 = vsel %vm1382, %v1469, %v1468
  %v1471 = vperm.slane %v1282, %v121
  %v1472 = vperm.slane %v1283, %v1380
  %v1473 = vsel %vm1382, %v1472, %v1471
  %v1474 = vperm.slane %v1284, %v121
  %v1475 = vperm.slane %v1285, %v1380
  %v1476 = vsel %vm1382, %v1475, %v1474
  %vm1477 = vcmask 1041409
  %v1478 = vsel %vm1477, %v1386, %v1383
  %vm1479 = vcmask 1042434
  %v1480 = vsel %vm1479, %v1389, %v1478
  %vm1481 = vcmask 1043459
  %v1482 = vsel %vm1481, %v1392, %v1480
  %vm1483 = vcmask 1044484
  %v1484 = vsel %vm1483, %v1395, %v1482
  %vm1485 = vcmask 1045509
  %v1486 = vsel %vm1485, %v1398, %v1484
  %vm1487 = vcmask 1046534
  %v1488 = vsel %vm1487, %v1401, %v1486
  %vm1489 = vcmask 1047559
  %v1490 = vsel %vm1489, %v1404, %v1488
  %v1491 = vsel %vm1477, %v1410, %v1407
  %v1492 = vsel %vm1479, %v1413, %v1491
  %v1493 = vsel %vm1481, %v1416, %v1492
  %v1494 = vsel %vm1483, %v1419, %v1493
  %v1495 = vsel %vm1485, %v1422, %v1494
  %v1496 = vsel %vm1487, %v1425, %v1495
  %v1497 = vsel %vm1489, %v1428, %v1496
  %v1498 = vsel %vm1477, %v1434, %v1431
  %v1499 = vsel %vm1479, %v1437, %v1498
  %v1500 = vsel %vm1481, %v1440, %v1499
  %v1501 = vsel %vm1483, %v1443, %v1500
  %v1502 = vsel %vm1485, %v1446, %v1501
  %v1503 = vsel %vm1487, %v1449, %v1502
  %v1504 = vsel %vm1489, %v1452, %v1503
  %v1505 = vsel %vm1477, %v1458, %v1455
  %v1506 = vsel %vm1479, %v1461, %v1505
  %v1507 = vsel %vm1481, %v1464, %v1506
  %v1508 = vsel %vm1483, %v1467, %v1507
  %v1509 = vsel %vm1485, %v1470, %v1508
  %v1510 = vsel %vm1487, %v1473, %v1509
  %v1511 = vsel %vm1489, %v1476, %v1510
  %v1516 = vsel %vm1290, %v1490, -inf
  %v1517 = vsel %vm1291, %v1497, -inf
  %v1518 = vsel %vm1292, %v1504, -inf
  %v1519 = vsel %vm1293, %v1511, -inf
  %v1520 = vsel %vm1298, %v1516, -inf
  %1521 = vmax.xlane.f32.xlu0 %v1520
  %v1522 = vpop.xlane.xlu0 %1521
  %v1523 = vsel %vm1298, %v1517, -inf
  %1524 = vmax.xlane.f32.xlu0 %v1523
  %v1525 = vpop.xlane.xlu0 %1524
  %v1526 = vsel %vm1298, %v1518, -inf
  %1527 = vmax.xlane.f32.xlu0 %v1526
  %v1528 = vpop.xlane.xlu0 %1527
  %v1529 = vsel %vm1298, %v1519, -inf
  %1530 = vmax.xlane.f32.xlu0 %v1529
  %v1531 = vpop.xlane.xlu0 %1530
  %v1532 = vsel %vm1311, %v1522, 0.0
  %v1533 = vsel %vm1312, %v1525, 0.0
  %v1534 = vsel %vm1313, %v1528, 0.0
  %v1535 = vsel %vm1314, %v1531, 0.0
  %v1540 = vperm.slane %v1532, 0
  %v1541 = vperm.slane %v1532, 1
  %v1542 = vperm.slane %v1532, 2
  %v1543 = vperm.slane %v1532, 3
  %v1544 = vperm.slane %v1532, 4
  %v1545 = vperm.slane %v1532, 5
  %v1546 = vperm.slane %v1532, 6
  %v1547 = vperm.slane %v1532, 7
  %v1548 = vperm.slane %v1533, 0
  %v1549 = vperm.slane %v1533, 1
  %v1550 = vperm.slane %v1533, 2
  %v1551 = vperm.slane %v1533, 3
  %v1552 = vperm.slane %v1533, 4
  %v1553 = vperm.slane %v1533, 5
  %v1554 = vperm.slane %v1533, 6
  %v1555 = vperm.slane %v1533, 7
  %v1556 = vperm.slane %v1534, 0
  %v1557 = vperm.slane %v1534, 1
  %v1558 = vperm.slane %v1534, 2
  %v1559 = vperm.slane %v1534, 3
  %v1560 = vperm.slane %v1534, 4
  %v1561 = vperm.slane %v1534, 5
  %v1562 = vperm.slane %v1534, 6
  %v1563 = vperm.slane %v1534, 7
  %v1564 = vperm.slane %v1535, 0
  %v1565 = vperm.slane %v1535, 1
  %v1566 = vperm.slane %v1535, 2
  %v1567 = vperm.slane %v1535, 3
  %v1568 = vperm.slane %v1535, 4
  %v1569 = vperm.slane %v1535, 5
  %v1570 = vperm.slane %v1535, 6
  %v1571 = vperm.slane %v1535, 7
  %v1604 = vsub.f32 %v1222, %v1540
  %v1605 = vsub.f32 %v1223, %v1540
  %v1606 = vsub.f32 %v1224, %v1541
  %v1607 = vsub.f32 %v1225, %v1541
  %v1608 = vsub.f32 %v1226, %v1542
  %v1609 = vsub.f32 %v1227, %v1542
  %v1610 = vsub.f32 %v1228, %v1543
  %v1611 = vsub.f32 %v1229, %v1543
  %v1612 = vsub.f32 %v1230, %v1544
  %v1613 = vsub.f32 %v1231, %v1544
  %v1614 = vsub.f32 %v1232, %v1545
  %v1615 = vsub.f32 %v1233, %v1545
  %v1616 = vsub.f32 %v1234, %v1546
  %v1617 = vsub.f32 %v1235, %v1546
  %v1618 = vsub.f32 %v1236, %v1547
  %v1619 = vsub.f32 %v1237, %v1547
  %v1620 = vsub.f32 %v1238, %v1548
  %v1621 = vsub.f32 %v1239, %v1548
  %v1622 = vsub.f32 %v1240, %v1549
  %v1623 = vsub.f32 %v1241, %v1549
  %v1624 = vsub.f32 %v1242, %v1550
  %v1625 = vsub.f32 %v1243, %v1550
  %v1626 = vsub.f32 %v1244, %v1551
  %v1627 = vsub.f32 %v1245, %v1551
  %v1628 = vsub.f32 %v1246, %v1552
  %v1629 = vsub.f32 %v1247, %v1552
  %v1630 = vsub.f32 %v1248, %v1553
  %v1631 = vsub.f32 %v1249, %v1553
  %v1632 = vsub.f32 %v1250, %v1554
  %v1633 = vsub.f32 %v1251, %v1554
  %v1634 = vsub.f32 %v1252, %v1555
  %v1635 = vsub.f32 %v1253, %v1555
  %v1636 = vsub.f32 %v1254, %v1556
  %v1637 = vsub.f32 %v1255, %v1556
  %v1638 = vsub.f32 %v1256, %v1557
  %v1639 = vsub.f32 %v1257, %v1557
  %v1640 = vsub.f32 %v1258, %v1558
  %v1641 = vsub.f32 %v1259, %v1558
  %v1642 = vsub.f32 %v1260, %v1559
  %v1643 = vsub.f32 %v1261, %v1559
  %v1644 = vsub.f32 %v1262, %v1560
  %v1645 = vsub.f32 %v1263, %v1560
  %v1646 = vsub.f32 %v1264, %v1561
  %v1647 = vsub.f32 %v1265, %v1561
  %v1648 = vsub.f32 %v1266, %v1562
  %v1649 = vsub.f32 %v1267, %v1562
  %v1650 = vsub.f32 %v1268, %v1563
  %v1651 = vsub.f32 %v1269, %v1563
  %v1652 = vsub.f32 %v1270, %v1564
  %v1653 = vsub.f32 %v1271, %v1564
  %v1654 = vsub.f32 %v1272, %v1565
  %v1655 = vsub.f32 %v1273, %v1565
  %v1656 = vsub.f32 %v1274, %v1566
  %v1657 = vsub.f32 %v1275, %v1566
  %v1658 = vsub.f32 %v1276, %v1567
  %v1659 = vsub.f32 %v1277, %v1567
  %v1660 = vsub.f32 %v1278, %v1568
  %v1661 = vsub.f32 %v1279, %v1568
  %v1662 = vsub.f32 %v1280, %v1569
  %v1663 = vsub.f32 %v1281, %v1569
  %v1664 = vsub.f32 %v1282, %v1570
  %v1665 = vsub.f32 %v1283, %v1570
  %v1666 = vsub.f32 %v1284, %v1571
  %v1667 = vsub.f32 %v1285, %v1571
  %v1668 = vmul.f32 %v1604, 1.442695
  %v1669 = vpow.pop %v1668
  %v1670 = vmul.f32 %v1605, 1.442695
  %v1671 = vpow.pop %v1670
  %v1672 = vmul.f32 %v1606, 1.442695
  %v1673 = vpow.pop %v1672
  %v1674 = vmul.f32 %v1607, 1.442695
  %v1675 = vpow.pop %v1674
  %v1676 = vmul.f32 %v1608, 1.442695
  %v1677 = vpow.pop %v1676
  %v1678 = vmul.f32 %v1609, 1.442695
  %v1679 = vpow.pop %v1678
  %v1680 = vmul.f32 %v1610, 1.442695
  %v1681 = vpow.pop %v1680
  %v1682 = vmul.f32 %v1611, 1.442695
  %v1683 = vpow.pop %v1682
  %v1684 = vmul.f32 %v1612, 1.442695
  %v1685 = vpow.pop %v1684
  %v1686 = vmul.f32 %v1613, 1.442695
  %v1687 = vpow.pop %v1686
  %v1688 = vmul.f32 %v1614, 1.442695
  %v1689 = vpow.pop %v1688
  %v1690 = vmul.f32 %v1615, 1.442695
  %v1691 = vpow.pop %v1690
  %v1692 = vmul.f32 %v1616, 1.442695
  %v1693 = vpow.pop %v1692
  %v1694 = vmul.f32 %v1617, 1.442695
  %v1695 = vpow.pop %v1694
  %v1696 = vmul.f32 %v1618, 1.442695
  %v1697 = vpow.pop %v1696
  %v1698 = vmul.f32 %v1619, 1.442695
  %v1699 = vpow.pop %v1698
  %v1700 = vmul.f32 %v1620, 1.442695
  %v1701 = vpow.pop %v1700
  %v1702 = vmul.f32 %v1621, 1.442695
  %v1703 = vpow.pop %v1702
  %v1704 = vmul.f32 %v1622, 1.442695
  %v1705 = vpow.pop %v1704
  %v1706 = vmul.f32 %v1623, 1.442695
  %v1707 = vpow.pop %v1706
  %v1708 = vmul.f32 %v1624, 1.442695
  %v1709 = vpow.pop %v1708
  %v1710 = vmul.f32 %v1625, 1.442695
  %v1711 = vpow.pop %v1710
  %v1712 = vmul.f32 %v1626, 1.442695
  %v1713 = vpow.pop %v1712
  %v1714 = vmul.f32 %v1627, 1.442695
  %v1715 = vpow.pop %v1714
  %v1716 = vmul.f32 %v1628, 1.442695
  %v1717 = vpow.pop %v1716
  %v1718 = vmul.f32 %v1629, 1.442695
  %v1719 = vpow.pop %v1718
  %v1720 = vmul.f32 %v1630, 1.442695
  %v1721 = vpow.pop %v1720
  %v1722 = vmul.f32 %v1631, 1.442695
  %v1723 = vpow.pop %v1722
  %v1724 = vmul.f32 %v1632, 1.442695
  %v1725 = vpow.pop %v1724
  %v1726 = vmul.f32 %v1633, 1.442695
  %v1727 = vpow.pop %v1726
  %v1728 = vmul.f32 %v1634, 1.442695
  %v1729 = vpow.pop %v1728
  %v1730 = vmul.f32 %v1635, 1.442695
  %v1731 = vpow.pop %v1730
  %v1732 = vmul.f32 %v1636, 1.442695
  %v1733 = vpow.pop %v1732
  %v1734 = vmul.f32 %v1637, 1.442695
  %v1735 = vpow.pop %v1734
  %v1736 = vmul.f32 %v1638, 1.442695
  %v1737 = vpow.pop %v1736
  %v1738 = vmul.f32 %v1639, 1.442695
  %v1739 = vpow.pop %v1738
  %v1740 = vmul.f32 %v1640, 1.442695
  %v1741 = vpow.pop %v1740
  %v1742 = vmul.f32 %v1641, 1.442695
  %v1743 = vpow.pop %v1742
  %v1744 = vmul.f32 %v1642, 1.442695
  %v1745 = vpow.pop %v1744
  %v1746 = vmul.f32 %v1643, 1.442695
  %v1747 = vpow.pop %v1746
  %v1748 = vmul.f32 %v1644, 1.442695
  %v1749 = vpow.pop %v1748
  %v1750 = vmul.f32 %v1645, 1.442695
  %v1751 = vpow.pop %v1750
  %v1752 = vmul.f32 %v1646, 1.442695
  %v1753 = vpow.pop %v1752
  %v1754 = vmul.f32 %v1647, 1.442695
  %v1755 = vpow.pop %v1754
  %v1756 = vmul.f32 %v1648, 1.442695
  %v1757 = vpow.pop %v1756
  %v1758 = vmul.f32 %v1649, 1.442695
  %v1759 = vpow.pop %v1758
  %v1760 = vmul.f32 %v1650, 1.442695
  %v1761 = vpow.pop %v1760
  %v1762 = vmul.f32 %v1651, 1.442695
  %v1763 = vpow.pop %v1762
  %v1764 = vmul.f32 %v1652, 1.442695
  %v1765 = vpow.pop %v1764
  %v1766 = vmul.f32 %v1653, 1.442695
  %v1767 = vpow.pop %v1766
  %v1768 = vmul.f32 %v1654, 1.442695
  %v1769 = vpow.pop %v1768
  %v1770 = vmul.f32 %v1655, 1.442695
  %v1771 = vpow.pop %v1770
  %v1772 = vmul.f32 %v1656, 1.442695
  %v1773 = vpow.pop %v1772
  %v1774 = vmul.f32 %v1657, 1.442695
  %v1775 = vpow.pop %v1774
  %v1776 = vmul.f32 %v1658, 1.442695
  %v1777 = vpow.pop %v1776
  %v1778 = vmul.f32 %v1659, 1.442695
  %v1779 = vpow.pop %v1778
  %v1780 = vmul.f32 %v1660, 1.442695
  %v1781 = vpow.pop %v1780
  %v1782 = vmul.f32 %v1661, 1.442695
  %v1783 = vpow.pop %v1782
  %v1784 = vmul.f32 %v1662, 1.442695
  %v1785 = vpow.pop %v1784
  %v1786 = vmul.f32 %v1663, 1.442695
  %v1787 = vpow.pop %v1786
  %v1788 = vmul.f32 %v1664, 1.442695
  %v1789 = vpow.pop %v1788
  %v1790 = vmul.f32 %v1665, 1.442695
  %v1791 = vpow.pop %v1790
  %v1792 = vmul.f32 %v1666, 1.442695
  %v1793 = vpow.pop %v1792
  %v1794 = vmul.f32 %v1667, 1.442695
  %v1795 = vpow.pop %v1794
  %1860 = vset.pattern.permute.xlu0 0
  %1861 = vperm.xlu0 %1860, %v1669
  %v1862 = vpop.permute.xlu0 %1861
  %1863 = vset.pattern.permute.xlu0 0
  %1864 = vperm.xlu0 %1863, %v1671
  %v1865 = vpop.permute.xlu0 %1864
  %1866 = vset.pattern.permute.xlu0 0
  %1867 = vperm.xlu0 %1866, %v1673
  %v1868 = vpop.permute.xlu0 %1867
  %1869 = vset.pattern.permute.xlu0 0
  %1870 = vperm.xlu0 %1869, %v1675
  %v1871 = vpop.permute.xlu0 %1870
  %1872 = vset.pattern.permute.xlu0 0
  %1873 = vperm.xlu0 %1872, %v1677
  %v1874 = vpop.permute.xlu0 %1873
  %1875 = vset.pattern.permute.xlu0 0
  %1876 = vperm.xlu0 %1875, %v1679
  %v1877 = vpop.permute.xlu0 %1876
  %1878 = vset.pattern.permute.xlu0 0
  %1879 = vperm.xlu0 %1878, %v1681
  %v1880 = vpop.permute.xlu0 %1879
  %1881 = vset.pattern.permute.xlu0 0
  %1882 = vperm.xlu0 %1881, %v1683
  %v1883 = vpop.permute.xlu0 %1882
  %1884 = vset.pattern.permute.xlu0 0
  %1885 = vperm.xlu0 %1884, %v1685
  %v1886 = vpop.permute.xlu0 %1885
  %1887 = vset.pattern.permute.xlu0 0
  %1888 = vperm.xlu0 %1887, %v1687
  %v1889 = vpop.permute.xlu0 %1888
  %1890 = vset.pattern.permute.xlu0 0
  %1891 = vperm.xlu0 %1890, %v1689
  %v1892 = vpop.permute.xlu0 %1891
  %1893 = vset.pattern.permute.xlu0 0
  %1894 = vperm.xlu0 %1893, %v1691
  %v1895 = vpop.permute.xlu0 %1894
  %1896 = vset.pattern.permute.xlu0 0
  %1897 = vperm.xlu0 %1896, %v1693
  %v1898 = vpop.permute.xlu0 %1897
  %1899 = vset.pattern.permute.xlu0 0
  %1900 = vperm.xlu0 %1899, %v1695
  %v1901 = vpop.permute.xlu0 %1900
  %1902 = vset.pattern.permute.xlu0 0
  %1903 = vperm.xlu0 %1902, %v1697
  %v1904 = vpop.permute.xlu0 %1903
  %1905 = vset.pattern.permute.xlu0 0
  %1906 = vperm.xlu0 %1905, %v1699
  %v1907 = vpop.permute.xlu0 %1906
  %1908 = vset.pattern.permute.xlu0 0
  %1909 = vperm.xlu0 %1908, %v1701
  %v1910 = vpop.permute.xlu0 %1909
  %1911 = vset.pattern.permute.xlu0 0
  %1912 = vperm.xlu0 %1911, %v1703
  %v1913 = vpop.permute.xlu0 %1912
  %1914 = vset.pattern.permute.xlu0 0
  %1915 = vperm.xlu0 %1914, %v1705
  %v1916 = vpop.permute.xlu0 %1915
  %1917 = vset.pattern.permute.xlu0 0
  %1918 = vperm.xlu0 %1917, %v1707
  %v1919 = vpop.permute.xlu0 %1918
  %1920 = vset.pattern.permute.xlu0 0
  %1921 = vperm.xlu0 %1920, %v1709
  %v1922 = vpop.permute.xlu0 %1921
  %1923 = vset.pattern.permute.xlu0 0
  %1924 = vperm.xlu0 %1923, %v1711
  %v1925 = vpop.permute.xlu0 %1924
  %1926 = vset.pattern.permute.xlu0 0
  %1927 = vperm.xlu0 %1926, %v1713
  %v1928 = vpop.permute.xlu0 %1927
  %1929 = vset.pattern.permute.xlu0 0
  %1930 = vperm.xlu0 %1929, %v1715
  %v1931 = vpop.permute.xlu0 %1930
  %1932 = vset.pattern.permute.xlu0 0
  %1933 = vperm.xlu0 %1932, %v1717
  %v1934 = vpop.permute.xlu0 %1933
  %1935 = vset.pattern.permute.xlu0 0
  %1936 = vperm.xlu0 %1935, %v1719
  %v1937 = vpop.permute.xlu0 %1936
  %1938 = vset.pattern.permute.xlu0 0
  %1939 = vperm.xlu0 %1938, %v1721
  %v1940 = vpop.permute.xlu0 %1939
  %1941 = vset.pattern.permute.xlu0 0
  %1942 = vperm.xlu0 %1941, %v1723
  %v1943 = vpop.permute.xlu0 %1942
  %1944 = vset.pattern.permute.xlu0 0
  %1945 = vperm.xlu0 %1944, %v1725
  %v1946 = vpop.permute.xlu0 %1945
  %1947 = vset.pattern.permute.xlu0 0
  %1948 = vperm.xlu0 %1947, %v1727
  %v1949 = vpop.permute.xlu0 %1948
  %1950 = vset.pattern.permute.xlu0 0
  %1951 = vperm.xlu0 %1950, %v1729
  %v1952 = vpop.permute.xlu0 %1951
  %1953 = vset.pattern.permute.xlu0 0
  %1954 = vperm.xlu0 %1953, %v1731
  %v1955 = vpop.permute.xlu0 %1954
  %1956 = vset.pattern.permute.xlu0 0
  %1957 = vperm.xlu0 %1956, %v1733
  %v1958 = vpop.permute.xlu0 %1957
  %1959 = vset.pattern.permute.xlu0 0
  %1960 = vperm.xlu0 %1959, %v1735
  %v1961 = vpop.permute.xlu0 %1960
  %1962 = vset.pattern.permute.xlu0 0
  %1963 = vperm.xlu0 %1962, %v1737
  %v1964 = vpop.permute.xlu0 %1963
  %1965 = vset.pattern.permute.xlu0 0
  %1966 = vperm.xlu0 %1965, %v1739
  %v1967 = vpop.permute.xlu0 %1966
  %1968 = vset.pattern.permute.xlu0 0
  %1969 = vperm.xlu0 %1968, %v1741
  %v1970 = vpop.permute.xlu0 %1969
  %1971 = vset.pattern.permute.xlu0 0
  %1972 = vperm.xlu0 %1971, %v1743
  %v1973 = vpop.permute.xlu0 %1972
  %1974 = vset.pattern.permute.xlu0 0
  %1975 = vperm.xlu0 %1974, %v1745
  %v1976 = vpop.permute.xlu0 %1975
  %1977 = vset.pattern.permute.xlu0 0
  %1978 = vperm.xlu0 %1977, %v1747
  %v1979 = vpop.permute.xlu0 %1978
  %1980 = vset.pattern.permute.xlu0 0
  %1981 = vperm.xlu0 %1980, %v1749
  %v1982 = vpop.permute.xlu0 %1981
  %1983 = vset.pattern.permute.xlu0 0
  %1984 = vperm.xlu0 %1983, %v1751
  %v1985 = vpop.permute.xlu0 %1984
  %1986 = vset.pattern.permute.xlu0 0
  %1987 = vperm.xlu0 %1986, %v1753
  %v1988 = vpop.permute.xlu0 %1987
  %1989 = vset.pattern.permute.xlu0 0
  %1990 = vperm.xlu0 %1989, %v1755
  %v1991 = vpop.permute.xlu0 %1990
  %1992 = vset.pattern.permute.xlu0 0
  %1993 = vperm.xlu0 %1992, %v1757
  %v1994 = vpop.permute.xlu0 %1993
  %1995 = vset.pattern.permute.xlu0 0
  %1996 = vperm.xlu0 %1995, %v1759
  %v1997 = vpop.permute.xlu0 %1996
  %1998 = vset.pattern.permute.xlu0 0
  %1999 = vperm.xlu0 %1998, %v1761
  %v2000 = vpop.permute.xlu0 %1999
  %2001 = vset.pattern.permute.xlu0 0
  %2002 = vperm.xlu0 %2001, %v1763
  %v2003 = vpop.permute.xlu0 %2002
  %2004 = vset.pattern.permute.xlu0 0
  %2005 = vperm.xlu0 %2004, %v1765
  %v2006 = vpop.permute.xlu0 %2005
  %2007 = vset.pattern.permute.xlu0 0
  %2008 = vperm.xlu0 %2007, %v1767
  %v2009 = vpop.permute.xlu0 %2008
  %2010 = vset.pattern.permute.xlu0 0
  %2011 = vperm.xlu0 %2010, %v1769
  %v2012 = vpop.permute.xlu0 %2011
  %2013 = vset.pattern.permute.xlu0 0
  %2014 = vperm.xlu0 %2013, %v1771
  %v2015 = vpop.permute.xlu0 %2014
  %2016 = vset.pattern.permute.xlu0 0
  %2017 = vperm.xlu0 %2016, %v1773
  %v2018 = vpop.permute.xlu0 %2017
  %2019 = vset.pattern.permute.xlu0 0
  %2020 = vperm.xlu0 %2019, %v1775
  %v2021 = vpop.permute.xlu0 %2020
  %2022 = vset.pattern.permute.xlu0 0
  %2023 = vperm.xlu0 %2022, %v1777
  %v2024 = vpop.permute.xlu0 %2023
  %2025 = vset.pattern.permute.xlu0 0
  %2026 = vperm.xlu0 %2025, %v1779
  %v2027 = vpop.permute.xlu0 %2026
  %2028 = vset.pattern.permute.xlu0 0
  %2029 = vperm.xlu0 %2028, %v1781
  %v2030 = vpop.permute.xlu0 %2029
  %2031 = vset.pattern.permute.xlu0 0
  %2032 = vperm.xlu0 %2031, %v1783
  %v2033 = vpop.permute.xlu0 %2032
  %2034 = vset.pattern.permute.xlu0 0
  %2035 = vperm.xlu0 %2034, %v1785
  %v2036 = vpop.permute.xlu0 %2035
  %2037 = vset.pattern.permute.xlu0 0
  %2038 = vperm.xlu0 %2037, %v1787
  %v2039 = vpop.permute.xlu0 %2038
  %2040 = vset.pattern.permute.xlu0 0
  %2041 = vperm.xlu0 %2040, %v1789
  %v2042 = vpop.permute.xlu0 %2041
  %2043 = vset.pattern.permute.xlu0 0
  %2044 = vperm.xlu0 %2043, %v1791
  %v2045 = vpop.permute.xlu0 %2044
  %2046 = vset.pattern.permute.xlu0 0
  %2047 = vperm.xlu0 %2046, %v1793
  %v2048 = vpop.permute.xlu0 %2047
  %2049 = vset.pattern.permute.xlu0 0
  %2050 = vperm.xlu0 %2049, %v1795
  %v2051 = vpop.permute.xlu0 %2050
  %v2052 = vperm.slane %v1862, %v121
  %v2053 = vperm.slane %v1865, %v1380
  %v2054 = vsel %vm1382, %v2053, %v2052
  %v2055 = vperm.slane %v1868, %v121
  %v2056 = vperm.slane %v1871, %v1380
  %v2057 = vsel %vm1382, %v2056, %v2055
  %v2058 = vperm.slane %v1874, %v121
  %v2059 = vperm.slane %v1877, %v1380
  %v2060 = vsel %vm1382, %v2059, %v2058
  %v2061 = vperm.slane %v1880, %v121
  %v2062 = vperm.slane %v1883, %v1380
  %v2063 = vsel %vm1382, %v2062, %v2061
  %v2064 = vperm.slane %v1886, %v121
  %v2065 = vperm.slane %v1889, %v1380
  %v2066 = vsel %vm1382, %v2065, %v2064
  %v2067 = vperm.slane %v1892, %v121
  %v2068 = vperm.slane %v1895, %v1380
  %v2069 = vsel %vm1382, %v2068, %v2067
  %v2070 = vperm.slane %v1898, %v121
  %v2071 = vperm.slane %v1901, %v1380
  %v2072 = vsel %vm1382, %v2071, %v2070
  %v2073 = vperm.slane %v1904, %v121
  %v2074 = vperm.slane %v1907, %v1380
  %v2075 = vsel %vm1382, %v2074, %v2073
  %v2076 = vperm.slane %v1910, %v121
  %v2077 = vperm.slane %v1913, %v1380
  %v2078 = vsel %vm1382, %v2077, %v2076
  %v2079 = vperm.slane %v1916, %v121
  %v2080 = vperm.slane %v1919, %v1380
  %v2081 = vsel %vm1382, %v2080, %v2079
  %v2082 = vperm.slane %v1922, %v121
  %v2083 = vperm.slane %v1925, %v1380
  %v2084 = vsel %vm1382, %v2083, %v2082
  %v2085 = vperm.slane %v1928, %v121
  %v2086 = vperm.slane %v1931, %v1380
  %v2087 = vsel %vm1382, %v2086, %v2085
  %v2088 = vperm.slane %v1934, %v121
  %v2089 = vperm.slane %v1937, %v1380
  %v2090 = vsel %vm1382, %v2089, %v2088
  %v2091 = vperm.slane %v1940, %v121
  %v2092 = vperm.slane %v1943, %v1380
  %v2093 = vsel %vm1382, %v2092, %v2091
  %v2094 = vperm.slane %v1946, %v121
  %v2095 = vperm.slane %v1949, %v1380
  %v2096 = vsel %vm1382, %v2095, %v2094
  %v2097 = vperm.slane %v1952, %v121
  %v2098 = vperm.slane %v1955, %v1380
  %v2099 = vsel %vm1382, %v2098, %v2097
  %v2100 = vperm.slane %v1958, %v121
  %v2101 = vperm.slane %v1961, %v1380
  %v2102 = vsel %vm1382, %v2101, %v2100
  %v2103 = vperm.slane %v1964, %v121
  %v2104 = vperm.slane %v1967, %v1380
  %v2105 = vsel %vm1382, %v2104, %v2103
  %v2106 = vperm.slane %v1970, %v121
  %v2107 = vperm.slane %v1973, %v1380
  %v2108 = vsel %vm1382, %v2107, %v2106
  %v2109 = vperm.slane %v1976, %v121
  %v2110 = vperm.slane %v1979, %v1380
  %v2111 = vsel %vm1382, %v2110, %v2109
  %v2112 = vperm.slane %v1982, %v121
  %v2113 = vperm.slane %v1985, %v1380
  %v2114 = vsel %vm1382, %v2113, %v2112
  %v2115 = vperm.slane %v1988, %v121
  %v2116 = vperm.slane %v1991, %v1380
  %v2117 = vsel %vm1382, %v2116, %v2115
  %v2118 = vperm.slane %v1994, %v121
  %v2119 = vperm.slane %v1997, %v1380
  %v2120 = vsel %vm1382, %v2119, %v2118
  %v2121 = vperm.slane %v2000, %v121
  %v2122 = vperm.slane %v2003, %v1380
  %v2123 = vsel %vm1382, %v2122, %v2121
  %v2124 = vperm.slane %v2006, %v121
  %v2125 = vperm.slane %v2009, %v1380
  %v2126 = vsel %vm1382, %v2125, %v2124
  %v2127 = vperm.slane %v2012, %v121
  %v2128 = vperm.slane %v2015, %v1380
  %v2129 = vsel %vm1382, %v2128, %v2127
  %v2130 = vperm.slane %v2018, %v121
  %v2131 = vperm.slane %v2021, %v1380
  %v2132 = vsel %vm1382, %v2131, %v2130
  %v2133 = vperm.slane %v2024, %v121
  %v2134 = vperm.slane %v2027, %v1380
  %v2135 = vsel %vm1382, %v2134, %v2133
  %v2136 = vperm.slane %v2030, %v121
  %v2137 = vperm.slane %v2033, %v1380
  %v2138 = vsel %vm1382, %v2137, %v2136
  %v2139 = vperm.slane %v2036, %v121
  %v2140 = vperm.slane %v2039, %v1380
  %v2141 = vsel %vm1382, %v2140, %v2139
  %v2142 = vperm.slane %v2042, %v121
  %v2143 = vperm.slane %v2045, %v1380
  %v2144 = vsel %vm1382, %v2143, %v2142
  %v2145 = vperm.slane %v2048, %v121
  %v2146 = vperm.slane %v2051, %v1380
  %v2147 = vsel %vm1382, %v2146, %v2145
  %v2148 = vsel %vm1477, %v2057, %v2054
  %v2149 = vsel %vm1479, %v2060, %v2148
  %v2150 = vsel %vm1481, %v2063, %v2149
  %v2151 = vsel %vm1483, %v2066, %v2150
  %v2152 = vsel %vm1485, %v2069, %v2151
  %v2153 = vsel %vm1487, %v2072, %v2152
  %v2154 = vsel %vm1489, %v2075, %v2153
  %v2155 = vsel %vm1477, %v2081, %v2078
  %v2156 = vsel %vm1479, %v2084, %v2155
  %v2157 = vsel %vm1481, %v2087, %v2156
  %v2158 = vsel %vm1483, %v2090, %v2157
  %v2159 = vsel %vm1485, %v2093, %v2158
  %v2160 = vsel %vm1487, %v2096, %v2159
  %v2161 = vsel %vm1489, %v2099, %v2160
  %v2162 = vsel %vm1477, %v2105, %v2102
  %v2163 = vsel %vm1479, %v2108, %v2162
  %v2164 = vsel %vm1481, %v2111, %v2163
  %v2165 = vsel %vm1483, %v2114, %v2164
  %v2166 = vsel %vm1485, %v2117, %v2165
  %v2167 = vsel %vm1487, %v2120, %v2166
  %v2168 = vsel %vm1489, %v2123, %v2167
  %v2169 = vsel %vm1477, %v2129, %v2126
  %v2170 = vsel %vm1479, %v2132, %v2169
  %v2171 = vsel %vm1481, %v2135, %v2170
  %v2172 = vsel %vm1483, %v2138, %v2171
  %v2173 = vsel %vm1485, %v2141, %v2172
  %v2174 = vsel %vm1487, %v2144, %v2173
  %v2175 = vsel %vm1489, %v2147, %v2174
  %v2180 = vsel %vm1290, %v2154, 0.0
  %v2181 = vsel %vm1291, %v2161, 0.0
  %v2182 = vsel %vm1292, %v2168, 0.0
  %v2183 = vsel %vm1293, %v2175, 0.0
  %v2184 = vsel %vm1298, %v2180, 0.0
  %2185 = vadd.xlane.f32.xlu0 %v2184
  %v2186 = vpop.xlane.xlu0 %2185
  %v2187 = vsel %vm1298, %v2181, 0.0
  %2188 = vadd.xlane.f32.xlu0 %v2187
  %v2189 = vpop.xlane.xlu0 %2188
  %v2190 = vsel %vm1298, %v2182, 0.0
  %2191 = vadd.xlane.f32.xlu0 %v2190
  %v2192 = vpop.xlane.xlu0 %2191
  %v2193 = vsel %vm1298, %v2183, 0.0
  %2194 = vadd.xlane.f32.xlu0 %v2193
  %v2195 = vpop.xlane.xlu0 %2194
  %v2196 = vsel %vm1311, %v2186, 1.0
  %v2197 = vsel %vm1312, %v2189, 1.0
  %v2198 = vsel %vm1313, %v2192, 1.0
  %v2199 = vsel %vm1314, %v2195, 1.0
  %v2200 = vrcp.pop %v2196
  %v2201 = vmul.f32 %v2196, %v2200
  %v2202 = vsub.f32 1.0, %v2201
  %v2203 = vmul.f32 %v2200, %v2202
  %v2204 = vadd.f32 %v2200, %v2203
  %vm2205 = vweird.f32 %v2196
  %vm2206 = vweird.f32 %v2200
  %vm2207 = vmor %vm2205, %vm2206
  %v2208 = vsel %vm2207, %v2200, %v2204
  %v2209 = vand.u32 2147483647, %v2196
  %vm2210 = vcmp.eq.f32.partialorder %v2209, 8.507059e+37
  %v2211 = vand.u32 %v2196, 2147483648
  %v2212 = vor.u32 1.1754944e-38, %v2211
  %v2213 = vsel %vm2210, %v2212, %v2208
  %v2214 = vmul.f32 %v2180, %v2213
  %v2215 = vrcp.pop %v2197
  %v2216 = vmul.f32 %v2197, %v2215
  %v2217 = vsub.f32 1.0, %v2216
  %v2218 = vmul.f32 %v2215, %v2217
  %v2219 = vadd.f32 %v2215, %v2218
  %vm2220 = vweird.f32 %v2197
  %vm2221 = vweird.f32 %v2215
  %vm2222 = vmor %vm2220, %vm2221
  %v2223 = vsel %vm2222, %v2215, %v2219
  %v2224 = vand.u32 2147483647, %v2197
  %vm2225 = vcmp.eq.f32.partialorder %v2224, 8.507059e+37
  %v2226 = vand.u32 %v2197, 2147483648
  %v2227 = vor.u32 1.1754944e-38, %v2226
  %v2228 = vsel %vm2225, %v2227, %v2223
  %v2229 = vmul.f32 %v2181, %v2228
  %v2230 = vrcp.pop %v2198
  %v2231 = vmul.f32 %v2198, %v2230
  %v2232 = vsub.f32 1.0, %v2231
  %v2233 = vmul.f32 %v2230, %v2232
  %v2234 = vadd.f32 %v2230, %v2233
  %vm2235 = vweird.f32 %v2198
  %vm2236 = vweird.f32 %v2230
  %vm2237 = vmor %vm2235, %vm2236
  %v2238 = vsel %vm2237, %v2230, %v2234
  %v2239 = vand.u32 2147483647, %v2198
  %vm2240 = vcmp.eq.f32.partialorder %v2239, 8.507059e+37
  %v2241 = vand.u32 %v2198, 2147483648
  %v2242 = vor.u32 1.1754944e-38, %v2241
  %v2243 = vsel %vm2240, %v2242, %v2238
  %v2244 = vmul.f32 %v2182, %v2243
  %v2245 = vrcp.pop %v2199
  %v2246 = vmul.f32 %v2199, %v2245
  %v2247 = vsub.f32 1.0, %v2246
  %v2248 = vmul.f32 %v2245, %v2247
  %v2249 = vadd.f32 %v2245, %v2248
  %vm2250 = vweird.f32 %v2199
  %vm2251 = vweird.f32 %v2245
  %vm2252 = vmor %vm2250, %vm2251
  %v2253 = vsel %vm2252, %v2245, %v2249
  %v2254 = vand.u32 2147483647, %v2199
  %vm2255 = vcmp.eq.f32.partialorder %v2254, 8.507059e+37
  %v2256 = vand.u32 %v2199, 2147483648
  %v2257 = vor.u32 1.1754944e-38, %v2256
  %v2258 = vsel %vm2255, %v2257, %v2253
  %v2259 = vmul.f32 %v2183, %v2258
  %v2260 = vperm.slane %v2214, 0
  %v2261 = vlaneseq
  %v2262 = vshrl.u32 %v2261, 7
  %2264 = vset.pattern.permute.xlu0 %v2262
  %2265 = vperm.xlu0 %2264, %v2260
  %v2266 = vpop.permute.xlu0 %2265
  %v2267 = vlaneseq
  %v2268 = vshrl.u32 %v2267, 7
  %v2269 = vadd.s32 %v2268, 8
  %2270 = vset.pattern.permute.xlu0 %v2269
  %2271 = vperm.xlu0 %2270, %v2260
  %v2272 = vpop.permute.xlu0 %2271
  %v2273 = vperm.slane %v2214, 1
  %v2274 = vlaneseq
  %v2275 = vshrl.u32 %v2274, 7
  %2277 = vset.pattern.permute.xlu0 %v2275
  %2278 = vperm.xlu0 %2277, %v2273
  %v2279 = vpop.permute.xlu0 %2278
  %v2280 = vlaneseq
  %v2281 = vshrl.u32 %v2280, 7
  %v2282 = vadd.s32 %v2281, 8
  %2283 = vset.pattern.permute.xlu0 %v2282
  %2284 = vperm.xlu0 %2283, %v2273
  %v2285 = vpop.permute.xlu0 %2284
  %v2286 = vperm.slane %v2214, 2
  %v2287 = vlaneseq
  %v2288 = vshrl.u32 %v2287, 7
  %2290 = vset.pattern.permute.xlu0 %v2288
  %2291 = vperm.xlu0 %2290, %v2286
  %v2292 = vpop.permute.xlu0 %2291
  %v2293 = vlaneseq
  %v2294 = vshrl.u32 %v2293, 7
  %v2295 = vadd.s32 %v2294, 8
  %2296 = vset.pattern.permute.xlu0 %v2295
  %2297 = vperm.xlu0 %2296, %v2286
  %v2298 = vpop.permute.xlu0 %2297
  %v2299 = vperm.slane %v2214, 3
  %v2300 = vlaneseq
  %v2301 = vshrl.u32 %v2300, 7
  %2303 = vset.pattern.permute.xlu0 %v2301
  %2304 = vperm.xlu0 %2303, %v2299
  %v2305 = vpop.permute.xlu0 %2304
  %v2306 = vlaneseq
  %v2307 = vshrl.u32 %v2306, 7
  %v2308 = vadd.s32 %v2307, 8
  %2309 = vset.pattern.permute.xlu0 %v2308
  %2310 = vperm.xlu0 %2309, %v2299
  %v2311 = vpop.permute.xlu0 %2310
  %v2312 = vperm.slane %v2214, 4
  %v2313 = vlaneseq
  %v2314 = vshrl.u32 %v2313, 7
  %2316 = vset.pattern.permute.xlu0 %v2314
  %2317 = vperm.xlu0 %2316, %v2312
  %v2318 = vpop.permute.xlu0 %2317
  %v2319 = vlaneseq
  %v2320 = vshrl.u32 %v2319, 7
  %v2321 = vadd.s32 %v2320, 8
  %2322 = vset.pattern.permute.xlu0 %v2321
  %2323 = vperm.xlu0 %2322, %v2312
  %v2324 = vpop.permute.xlu0 %2323
  %v2325 = vperm.slane %v2214, 5
  %v2326 = vlaneseq
  %v2327 = vshrl.u32 %v2326, 7
  %2329 = vset.pattern.permute.xlu0 %v2327
  %2330 = vperm.xlu0 %2329, %v2325
  %v2331 = vpop.permute.xlu0 %2330
  %v2332 = vlaneseq
  %v2333 = vshrl.u32 %v2332, 7
  %v2334 = vadd.s32 %v2333, 8
  %2335 = vset.pattern.permute.xlu0 %v2334
  %2336 = vperm.xlu0 %2335, %v2325
  %v2337 = vpop.permute.xlu0 %2336
  %v2338 = vperm.slane %v2214, 6
  %v2339 = vlaneseq
  %v2340 = vshrl.u32 %v2339, 7
  %2342 = vset.pattern.permute.xlu0 %v2340
  %2343 = vperm.xlu0 %2342, %v2338
  %v2344 = vpop.permute.xlu0 %2343
  %v2345 = vlaneseq
  %v2346 = vshrl.u32 %v2345, 7
  %v2347 = vadd.s32 %v2346, 8
  %2348 = vset.pattern.permute.xlu0 %v2347
  %2349 = vperm.xlu0 %2348, %v2338
  %v2350 = vpop.permute.xlu0 %2349
  %v2351 = vperm.slane %v2214, 7
  %v2352 = vlaneseq
  %v2353 = vshrl.u32 %v2352, 7
  %2355 = vset.pattern.permute.xlu0 %v2353
  %2356 = vperm.xlu0 %2355, %v2351
  %v2357 = vpop.permute.xlu0 %2356
  %v2358 = vlaneseq
  %v2359 = vshrl.u32 %v2358, 7
  %v2360 = vadd.s32 %v2359, 8
  %2361 = vset.pattern.permute.xlu0 %v2360
  %2362 = vperm.xlu0 %2361, %v2351
  %v2363 = vpop.permute.xlu0 %2362
  %v2364 = vperm.slane %v2229, 0
  %v2365 = vlaneseq
  %v2366 = vshrl.u32 %v2365, 7
  %2368 = vset.pattern.permute.xlu0 %v2366
  %2369 = vperm.xlu0 %2368, %v2364
  %v2370 = vpop.permute.xlu0 %2369
  %v2371 = vlaneseq
  %v2372 = vshrl.u32 %v2371, 7
  %v2373 = vadd.s32 %v2372, 8
  %2374 = vset.pattern.permute.xlu0 %v2373
  %2375 = vperm.xlu0 %2374, %v2364
  %v2376 = vpop.permute.xlu0 %2375
  %v2377 = vperm.slane %v2229, 1
  %v2378 = vlaneseq
  %v2379 = vshrl.u32 %v2378, 7
  %2381 = vset.pattern.permute.xlu0 %v2379
  %2382 = vperm.xlu0 %2381, %v2377
  %v2383 = vpop.permute.xlu0 %2382
  %v2384 = vlaneseq
  %v2385 = vshrl.u32 %v2384, 7
  %v2386 = vadd.s32 %v2385, 8
  %2387 = vset.pattern.permute.xlu0 %v2386
  %2388 = vperm.xlu0 %2387, %v2377
  %v2389 = vpop.permute.xlu0 %2388
  %v2390 = vperm.slane %v2229, 2
  %v2391 = vlaneseq
  %v2392 = vshrl.u32 %v2391, 7
  %2394 = vset.pattern.permute.xlu0 %v2392
  %2395 = vperm.xlu0 %2394, %v2390
  %v2396 = vpop.permute.xlu0 %2395
  %v2397 = vlaneseq
  %v2398 = vshrl.u32 %v2397, 7
  %v2399 = vadd.s32 %v2398, 8
  %2400 = vset.pattern.permute.xlu0 %v2399
  %2401 = vperm.xlu0 %2400, %v2390
  %v2402 = vpop.permute.xlu0 %2401
  %v2403 = vperm.slane %v2229, 3
  %v2404 = vlaneseq
  %v2405 = vshrl.u32 %v2404, 7
  %2407 = vset.pattern.permute.xlu0 %v2405
  %2408 = vperm.xlu0 %2407, %v2403
  %v2409 = vpop.permute.xlu0 %2408
  %v2410 = vlaneseq
  %v2411 = vshrl.u32 %v2410, 7
  %v2412 = vadd.s32 %v2411, 8
  %2413 = vset.pattern.permute.xlu0 %v2412
  %2414 = vperm.xlu0 %2413, %v2403
  %v2415 = vpop.permute.xlu0 %2414
  %v2416 = vperm.slane %v2229, 4
  %v2417 = vlaneseq
  %v2418 = vshrl.u32 %v2417, 7
  %2420 = vset.pattern.permute.xlu0 %v2418
  %2421 = vperm.xlu0 %2420, %v2416
  %v2422 = vpop.permute.xlu0 %2421
  %v2423 = vlaneseq
  %v2424 = vshrl.u32 %v2423, 7
  %v2425 = vadd.s32 %v2424, 8
  %2426 = vset.pattern.permute.xlu0 %v2425
  %2427 = vperm.xlu0 %2426, %v2416
  %v2428 = vpop.permute.xlu0 %2427
  %v2429 = vperm.slane %v2229, 5
  %v2430 = vlaneseq
  %v2431 = vshrl.u32 %v2430, 7
  %2433 = vset.pattern.permute.xlu0 %v2431
  %2434 = vperm.xlu0 %2433, %v2429
  %v2435 = vpop.permute.xlu0 %2434
  %v2436 = vlaneseq
  %v2437 = vshrl.u32 %v2436, 7
  %v2438 = vadd.s32 %v2437, 8
  %2439 = vset.pattern.permute.xlu0 %v2438
  %2440 = vperm.xlu0 %2439, %v2429
  %v2441 = vpop.permute.xlu0 %2440
  %v2442 = vperm.slane %v2229, 6
  %v2443 = vlaneseq
  %v2444 = vshrl.u32 %v2443, 7
  %2446 = vset.pattern.permute.xlu0 %v2444
  %2447 = vperm.xlu0 %2446, %v2442
  %v2448 = vpop.permute.xlu0 %2447
  %v2449 = vlaneseq
  %v2450 = vshrl.u32 %v2449, 7
  %v2451 = vadd.s32 %v2450, 8
  %2452 = vset.pattern.permute.xlu0 %v2451
  %2453 = vperm.xlu0 %2452, %v2442
  %v2454 = vpop.permute.xlu0 %2453
  %v2455 = vperm.slane %v2229, 7
  %v2456 = vlaneseq
  %v2457 = vshrl.u32 %v2456, 7
  %2459 = vset.pattern.permute.xlu0 %v2457
  %2460 = vperm.xlu0 %2459, %v2455
  %v2461 = vpop.permute.xlu0 %2460
  %v2462 = vlaneseq
  %v2463 = vshrl.u32 %v2462, 7
  %v2464 = vadd.s32 %v2463, 8
  %2465 = vset.pattern.permute.xlu0 %v2464
  %2466 = vperm.xlu0 %2465, %v2455
  %v2467 = vpop.permute.xlu0 %2466
  %v2468 = vperm.slane %v2244, 0
  %v2469 = vlaneseq
  %v2470 = vshrl.u32 %v2469, 7
  %2472 = vset.pattern.permute.xlu0 %v2470
  %2473 = vperm.xlu0 %2472, %v2468
  %v2474 = vpop.permute.xlu0 %2473
  %v2475 = vlaneseq
  %v2476 = vshrl.u32 %v2475, 7
  %v2477 = vadd.s32 %v2476, 8
  %2478 = vset.pattern.permute.xlu0 %v2477
  %2479 = vperm.xlu0 %2478, %v2468
  %v2480 = vpop.permute.xlu0 %2479
  %v2481 = vperm.slane %v2244, 1
  %v2482 = vlaneseq
  %v2483 = vshrl.u32 %v2482, 7
  %2485 = vset.pattern.permute.xlu0 %v2483
  %2486 = vperm.xlu0 %2485, %v2481
  %v2487 = vpop.permute.xlu0 %2486
  %v2488 = vlaneseq
  %v2489 = vshrl.u32 %v2488, 7
  %v2490 = vadd.s32 %v2489, 8
  %2491 = vset.pattern.permute.xlu0 %v2490
  %2492 = vperm.xlu0 %2491, %v2481
  %v2493 = vpop.permute.xlu0 %2492
  %v2494 = vperm.slane %v2244, 2
  %v2495 = vlaneseq
  %v2496 = vshrl.u32 %v2495, 7
  %2498 = vset.pattern.permute.xlu0 %v2496
  %2499 = vperm.xlu0 %2498, %v2494
  %v2500 = vpop.permute.xlu0 %2499
  %v2501 = vlaneseq
  %v2502 = vshrl.u32 %v2501, 7
  %v2503 = vadd.s32 %v2502, 8
  %2504 = vset.pattern.permute.xlu0 %v2503
  %2505 = vperm.xlu0 %2504, %v2494
  %v2506 = vpop.permute.xlu0 %2505
  %v2507 = vperm.slane %v2244, 3
  %v2508 = vlaneseq
  %v2509 = vshrl.u32 %v2508, 7
  %2511 = vset.pattern.permute.xlu0 %v2509
  %2512 = vperm.xlu0 %2511, %v2507
  %v2513 = vpop.permute.xlu0 %2512
  %v2514 = vlaneseq
  %v2515 = vshrl.u32 %v2514, 7
  %v2516 = vadd.s32 %v2515, 8
  %2517 = vset.pattern.permute.xlu0 %v2516
  %2518 = vperm.xlu0 %2517, %v2507
  %v2519 = vpop.permute.xlu0 %2518
  %v2520 = vperm.slane %v2244, 4
  %v2521 = vlaneseq
  %v2522 = vshrl.u32 %v2521, 7
  %2524 = vset.pattern.permute.xlu0 %v2522
  %2525 = vperm.xlu0 %2524, %v2520
  %v2526 = vpop.permute.xlu0 %2525
  %v2527 = vlaneseq
  %v2528 = vshrl.u32 %v2527, 7
  %v2529 = vadd.s32 %v2528, 8
  %2530 = vset.pattern.permute.xlu0 %v2529
  %2531 = vperm.xlu0 %2530, %v2520
  %v2532 = vpop.permute.xlu0 %2531
  %v2533 = vperm.slane %v2244, 5
  %v2534 = vlaneseq
  %v2535 = vshrl.u32 %v2534, 7
  %2537 = vset.pattern.permute.xlu0 %v2535
  %2538 = vperm.xlu0 %2537, %v2533
  %v2539 = vpop.permute.xlu0 %2538
  %v2540 = vlaneseq
  %v2541 = vshrl.u32 %v2540, 7
  %v2542 = vadd.s32 %v2541, 8
  %2543 = vset.pattern.permute.xlu0 %v2542
  %2544 = vperm.xlu0 %2543, %v2533
  %v2545 = vpop.permute.xlu0 %2544
  %v2546 = vperm.slane %v2244, 6
  %v2547 = vlaneseq
  %v2548 = vshrl.u32 %v2547, 7
  %2550 = vset.pattern.permute.xlu0 %v2548
  %2551 = vperm.xlu0 %2550, %v2546
  %v2552 = vpop.permute.xlu0 %2551
  %v2553 = vlaneseq
  %v2554 = vshrl.u32 %v2553, 7
  %v2555 = vadd.s32 %v2554, 8
  %2556 = vset.pattern.permute.xlu0 %v2555
  %2557 = vperm.xlu0 %2556, %v2546
  %v2558 = vpop.permute.xlu0 %2557
  %v2559 = vperm.slane %v2244, 7
  %v2560 = vlaneseq
  %v2561 = vshrl.u32 %v2560, 7
  %2563 = vset.pattern.permute.xlu0 %v2561
  %2564 = vperm.xlu0 %2563, %v2559
  %v2565 = vpop.permute.xlu0 %2564
  %v2566 = vlaneseq
  %v2567 = vshrl.u32 %v2566, 7
  %v2568 = vadd.s32 %v2567, 8
  %2569 = vset.pattern.permute.xlu0 %v2568
  %2570 = vperm.xlu0 %2569, %v2559
  %v2571 = vpop.permute.xlu0 %2570
  %v2572 = vperm.slane %v2259, 0
  %v2573 = vlaneseq
  %v2574 = vshrl.u32 %v2573, 7
  %2576 = vset.pattern.permute.xlu0 %v2574
  %2577 = vperm.xlu0 %2576, %v2572
  %v2578 = vpop.permute.xlu0 %2577
  %v2579 = vlaneseq
  %v2580 = vshrl.u32 %v2579, 7
  %v2581 = vadd.s32 %v2580, 8
  %2582 = vset.pattern.permute.xlu0 %v2581
  %2583 = vperm.xlu0 %2582, %v2572
  %v2584 = vpop.permute.xlu0 %2583
  %v2585 = vperm.slane %v2259, 1
  %v2586 = vlaneseq
  %v2587 = vshrl.u32 %v2586, 7
  %2589 = vset.pattern.permute.xlu0 %v2587
  %2590 = vperm.xlu0 %2589, %v2585
  %v2591 = vpop.permute.xlu0 %2590
  %v2592 = vlaneseq
  %v2593 = vshrl.u32 %v2592, 7
  %v2594 = vadd.s32 %v2593, 8
  %2595 = vset.pattern.permute.xlu0 %v2594
  %2596 = vperm.xlu0 %2595, %v2585
  %v2597 = vpop.permute.xlu0 %2596
  %v2598 = vperm.slane %v2259, 2
  %v2599 = vlaneseq
  %v2600 = vshrl.u32 %v2599, 7
  %2602 = vset.pattern.permute.xlu0 %v2600
  %2603 = vperm.xlu0 %2602, %v2598
  %v2604 = vpop.permute.xlu0 %2603
  %v2605 = vlaneseq
  %v2606 = vshrl.u32 %v2605, 7
  %v2607 = vadd.s32 %v2606, 8
  %2608 = vset.pattern.permute.xlu0 %v2607
  %2609 = vperm.xlu0 %2608, %v2598
  %v2610 = vpop.permute.xlu0 %2609
  %v2611 = vperm.slane %v2259, 3
  %v2612 = vlaneseq
  %v2613 = vshrl.u32 %v2612, 7
  %2615 = vset.pattern.permute.xlu0 %v2613
  %2616 = vperm.xlu0 %2615, %v2611
  %v2617 = vpop.permute.xlu0 %2616
  %v2618 = vlaneseq
  %v2619 = vshrl.u32 %v2618, 7
  %v2620 = vadd.s32 %v2619, 8
  %2621 = vset.pattern.permute.xlu0 %v2620
  %2622 = vperm.xlu0 %2621, %v2611
  %v2623 = vpop.permute.xlu0 %2622
  %v2624 = vperm.slane %v2259, 4
  %v2625 = vlaneseq
  %v2626 = vshrl.u32 %v2625, 7
  %2628 = vset.pattern.permute.xlu0 %v2626
  %2629 = vperm.xlu0 %2628, %v2624
  %v2630 = vpop.permute.xlu0 %2629
  %v2631 = vlaneseq
  %v2632 = vshrl.u32 %v2631, 7
  %v2633 = vadd.s32 %v2632, 8
  %2634 = vset.pattern.permute.xlu0 %v2633
  %2635 = vperm.xlu0 %2634, %v2624
  %v2636 = vpop.permute.xlu0 %2635
  %v2637 = vperm.slane %v2259, 5
  %v2638 = vlaneseq
  %v2639 = vshrl.u32 %v2638, 7
  %2641 = vset.pattern.permute.xlu0 %v2639
  %2642 = vperm.xlu0 %2641, %v2637
  %v2643 = vpop.permute.xlu0 %2642
  %v2644 = vlaneseq
  %v2645 = vshrl.u32 %v2644, 7
  %v2646 = vadd.s32 %v2645, 8
  %2647 = vset.pattern.permute.xlu0 %v2646
  %2648 = vperm.xlu0 %2647, %v2637
  %v2649 = vpop.permute.xlu0 %2648
  %v2650 = vperm.slane %v2259, 6
  %v2651 = vlaneseq
  %v2652 = vshrl.u32 %v2651, 7
  %2654 = vset.pattern.permute.xlu0 %v2652
  %2655 = vperm.xlu0 %2654, %v2650
  %v2656 = vpop.permute.xlu0 %2655
  %v2657 = vlaneseq
  %v2658 = vshrl.u32 %v2657, 7
  %v2659 = vadd.s32 %v2658, 8
  %2660 = vset.pattern.permute.xlu0 %v2659
  %2661 = vperm.xlu0 %2660, %v2650
  %v2662 = vpop.permute.xlu0 %2661
  %v2663 = vperm.slane %v2259, 7
  %v2664 = vlaneseq
  %v2665 = vshrl.u32 %v2664, 7
  %2667 = vset.pattern.permute.xlu0 %v2665
  %2668 = vperm.xlu0 %2667, %v2663
  %v2669 = vpop.permute.xlu0 %2668
  %v2670 = vlaneseq
  %v2671 = vshrl.u32 %v2670, 7
  %v2672 = vadd.s32 %v2671, 8
  %2673 = vset.pattern.permute.xlu0 %v2672
  %2674 = vperm.xlu0 %2673, %v2663
  %v2675 = vpop.permute.xlu0 %2674
  %v2676 = vmul.f32 %v2266, %v540
  %v2677 = vmul.f32 %v2272, %v543
  %v2678 = vmul.f32 %v2279, %v546
  %v2679 = vmul.f32 %v2285, %v549
  %v2680 = vmul.f32 %v2292, %v552
  %v2681 = vmul.f32 %v2298, %v555
  %v2682 = vmul.f32 %v2305, %v558
  %v2683 = vmul.f32 %v2311, %v561
  %v2684 = vmul.f32 %v2318, %v564
  %v2685 = vmul.f32 %v2324, %v567
  %v2686 = vmul.f32 %v2331, %v570
  %v2687 = vmul.f32 %v2337, %v573
  %v2688 = vmul.f32 %v2344, %v576
  %v2689 = vmul.f32 %v2350, %v579
  %v2690 = vmul.f32 %v2357, %v582
  %v2691 = vmul.f32 %v2363, %v585
  %v2692 = vmul.f32 %v2370, %v588
  %v2693 = vmul.f32 %v2376, %v591
  %v2694 = vmul.f32 %v2383, %v594
  %v2695 = vmul.f32 %v2389, %v597
  %v2696 = vmul.f32 %v2396, %v600
  %v2697 = vmul.f32 %v2402, %v603
  %v2698 = vmul.f32 %v2409, %v606
  %v2699 = vmul.f32 %v2415, %v609
  %v2700 = vmul.f32 %v2422, %v612
  %v2701 = vmul.f32 %v2428, %v615
  %v2702 = vmul.f32 %v2435, %v618
  %v2703 = vmul.f32 %v2441, %v621
  %v2704 = vmul.f32 %v2448, %v624
  %v2705 = vmul.f32 %v2454, %v627
  %v2706 = vmul.f32 %v2461, %v630
  %v2707 = vmul.f32 %v2467, %v633
  %v2708 = vmul.f32 %v2474, %v636
  %v2709 = vmul.f32 %v2480, %v639
  %v2710 = vmul.f32 %v2487, %v642
  %v2711 = vmul.f32 %v2493, %v645
  %v2712 = vmul.f32 %v2500, %v648
  %v2713 = vmul.f32 %v2506, %v651
  %v2714 = vmul.f32 %v2513, %v654
  %v2715 = vmul.f32 %v2519, %v657
  %v2716 = vmul.f32 %v2526, %v660
  %v2717 = vmul.f32 %v2532, %v663
  %v2718 = vmul.f32 %v2539, %v666
  %v2719 = vmul.f32 %v2545, %v669
  %v2720 = vmul.f32 %v2552, %v672
  %v2721 = vmul.f32 %v2558, %v675
  %v2722 = vmul.f32 %v2565, %v678
  %v2723 = vmul.f32 %v2571, %v681
  %v2724 = vmul.f32 %v2578, %v684
  %v2725 = vmul.f32 %v2584, %v687
  %v2726 = vmul.f32 %v2591, %v690
  %v2727 = vmul.f32 %v2597, %v693
  %v2728 = vmul.f32 %v2604, %v696
  %v2729 = vmul.f32 %v2610, %v699
  %v2730 = vmul.f32 %v2617, %v702
  %v2731 = vmul.f32 %v2623, %v705
  %v2732 = vmul.f32 %v2630, %v708
  %v2733 = vmul.f32 %v2636, %v711
  %v2734 = vmul.f32 %v2643, %v714
  %v2735 = vmul.f32 %v2649, %v717
  %v2736 = vmul.f32 %v2656, %v720
  %v2737 = vmul.f32 %v2662, %v723
  %v2738 = vmul.f32 %v2669, %v726
  %v2739 = vmul.f32 %v2675, %v729
  %v2740 = vadd.f32 %v2676, %v2677
  %v2741 = vrot.slane %v2740, 4
  %v2742 = vadd.f32 %v2740, %v2741
  %v2743 = vrot.slane %v2742, 2
  %v2744 = vadd.f32 %v2742, %v2743
  %v2745 = vrot.slane %v2744, 1
  %v2746 = vadd.f32 %v2744, %v2745
  %v2747 = vadd.f32 %v2678, %v2679
  %v2748 = vrot.slane %v2747, 4
  %v2749 = vadd.f32 %v2747, %v2748
  %v2750 = vrot.slane %v2749, 2
  %v2751 = vadd.f32 %v2749, %v2750
  %v2752 = vrot.slane %v2751, 1
  %v2753 = vadd.f32 %v2751, %v2752
  %v2754 = vadd.f32 %v2680, %v2681
  %v2755 = vrot.slane %v2754, 4
  %v2756 = vadd.f32 %v2754, %v2755
  %v2757 = vrot.slane %v2756, 2
  %v2758 = vadd.f32 %v2756, %v2757
  %v2759 = vrot.slane %v2758, 1
  %v2760 = vadd.f32 %v2758, %v2759
  %v2761 = vadd.f32 %v2682, %v2683
  %v2762 = vrot.slane %v2761, 4
  %v2763 = vadd.f32 %v2761, %v2762
  %v2764 = vrot.slane %v2763, 2
  %v2765 = vadd.f32 %v2763, %v2764
  %v2766 = vrot.slane %v2765, 1
  %v2767 = vadd.f32 %v2765, %v2766
  %v2768 = vadd.f32 %v2684, %v2685
  %v2769 = vrot.slane %v2768, 4
  %v2770 = vadd.f32 %v2768, %v2769
  %v2771 = vrot.slane %v2770, 2
  %v2772 = vadd.f32 %v2770, %v2771
  %v2773 = vrot.slane %v2772, 1
  %v2774 = vadd.f32 %v2772, %v2773
  %v2775 = vadd.f32 %v2686, %v2687
  %v2776 = vrot.slane %v2775, 4
  %v2777 = vadd.f32 %v2775, %v2776
  %v2778 = vrot.slane %v2777, 2
  %v2779 = vadd.f32 %v2777, %v2778
  %v2780 = vrot.slane %v2779, 1
  %v2781 = vadd.f32 %v2779, %v2780
  %v2782 = vadd.f32 %v2688, %v2689
  %v2783 = vrot.slane %v2782, 4
  %v2784 = vadd.f32 %v2782, %v2783
  %v2785 = vrot.slane %v2784, 2
  %v2786 = vadd.f32 %v2784, %v2785
  %v2787 = vrot.slane %v2786, 1
  %v2788 = vadd.f32 %v2786, %v2787
  %v2789 = vadd.f32 %v2690, %v2691
  %v2790 = vrot.slane %v2789, 4
  %v2791 = vadd.f32 %v2789, %v2790
  %v2792 = vrot.slane %v2791, 2
  %v2793 = vadd.f32 %v2791, %v2792
  %v2794 = vrot.slane %v2793, 1
  %v2795 = vadd.f32 %v2793, %v2794
  %v2796 = vadd.f32 %v2692, %v2693
  %v2797 = vrot.slane %v2796, 4
  %v2798 = vadd.f32 %v2796, %v2797
  %v2799 = vrot.slane %v2798, 2
  %v2800 = vadd.f32 %v2798, %v2799
  %v2801 = vrot.slane %v2800, 1
  %v2802 = vadd.f32 %v2800, %v2801
  %v2803 = vadd.f32 %v2694, %v2695
  %v2804 = vrot.slane %v2803, 4
  %v2805 = vadd.f32 %v2803, %v2804
  %v2806 = vrot.slane %v2805, 2
  %v2807 = vadd.f32 %v2805, %v2806
  %v2808 = vrot.slane %v2807, 1
  %v2809 = vadd.f32 %v2807, %v2808
  %v2810 = vadd.f32 %v2696, %v2697
  %v2811 = vrot.slane %v2810, 4
  %v2812 = vadd.f32 %v2810, %v2811
  %v2813 = vrot.slane %v2812, 2
  %v2814 = vadd.f32 %v2812, %v2813
  %v2815 = vrot.slane %v2814, 1
  %v2816 = vadd.f32 %v2814, %v2815
  %v2817 = vadd.f32 %v2698, %v2699
  %v2818 = vrot.slane %v2817, 4
  %v2819 = vadd.f32 %v2817, %v2818
  %v2820 = vrot.slane %v2819, 2
  %v2821 = vadd.f32 %v2819, %v2820
  %v2822 = vrot.slane %v2821, 1
  %v2823 = vadd.f32 %v2821, %v2822
  %v2824 = vadd.f32 %v2700, %v2701
  %v2825 = vrot.slane %v2824, 4
  %v2826 = vadd.f32 %v2824, %v2825
  %v2827 = vrot.slane %v2826, 2
  %v2828 = vadd.f32 %v2826, %v2827
  %v2829 = vrot.slane %v2828, 1
  %v2830 = vadd.f32 %v2828, %v2829
  %v2831 = vadd.f32 %v2702, %v2703
  %v2832 = vrot.slane %v2831, 4
  %v2833 = vadd.f32 %v2831, %v2832
  %v2834 = vrot.slane %v2833, 2
  %v2835 = vadd.f32 %v2833, %v2834
  %v2836 = vrot.slane %v2835, 1
  %v2837 = vadd.f32 %v2835, %v2836
  %v2838 = vadd.f32 %v2704, %v2705
  %v2839 = vrot.slane %v2838, 4
  %v2840 = vadd.f32 %v2838, %v2839
  %v2841 = vrot.slane %v2840, 2
  %v2842 = vadd.f32 %v2840, %v2841
  %v2843 = vrot.slane %v2842, 1
  %v2844 = vadd.f32 %v2842, %v2843
  %v2845 = vadd.f32 %v2706, %v2707
  %v2846 = vrot.slane %v2845, 4
  %v2847 = vadd.f32 %v2845, %v2846
  %v2848 = vrot.slane %v2847, 2
  %v2849 = vadd.f32 %v2847, %v2848
  %v2850 = vrot.slane %v2849, 1
  %v2851 = vadd.f32 %v2849, %v2850
  %v2852 = vadd.f32 %v2708, %v2709
  %v2853 = vrot.slane %v2852, 4
  %v2854 = vadd.f32 %v2852, %v2853
  %v2855 = vrot.slane %v2854, 2
  %v2856 = vadd.f32 %v2854, %v2855
  %v2857 = vrot.slane %v2856, 1
  %v2858 = vadd.f32 %v2856, %v2857
  %v2859 = vadd.f32 %v2710, %v2711
  %v2860 = vrot.slane %v2859, 4
  %v2861 = vadd.f32 %v2859, %v2860
  %v2862 = vrot.slane %v2861, 2
  %v2863 = vadd.f32 %v2861, %v2862
  %v2864 = vrot.slane %v2863, 1
  %v2865 = vadd.f32 %v2863, %v2864
  %v2866 = vadd.f32 %v2712, %v2713
  %v2867 = vrot.slane %v2866, 4
  %v2868 = vadd.f32 %v2866, %v2867
  %v2869 = vrot.slane %v2868, 2
  %v2870 = vadd.f32 %v2868, %v2869
  %v2871 = vrot.slane %v2870, 1
  %v2872 = vadd.f32 %v2870, %v2871
  %v2873 = vadd.f32 %v2714, %v2715
  %v2874 = vrot.slane %v2873, 4
  %v2875 = vadd.f32 %v2873, %v2874
  %v2876 = vrot.slane %v2875, 2
  %v2877 = vadd.f32 %v2875, %v2876
  %v2878 = vrot.slane %v2877, 1
  %v2879 = vadd.f32 %v2877, %v2878
  %v2880 = vadd.f32 %v2716, %v2717
  %v2881 = vrot.slane %v2880, 4
  %v2882 = vadd.f32 %v2880, %v2881
  %v2883 = vrot.slane %v2882, 2
  %v2884 = vadd.f32 %v2882, %v2883
  %v2885 = vrot.slane %v2884, 1
  %v2886 = vadd.f32 %v2884, %v2885
  %v2887 = vadd.f32 %v2718, %v2719
  %v2888 = vrot.slane %v2887, 4
  %v2889 = vadd.f32 %v2887, %v2888
  %v2890 = vrot.slane %v2889, 2
  %v2891 = vadd.f32 %v2889, %v2890
  %v2892 = vrot.slane %v2891, 1
  %v2893 = vadd.f32 %v2891, %v2892
  %v2894 = vadd.f32 %v2720, %v2721
  %v2895 = vrot.slane %v2894, 4
  %v2896 = vadd.f32 %v2894, %v2895
  %v2897 = vrot.slane %v2896, 2
  %v2898 = vadd.f32 %v2896, %v2897
  %v2899 = vrot.slane %v2898, 1
  %v2900 = vadd.f32 %v2898, %v2899
  %v2901 = vadd.f32 %v2722, %v2723
  %v2902 = vrot.slane %v2901, 4
  %v2903 = vadd.f32 %v2901, %v2902
  %v2904 = vrot.slane %v2903, 2
  %v2905 = vadd.f32 %v2903, %v2904
  %v2906 = vrot.slane %v2905, 1
  %v2907 = vadd.f32 %v2905, %v2906
  %v2908 = vadd.f32 %v2724, %v2725
  %v2909 = vrot.slane %v2908, 4
  %v2910 = vadd.f32 %v2908, %v2909
  %v2911 = vrot.slane %v2910, 2
  %v2912 = vadd.f32 %v2910, %v2911
  %v2913 = vrot.slane %v2912, 1
  %v2914 = vadd.f32 %v2912, %v2913
  %v2915 = vadd.f32 %v2726, %v2727
  %v2916 = vrot.slane %v2915, 4
  %v2917 = vadd.f32 %v2915, %v2916
  %v2918 = vrot.slane %v2917, 2
  %v2919 = vadd.f32 %v2917, %v2918
  %v2920 = vrot.slane %v2919, 1
  %v2921 = vadd.f32 %v2919, %v2920
  %v2922 = vadd.f32 %v2728, %v2729
  %v2923 = vrot.slane %v2922, 4
  %v2924 = vadd.f32 %v2922, %v2923
  %v2925 = vrot.slane %v2924, 2
  %v2926 = vadd.f32 %v2924, %v2925
  %v2927 = vrot.slane %v2926, 1
  %v2928 = vadd.f32 %v2926, %v2927
  %v2929 = vadd.f32 %v2730, %v2731
  %v2930 = vrot.slane %v2929, 4
  %v2931 = vadd.f32 %v2929, %v2930
  %v2932 = vrot.slane %v2931, 2
  %v2933 = vadd.f32 %v2931, %v2932
  %v2934 = vrot.slane %v2933, 1
  %v2935 = vadd.f32 %v2933, %v2934
  %v2936 = vadd.f32 %v2732, %v2733
  %v2937 = vrot.slane %v2936, 4
  %v2938 = vadd.f32 %v2936, %v2937
  %v2939 = vrot.slane %v2938, 2
  %v2940 = vadd.f32 %v2938, %v2939
  %v2941 = vrot.slane %v2940, 1
  %v2942 = vadd.f32 %v2940, %v2941
  %v2943 = vadd.f32 %v2734, %v2735
  %v2944 = vrot.slane %v2943, 4
  %v2945 = vadd.f32 %v2943, %v2944
  %v2946 = vrot.slane %v2945, 2
  %v2947 = vadd.f32 %v2945, %v2946
  %v2948 = vrot.slane %v2947, 1
  %v2949 = vadd.f32 %v2947, %v2948
  %v2950 = vadd.f32 %v2736, %v2737
  %v2951 = vrot.slane %v2950, 4
  %v2952 = vadd.f32 %v2950, %v2951
  %v2953 = vrot.slane %v2952, 2
  %v2954 = vadd.f32 %v2952, %v2953
  %v2955 = vrot.slane %v2954, 1
  %v2956 = vadd.f32 %v2954, %v2955
  %v2957 = vadd.f32 %v2738, %v2739
  %v2958 = vrot.slane %v2957, 4
  %v2959 = vadd.f32 %v2957, %v2958
  %v2960 = vrot.slane %v2959, 2
  %v2961 = vadd.f32 %v2959, %v2960
  %v2962 = vrot.slane %v2961, 1
  %v2963 = vadd.f32 %v2961, %v2962
  %v2964 = vld [vmem:[%s8] sm:$0xff]
  %v2965 = vld [vmem:[%s8 + $0x8] sm:$0xff]
  %v2966 = vld [vmem:[%s8 + $0x10] sm:$0xff]
  %v2967 = vld [vmem:[%s8 + $0x18] sm:$0xff]
  %v2968 = vld [vmem:[%s8 + $0x20] sm:$0xff]
  %v2969 = vld [vmem:[%s8 + $0x28] sm:$0xff]
  %v2970 = vld [vmem:[%s8 + $0x30] sm:$0xff]
  %v2971 = vld [vmem:[%s8 + $0x38] sm:$0xff]
  %v2972 = vld [vmem:[%s8 + $0x40] sm:$0xff]
  %v2973 = vld [vmem:[%s8 + $0x48] sm:$0xff]
  %v2974 = vld [vmem:[%s8 + $0x50] sm:$0xff]
  %v2975 = vld [vmem:[%s8 + $0x58] sm:$0xff]
  %v2976 = vld [vmem:[%s8 + $0x60] sm:$0xff]
  %v2977 = vld [vmem:[%s8 + $0x68] sm:$0xff]
  %v2978 = vld [vmem:[%s8 + $0x70] sm:$0xff]
  %v2979 = vld [vmem:[%s8 + $0x78] sm:$0xff]
  %v2980 = vld [vmem:[%s8 + $0x80] sm:$0xff]
  %v2981 = vld [vmem:[%s8 + $0x88] sm:$0xff]
  %v2982 = vld [vmem:[%s8 + $0x90] sm:$0xff]
  %v2983 = vld [vmem:[%s8 + $0x98] sm:$0xff]
  %v2984 = vld [vmem:[%s8 + $0xa0] sm:$0xff]
  %v2985 = vld [vmem:[%s8 + $0xa8] sm:$0xff]
  %v2986 = vld [vmem:[%s8 + $0xb0] sm:$0xff]
  %v2987 = vld [vmem:[%s8 + $0xb8] sm:$0xff]
  %v2988 = vld [vmem:[%s8 + $0xc0] sm:$0xff]
  %v2989 = vld [vmem:[%s8 + $0xc8] sm:$0xff]
  %v2990 = vld [vmem:[%s8 + $0xd0] sm:$0xff]
  %v2991 = vld [vmem:[%s8 + $0xd8] sm:$0xff]
  %v2992 = vld [vmem:[%s8 + $0xe0] sm:$0xff]
  %v2993 = vld [vmem:[%s8 + $0xe8] sm:$0xff]
  %v2994 = vld [vmem:[%s8 + $0xf0] sm:$0xff]
  %v2995 = vld [vmem:[%s8 + $0xf8] sm:$0xff]
  %v2996 = vld [vmem:[%s9] sm:$0x3]
  %v2998 = vperm.slane %v2996, 0
  %v2999 = vperm.slane %v2996, 1
  %v3034 = vsel %vm1477, %v2753, %v2746
  %v3035 = vsel %vm1479, %v2760, %v3034
  %v3036 = vsel %vm1481, %v2767, %v3035
  %v3037 = vsel %vm1483, %v2774, %v3036
  %v3038 = vsel %vm1485, %v2781, %v3037
  %v3039 = vsel %vm1487, %v2788, %v3038
  %v3040 = vsel %vm1489, %v2795, %v3039
  %v3041 = vsel %vm1477, %v2809, %v2802
  %v3042 = vsel %vm1479, %v2816, %v3041
  %v3043 = vsel %vm1481, %v2823, %v3042
  %v3044 = vsel %vm1483, %v2830, %v3043
  %v3045 = vsel %vm1485, %v2837, %v3044
  %v3046 = vsel %vm1487, %v2844, %v3045
  %v3047 = vsel %vm1489, %v2851, %v3046
  %v3048 = vsel %vm1477, %v2865, %v2858
  %v3049 = vsel %vm1479, %v2872, %v3048
  %v3050 = vsel %vm1481, %v2879, %v3049
  %v3051 = vsel %vm1483, %v2886, %v3050
  %v3052 = vsel %vm1485, %v2893, %v3051
  %v3053 = vsel %vm1487, %v2900, %v3052
  %v3054 = vsel %vm1489, %v2907, %v3053
  %v3055 = vsel %vm1477, %v2921, %v2914
  %v3056 = vsel %vm1479, %v2928, %v3055
  %v3057 = vsel %vm1481, %v2935, %v3056
  %v3058 = vsel %vm1483, %v2942, %v3057
  %v3059 = vsel %vm1485, %v2949, %v3058
  %v3060 = vsel %vm1487, %v2956, %v3059
  %v3061 = vsel %vm1489, %v2963, %v3060
  %3066 = vmatpush.msra.mxu0 %v2994
  %3067 = vmatpush.msra.mxu0 %v2992
  %3068 = vmatpush.msra.mxu0 %v2990
  %3069 = vmatpush.msra.mxu0 %v2988
  %3070 = vmatpush.msra.mxu0 %v2986
  %3071 = vmatpush.msra.mxu0 %v2984
  %3072 = vmatpush.msra.mxu0 %v2982
  %3073 = vmatpush.msra.mxu0 %v2980
  %3074 = vmatpush.msra.mxu0 %v2978
  %3075 = vmatpush.msra.mxu0 %v2976
  %3076 = vmatpush.msra.mxu0 %v2974
  %3077 = vmatpush.msra.mxu0 %v2972
  %3078 = vmatpush.msra.mxu0 %v2970
  %3079 = vmatpush.msra.mxu0 %v2968
  %3080 = vmatpush.msra.mxu0 %v2966
  %3081 = vmatpush.msra.mxu0 %v2964
  %3082 = vmatmul.f32.gmra.mxu0 %v3040
  %v3083 = vpop.f32.mrf.mxu0
  %v3084 = vadd.f32 %v2998, %v3083
  %3085 = vmatmul.f32.gmra.mxu0 %v3047
  %v3086 = vpop.f32.mrf.mxu0
  %v3087 = vadd.f32 %v2998, %v3086
  %3088 = vmatmul.f32.gmra.mxu0 %v3054
  %v3089 = vpop.f32.mrf.mxu0
  %v3090 = vadd.f32 %v2998, %v3089
  %3091 = vmatmul.f32.gmra.mxu0 %v3061
  %v3092 = vpop.f32.mrf.mxu0
  %v3093 = vadd.f32 %v2998, %v3092
  %3094 = vdwg.mxu0
  %3095 = vmatpush.msra.mxu0 %v2995
  %3096 = vmatpush.msra.mxu0 %v2993
  %3097 = vmatpush.msra.mxu0 %v2991
  %3098 = vmatpush.msra.mxu0 %v2989
  %3099 = vmatpush.msra.mxu0 %v2987
  %3100 = vmatpush.msra.mxu0 %v2985
  %3101 = vmatpush.msra.mxu0 %v2983
  %3102 = vmatpush.msra.mxu0 %v2981
  %3103 = vmatpush.msra.mxu0 %v2979
  %3104 = vmatpush.msra.mxu0 %v2977
  %3105 = vmatpush.msra.mxu0 %v2975
  %3106 = vmatpush.msra.mxu0 %v2973
  %3107 = vmatpush.msra.mxu0 %v2971
  %3108 = vmatpush.msra.mxu0 %v2969
  %3109 = vmatpush.msra.mxu0 %v2967
  %3110 = vmatpush.msra.mxu0 %v2965
  %3111 = vmatmul.f32.gmra.mxu0 %v3040
  %v3112 = vpop.f32.mrf.mxu0
  %v3113 = vadd.f32 %v2999, %v3112
  %3114 = vmatmul.f32.gmra.mxu0 %v3047
  %v3115 = vpop.f32.mrf.mxu0
  %v3116 = vadd.f32 %v2999, %v3115
  %3117 = vmatmul.f32.gmra.mxu0 %v3054
  %v3118 = vpop.f32.mrf.mxu0
  %v3119 = vadd.f32 %v2999, %v3118
  %3120 = vmatmul.f32.gmra.mxu0 %v3061
  %v3121 = vpop.f32.mrf.mxu0
  %v3122 = vadd.f32 %v2999, %v3121
  %3123 = vdwg.mxu0
  %v3124 = vtanh.pop %v3084
  %v3125 = vtanh.pop %v3113
  %v3126 = vtanh.pop %v3087
  %v3127 = vtanh.pop %v3116
  %v3128 = vtanh.pop %v3090
  %v3129 = vtanh.pop %v3119
  %v3130 = vtanh.pop %v3093
  %v3131 = vtanh.pop %v3122
  %v3132 = vld [vmem:[%s10] sm:$0xff]
  %v3133 = vld [vmem:[%s10 + $0x8] sm:$0xff]
  %v3134 = vld [vmem:[%s10 + $0x10] sm:$0xff]
  %v3135 = vld [vmem:[%s10 + $0x18] sm:$0xff]
  %v3136 = vld [vmem:[%s10 + $0x20] sm:$0xff]
  %v3137 = vld [vmem:[%s10 + $0x28] sm:$0xff]
  %v3138 = vld [vmem:[%s10 + $0x30] sm:$0xff]
  %v3139 = vld [vmem:[%s10 + $0x38] sm:$0xff]
  %v3140 = vld [vmem:[%s10 + $0x40] sm:$0xff]
  %v3141 = vld [vmem:[%s10 + $0x48] sm:$0xff]
  %v3142 = vld [vmem:[%s10 + $0x50] sm:$0xff]
  %v3143 = vld [vmem:[%s10 + $0x58] sm:$0xff]
  %v3144 = vld [vmem:[%s10 + $0x60] sm:$0xff]
  %v3145 = vld [vmem:[%s10 + $0x68] sm:$0xff]
  %v3146 = vld [vmem:[%s10 + $0x70] sm:$0xff]
  %v3147 = vld [vmem:[%s10 + $0x78] sm:$0xff]
  %v3148 = vld [vmem:[%s10 + $0x80] sm:$0xff]
  %v3149 = vld [vmem:[%s10 + $0x88] sm:$0xff]
  %v3150 = vld [vmem:[%s10 + $0x90] sm:$0xff]
  %v3151 = vld [vmem:[%s10 + $0x98] sm:$0xff]
  %v3152 = vld [vmem:[%s10 + $0xa0] sm:$0xff]
  %v3153 = vld [vmem:[%s10 + $0xa8] sm:$0xff]
  %v3154 = vld [vmem:[%s10 + $0xb0] sm:$0xff]
  %v3155 = vld [vmem:[%s10 + $0xb8] sm:$0xff]
  %v3156 = vld [vmem:[%s10 + $0xc0] sm:$0xff]
  %v3157 = vld [vmem:[%s10 + $0xc8] sm:$0xff]
  %v3158 = vld [vmem:[%s10 + $0xd0] sm:$0xff]
  %v3159 = vld [vmem:[%s10 + $0xd8] sm:$0xff]
  %v3160 = vld [vmem:[%s10 + $0xe0] sm:$0xff]
  %v3161 = vld [vmem:[%s10 + $0xe8] sm:$0xff]
  %v3162 = vld [vmem:[%s10 + $0xf0] sm:$0xff]
  %v3163 = vld [vmem:[%s10 + $0xf8] sm:$0xff]
  %v3164 = vld [vmem:[%s11] sm:$0x1]
  %v3166 = vperm.slane %v3164, 0
  %3168 = vmatpush.msra.mxu0 %v3147
  %3169 = vmatpush.msra.mxu0 %v3146
  %3170 = vmatpush.msra.mxu0 %v3145
  %3171 = vmatpush.msra.mxu0 %v3144
  %3172 = vmatpush.msra.mxu0 %v3143
  %3173 = vmatpush.msra.mxu0 %v3142
  %3174 = vmatpush.msra.mxu0 %v3141
  %3175 = vmatpush.msra.mxu0 %v3140
  %3176 = vmatpush.msra.mxu0 %v3139
  %3177 = vmatpush.msra.mxu0 %v3138
  %3178 = vmatpush.msra.mxu0 %v3137
  %3179 = vmatpush.msra.mxu0 %v3136
  %3180 = vmatpush.msra.mxu0 %v3135
  %3181 = vmatpush.msra.mxu0 %v3134
  %3182 = vmatpush.msra.mxu0 %v3133
  %3183 = vmatpush.msra.mxu0 %v3132
  %3184 = vmatmul.f32.gmra.mxu0 %v3124
  %v3185 = vpop.f32.mrf.mxu0
  %v3186 = vadd.f32 %v3166, %v3185
  %3187 = vmatmul.f32.gmra.mxu0 %v3126
  %v3188 = vpop.f32.mrf.mxu0
  %v3189 = vadd.f32 %v3166, %v3188
  %3190 = vmatmul.f32.gmra.mxu0 %v3128
  %v3191 = vpop.f32.mrf.mxu0
  %v3192 = vadd.f32 %v3166, %v3191
  %3193 = vmatmul.f32.gmra.mxu0 %v3130
  %v3194 = vpop.f32.mrf.mxu0
  %v3195 = vadd.f32 %v3166, %v3194
  %3196 = vdwg.mxu0
  %3197 = vmatpush.msra.mxu0 %v3163
  %3198 = vmatpush.msra.mxu0 %v3162
  %3199 = vmatpush.msra.mxu0 %v3161
  %3200 = vmatpush.msra.mxu0 %v3160
  %3201 = vmatpush.msra.mxu0 %v3159
  %3202 = vmatpush.msra.mxu0 %v3158
  %3203 = vmatpush.msra.mxu0 %v3157
  %3204 = vmatpush.msra.mxu0 %v3156
  %3205 = vmatpush.msra.mxu0 %v3155
  %3206 = vmatpush.msra.mxu0 %v3154
  %3207 = vmatpush.msra.mxu0 %v3153
  %3208 = vmatpush.msra.mxu0 %v3152
  %3209 = vmatpush.msra.mxu0 %v3151
  %3210 = vmatpush.msra.mxu0 %v3150
  %3211 = vmatpush.msra.mxu0 %v3149
  %3212 = vmatpush.msra.mxu0 %v3148
  %3213 = vmatmul.f32.gmra.mxu0 %v3125
  %v3214 = vpop.f32.mrf.mxu0
  %v3215 = vadd.f32 %v3186, %v3214
  %3216 = vmatmul.f32.gmra.mxu0 %v3127
  %v3217 = vpop.f32.mrf.mxu0
  %v3218 = vadd.f32 %v3189, %v3217
  %3219 = vmatmul.f32.gmra.mxu0 %v3129
  %v3220 = vpop.f32.mrf.mxu0
  %v3221 = vadd.f32 %v3192, %v3220
  %3222 = vmatmul.f32.gmra.mxu0 %v3131
  %v3223 = vpop.f32.mrf.mxu0
  %v3224 = vadd.f32 %v3195, %v3223
  %3225 = vdwg.mxu0
  %v3226 = vld [vmem:[%s4] sm:$0xf]
  %vm3227 = vcmp.gt.f32.partialorder %v3226, 0.0
  %v3228 = vsel %vm3227, 1, 0
  %v3229 = vrot.slane %v3228, 1
  %v3230 = vrot.slane %v3228, 2
  %v3231 = vrot.slane %v3228, 3
  %vm3232 = vcmp.ne.s32.totalorder %v3229, 0
  %vm3233 = vcmp.ne.s32.totalorder %v3230, 0
  %vm3234 = vcmp.ne.s32.totalorder %v3231, 0
  %v3235 = vsel %vm3232, 1, 0
  %v3236 = vsel %vm3233, 1, 0
  %v3237 = vsel %vm3234, 1, 0
  %v3238 = vperm.slane %v3228, 0
  %v3239 = vperm.slane %v3235, 0
  %v3240 = vperm.slane %v3236, 0
  %v3241 = vperm.slane %v3237, 0
  %3242 = vset.pattern.permute.xlu0 0
  %3243 = vperm.xlu0 %3242, %v3238
  %v3244 = vpop.permute.xlu0 %3243
  %3245 = vset.pattern.permute.xlu0 0
  %3246 = vperm.xlu0 %3245, %v3239
  %v3247 = vpop.permute.xlu0 %3246
  %3248 = vset.pattern.permute.xlu0 0
  %3249 = vperm.xlu0 %3248, %v3240
  %v3250 = vpop.permute.xlu0 %3249
  %3251 = vset.pattern.permute.xlu0 0
  %3252 = vperm.xlu0 %3251, %v3241
  %v3253 = vpop.permute.xlu0 %3252
  %vm3254 = vcmp.eq.s32.totalorder %v3244, 1
  %vm3255 = vcmp.eq.s32.totalorder %v3247, 1
  %vm3256 = vcmp.eq.s32.totalorder %v3250, 1
  %vm3257 = vcmp.eq.s32.totalorder %v3253, 1
  %3262 = vrot.lane.b32.xlu0 %v3215, 2
  %v3263 = vpop.permute.xlu0 %3262
  %3264 = vrot.lane.b32.xlu0 %v3218, 2
  %v3265 = vpop.permute.xlu0 %3264
  %3266 = vrot.lane.b32.xlu0 %v3221, 2
  %v3267 = vpop.permute.xlu0 %3266
  %3268 = vrot.lane.b32.xlu0 %v3224, 2
  %v3269 = vpop.permute.xlu0 %3268
  %v3274 = vsel %vm3254, %v3215, %v3263
  %v3275 = vsel %vm3255, %v3218, %v3265
  %v3276 = vsel %vm3256, %v3221, %v3267
  %v3277 = vsel %vm3257, %v3224, %v3269
  %3282 = vrot.lane.b32.xlu0 %v3274, 126
  %v3283 = vpop.permute.xlu0 %3282
  %3284 = vrot.lane.b32.xlu0 %v3275, 126
  %v3285 = vpop.permute.xlu0 %3284
  %3286 = vrot.lane.b32.xlu0 %v3276, 126
  %v3287 = vpop.permute.xlu0 %3286
  %3288 = vrot.lane.b32.xlu0 %v3277, 126
  %v3289 = vpop.permute.xlu0 %3288
  %vm3294 = vcmask 15360
  %3295 = vst.msk [vmem:[%s16] sm:$0xff] %vm3294, %v3283
  %3296 = vst.msk [vmem:[%s16 + $0x8] sm:$0xff] %vm3294, %v3285
  %3297 = vst.msk [vmem:[%s16 + $0x10] sm:$0xff] %vm3294, %v3287
  %3298 = vst.msk [vmem:[%s16 + $0x18] sm:$0xff] %vm3294, %v3289
  %v3299 = vld [vmem:[%s3] sm:$0xff]
  %v3300 = vld [vmem:[%s3 + $0x8] sm:$0xff]
  %v3301 = vld [vmem:[%s3 + $0x10] sm:$0xff]
  %v3302 = vld [vmem:[%s3 + $0x18] sm:$0xff]
  %vm3303 = vcmp.gt.f32.partialorder %v3299, 0.0
  %vm3304 = vcmp.gt.f32.partialorder %v3300, 0.0
  %vm3305 = vcmp.gt.f32.partialorder %v3301, 0.0
  %vm3306 = vcmp.gt.f32.partialorder %v3302, 0.0
  %3307 = vrot.lane.b32.xlu0 %v3274, 1
  %v3308 = vpop.permute.xlu0 %3307
  %3309 = vrot.lane.b32.xlu0 %v3275, 1
  %v3310 = vpop.permute.xlu0 %3309
  %3311 = vrot.lane.b32.xlu0 %v3276, 1
  %v3312 = vpop.permute.xlu0 %3311
  %3313 = vrot.lane.b32.xlu0 %v3277, 1
  %v3314 = vpop.permute.xlu0 %3313
  %vm3319 = vcmp.gt.f32.partialorder %v3274, %v3308
  %vm3320 = vcmp.gt.f32.partialorder %v3275, %v3310
  %vm3321 = vcmp.gt.f32.partialorder %v3276, %v3312
  %vm3322 = vcmp.gt.f32.partialorder %v3277, %v3314
  %v3323 = vsel %vm3319, 1, 0
  %v3324 = vsel %vm3320, 1, 0
  %v3325 = vsel %vm3321, 1, 0
  %v3326 = vsel %vm3322, 1, 0
  %3327 = vrot.lane.b32.xlu0 %v3323, 125
  %v3328 = vpop.permute.xlu0 %3327
  %3329 = vrot.lane.b32.xlu0 %v3324, 125
  %v3330 = vpop.permute.xlu0 %3329
  %3331 = vrot.lane.b32.xlu0 %v3325, 125
  %v3332 = vpop.permute.xlu0 %3331
  %3333 = vrot.lane.b32.xlu0 %v3326, 125
  %v3334 = vpop.permute.xlu0 %3333
  %vm3335 = vcmp.ne.s32.totalorder %v3328, 0
  %vm3336 = vcmp.ne.s32.totalorder %v3330, 0
  %vm3337 = vcmp.ne.s32.totalorder %v3332, 0
  %vm3338 = vcmp.ne.s32.totalorder %v3334, 0
  %vm3339 = vmand %vm3303, %vm3335
  %vm3340 = vmand %vm3304, %vm3336
  %vm3341 = vmand %vm3305, %vm3337
  %vm3342 = vmand %vm3306, %vm3338
  %3343 = vrot.lane.b32.xlu0 %v3274, 125
  %v3344 = vpop.permute.xlu0 %3343
  %3345 = vrot.lane.b32.xlu0 %v3275, 125
  %v3346 = vpop.permute.xlu0 %3345
  %3347 = vrot.lane.b32.xlu0 %v3276, 125
  %v3348 = vpop.permute.xlu0 %3347
  %3349 = vrot.lane.b32.xlu0 %v3277, 125
  %v3350 = vpop.permute.xlu0 %3349
  %v3355 = vsel %vm3339, %v3344, -10000.0
  %v3356 = vsel %vm3340, %v3346, -10000.0
  %v3357 = vsel %vm3341, %v3348, -10000.0
  %v3358 = vsel %vm3342, %v3350, -10000.0
  %vm3359 = vcmask 7168
  %v3360 = vsel %vm3359, %v3355, -inf
  %v3361 = vrot.slane %v3360, 4
  %v3362 = vmax.f32 %v3360, %v3361
  %v3363 = vrot.slane %v3362, 2
  %v3364 = vmax.f32 %v3362, %v3363
  %v3365 = vrot.slane %v3364, 1
  %v3366 = vmax.f32 %v3364, %v3365
  %v3367 = vsel %vm3359, %v3356, -inf
  %v3368 = vrot.slane %v3367, 4
  %v3369 = vmax.f32 %v3367, %v3368
  %v3370 = vrot.slane %v3369, 2
  %v3371 = vmax.f32 %v3369, %v3370
  %v3372 = vrot.slane %v3371, 1
  %v3373 = vmax.f32 %v3371, %v3372
  %v3374 = vsel %vm3359, %v3357, -inf
  %v3375 = vrot.slane %v3374, 4
  %v3376 = vmax.f32 %v3374, %v3375
  %v3377 = vrot.slane %v3376, 2
  %v3378 = vmax.f32 %v3376, %v3377
  %v3379 = vrot.slane %v3378, 1
  %v3380 = vmax.f32 %v3378, %v3379
  %v3381 = vsel %vm3359, %v3358, -inf
  %v3382 = vrot.slane %v3381, 4
  %v3383 = vmax.f32 %v3381, %v3382
  %v3384 = vrot.slane %v3383, 2
  %v3385 = vmax.f32 %v3383, %v3384
  %v3386 = vrot.slane %v3385, 1
  %v3387 = vmax.f32 %v3385, %v3386
  %v3388 = vsub.f32 %v3355, %v3366
  %v3389 = vsub.f32 %v3356, %v3373
  %v3390 = vsub.f32 %v3357, %v3380
  %v3391 = vsub.f32 %v3358, %v3387
  %v3392 = vmul.f32 %v3388, 1.442695
  %v3393 = vpow.pop %v3392
  %v3394 = vmul.f32 %v3389, 1.442695
  %v3395 = vpow.pop %v3394
  %v3396 = vmul.f32 %v3390, 1.442695
  %v3397 = vpow.pop %v3396
  %v3398 = vmul.f32 %v3391, 1.442695
  %v3399 = vpow.pop %v3398
  %v3400 = vsel %vm3359, %v3393, 0.0
  %v3401 = vrot.slane %v3400, 4
  %v3402 = vadd.f32 %v3400, %v3401
  %v3403 = vrot.slane %v3402, 2
  %v3404 = vadd.f32 %v3402, %v3403
  %v3405 = vrot.slane %v3404, 1
  %v3406 = vadd.f32 %v3404, %v3405
  %v3407 = vsel %vm3359, %v3395, 0.0
  %v3408 = vrot.slane %v3407, 4
  %v3409 = vadd.f32 %v3407, %v3408
  %v3410 = vrot.slane %v3409, 2
  %v3411 = vadd.f32 %v3409, %v3410
  %v3412 = vrot.slane %v3411, 1
  %v3413 = vadd.f32 %v3411, %v3412
  %v3414 = vsel %vm3359, %v3397, 0.0
  %v3415 = vrot.slane %v3414, 4
  %v3416 = vadd.f32 %v3414, %v3415
  %v3417 = vrot.slane %v3416, 2
  %v3418 = vadd.f32 %v3416, %v3417
  %v3419 = vrot.slane %v3418, 1
  %v3420 = vadd.f32 %v3418, %v3419
  %v3421 = vsel %vm3359, %v3399, 0.0
  %v3422 = vrot.slane %v3421, 4
  %v3423 = vadd.f32 %v3421, %v3422
  %v3424 = vrot.slane %v3423, 2
  %v3425 = vadd.f32 %v3423, %v3424
  %v3426 = vrot.slane %v3425, 1
  %v3427 = vadd.f32 %v3425, %v3426
  %v3428 = vrcp.pop %v3406
  %v3429 = vmul.f32 %v3406, %v3428
  %v3430 = vsub.f32 1.0, %v3429
  %v3431 = vmul.f32 %v3428, %v3430
  %v3432 = vadd.f32 %v3428, %v3431
  %vm3433 = vweird.f32 %v3406
  %vm3434 = vweird.f32 %v3428
  %vm3435 = vmor %vm3433, %vm3434
  %v3436 = vsel %vm3435, %v3428, %v3432
  %v3437 = vand.u32 2147483647, %v3406
  %vm3438 = vcmp.eq.f32.partialorder %v3437, 8.507059e+37
  %v3439 = vand.u32 %v3406, 2147483648
  %v3440 = vor.u32 1.1754944e-38, %v3439
  %v3441 = vsel %vm3438, %v3440, %v3436
  %v3442 = vmul.f32 %v3393, %v3441
  %v3443 = vrcp.pop %v3413
  %v3444 = vmul.f32 %v3413, %v3443
  %v3445 = vsub.f32 1.0, %v3444
  %v3446 = vmul.f32 %v3443, %v3445
  %v3447 = vadd.f32 %v3443, %v3446
  %vm3448 = vweird.f32 %v3413
  %vm3449 = vweird.f32 %v3443
  %vm3450 = vmor %vm3448, %vm3449
  %v3451 = vsel %vm3450, %v3443, %v3447
  %v3452 = vand.u32 2147483647, %v3413
  %vm3453 = vcmp.eq.f32.partialorder %v3452, 8.507059e+37
  %v3454 = vand.u32 %v3413, 2147483648
  %v3455 = vor.u32 1.1754944e-38, %v3454
  %v3456 = vsel %vm3453, %v3455, %v3451
  %v3457 = vmul.f32 %v3395, %v3456
  %v3458 = vrcp.pop %v3420
  %v3459 = vmul.f32 %v3420, %v3458
  %v3460 = vsub.f32 1.0, %v3459
  %v3461 = vmul.f32 %v3458, %v3460
  %v3462 = vadd.f32 %v3458, %v3461
  %vm3463 = vweird.f32 %v3420
  %vm3464 = vweird.f32 %v3458
  %vm3465 = vmor %vm3463, %vm3464
  %v3466 = vsel %vm3465, %v3458, %v3462
  %v3467 = vand.u32 2147483647, %v3420
  %vm3468 = vcmp.eq.f32.partialorder %v3467, 8.507059e+37
  %v3469 = vand.u32 %v3420, 2147483648
  %v3470 = vor.u32 1.1754944e-38, %v3469
  %v3471 = vsel %vm3468, %v3470, %v3466
  %v3472 = vmul.f32 %v3397, %v3471
  %v3473 = vrcp.pop %v3427
  %v3474 = vmul.f32 %v3427, %v3473
  %v3475 = vsub.f32 1.0, %v3474
  %v3476 = vmul.f32 %v3473, %v3475
  %v3477 = vadd.f32 %v3473, %v3476
  %vm3478 = vweird.f32 %v3427
  %vm3479 = vweird.f32 %v3473
  %vm3480 = vmor %vm3478, %vm3479
  %v3481 = vsel %vm3480, %v3473, %v3477
  %v3482 = vand.u32 2147483647, %v3427
  %vm3483 = vcmp.eq.f32.partialorder %v3482, 8.507059e+37
  %v3484 = vand.u32 %v3427, 2147483648
  %v3485 = vor.u32 1.1754944e-38, %v3484
  %v3486 = vsel %vm3483, %v3485, %v3481
  %v3487 = vmul.f32 %v3399, %v3486
  %3489 = vset.pattern.permute.xlu0 0
  %3490 = vperm.xlu0 %3489, %v3442
  %v3491 = vpop.permute.xlu0 %3490
  %3494 = vset.pattern.permute.xlu0 0
  %3495 = vperm.xlu0 %3494, %v3457
  %v3496 = vpop.permute.xlu0 %3495
  %3499 = vset.pattern.permute.xlu0 0
  %3500 = vperm.xlu0 %3499, %v3472
  %v3501 = vpop.permute.xlu0 %3500
  %3504 = vset.pattern.permute.xlu0 0
  %3505 = vperm.xlu0 %3504, %v3487
  %v3506 = vpop.permute.xlu0 %3505
  %v3508 = vmul.f32 %v3491, %v3040
  %v3509 = vmul.f32 %v3496, %v3047
  %v3510 = vmul.f32 %v3501, %v3054
  %v3511 = vmul.f32 %v3506, %v3061
  %v3512 = vrot.slane %v3508, 4
  %v3513 = vadd.f32 %v3508, %v3512
  %v3514 = vrot.slane %v3513, 2
  %v3515 = vadd.f32 %v3513, %v3514
  %v3516 = vrot.slane %v3515, 1
  %v3517 = vadd.f32 %v3515, %v3516
  %v3518 = vrot.slane %v3509, 4
  %v3519 = vadd.f32 %v3509, %v3518
  %v3520 = vrot.slane %v3519, 2
  %v3521 = vadd.f32 %v3519, %v3520
  %v3522 = vrot.slane %v3521, 1
  %v3523 = vadd.f32 %v3521, %v3522
  %v3524 = vrot.slane %v3510, 4
  %v3525 = vadd.f32 %v3510, %v3524
  %v3526 = vrot.slane %v3525, 2
  %v3527 = vadd.f32 %v3525, %v3526
  %v3528 = vrot.slane %v3527, 1
  %v3529 = vadd.f32 %v3527, %v3528
  %v3530 = vrot.slane %v3511, 4
  %v3531 = vadd.f32 %v3511, %v3530
  %v3532 = vrot.slane %v3531, 2
  %v3533 = vadd.f32 %v3531, %v3532
  %v3534 = vrot.slane %v3533, 1
  %v3535 = vadd.f32 %v3533, %v3534
  %v3536 = vld [vmem:[%s12] sm:$0xff]
  %v3537 = vld [vmem:[%s12 + $0x8] sm:$0xff]
  %v3538 = vld [vmem:[%s12 + $0x10] sm:$0xff]
  %v3539 = vld [vmem:[%s12 + $0x18] sm:$0xff]
  %v3540 = vld [vmem:[%s12 + $0x20] sm:$0xff]
  %v3541 = vld [vmem:[%s12 + $0x28] sm:$0xff]
  %v3542 = vld [vmem:[%s12 + $0x30] sm:$0xff]
  %v3543 = vld [vmem:[%s12 + $0x38] sm:$0xff]
  %v3544 = vld [vmem:[%s12 + $0x40] sm:$0xff]
  %v3545 = vld [vmem:[%s12 + $0x48] sm:$0xff]
  %v3546 = vld [vmem:[%s12 + $0x50] sm:$0xff]
  %v3547 = vld [vmem:[%s12 + $0x58] sm:$0xff]
  %v3548 = vld [vmem:[%s12 + $0x60] sm:$0xff]
  %v3549 = vld [vmem:[%s12 + $0x68] sm:$0xff]
  %v3550 = vld [vmem:[%s12 + $0x70] sm:$0xff]
  %v3551 = vld [vmem:[%s12 + $0x78] sm:$0xff]
  %v3552 = vld [vmem:[%s12 + $0x80] sm:$0xff]
  %v3553 = vld [vmem:[%s12 + $0x88] sm:$0xff]
  %v3554 = vld [vmem:[%s12 + $0x90] sm:$0xff]
  %v3555 = vld [vmem:[%s12 + $0x98] sm:$0xff]
  %v3556 = vld [vmem:[%s12 + $0xa0] sm:$0xff]
  %v3557 = vld [vmem:[%s12 + $0xa8] sm:$0xff]
  %v3558 = vld [vmem:[%s12 + $0xb0] sm:$0xff]
  %v3559 = vld [vmem:[%s12 + $0xb8] sm:$0xff]
  %v3560 = vld [vmem:[%s12 + $0xc0] sm:$0xff]
  %v3561 = vld [vmem:[%s12 + $0xc8] sm:$0xff]
  %v3562 = vld [vmem:[%s12 + $0xd0] sm:$0xff]
  %v3563 = vld [vmem:[%s12 + $0xd8] sm:$0xff]
  %v3564 = vld [vmem:[%s12 + $0xe0] sm:$0xff]
  %v3565 = vld [vmem:[%s12 + $0xe8] sm:$0xff]
  %v3566 = vld [vmem:[%s12 + $0xf0] sm:$0xff]
  %v3567 = vld [vmem:[%s12 + $0xf8] sm:$0xff]
  %v3568 = vld [vmem:[%s13] sm:$0x3]
  %v3570 = vperm.slane %v3568, 0
  %v3571 = vperm.slane %v3568, 1
  %v3578 = vsel %vm1477, %v3523, %v3517
  %v3579 = vsel %vm1479, %v3529, %v3578
  %v3580 = vsel %vm1481, %v3535, %v3579
  %3582 = vmatpush.msra.mxu0 %v3566
  %3583 = vmatpush.msra.mxu0 %v3564
  %3584 = vmatpush.msra.mxu0 %v3562
  %3585 = vmatpush.msra.mxu0 %v3560
  %3586 = vmatpush.msra.mxu0 %v3558
  %3587 = vmatpush.msra.mxu0 %v3556
  %3588 = vmatpush.msra.mxu0 %v3554
  %3589 = vmatpush.msra.mxu0 %v3552
  %3590 = vmatpush.msra.mxu0 %v3550
  %3591 = vmatpush.msra.mxu0 %v3548
  %3592 = vmatpush.msra.mxu0 %v3546
  %3593 = vmatpush.msra.mxu0 %v3544
  %3594 = vmatpush.msra.mxu0 %v3542
  %3595 = vmatpush.msra.mxu0 %v3540
  %3596 = vmatpush.msra.mxu0 %v3538
  %3597 = vmatpush.msra.mxu0 %v3536
  %3598 = vmatmul.f32.gmra.mxu0 %v3580
  %v3599 = vpop.f32.mrf.mxu0
  %v3600 = vadd.f32 %v3570, %v3599
  %3601 = vdwg.mxu0
  %3602 = vmatpush.msra.mxu0 %v3567
  %3603 = vmatpush.msra.mxu0 %v3565
  %3604 = vmatpush.msra.mxu0 %v3563
  %3605 = vmatpush.msra.mxu0 %v3561
  %3606 = vmatpush.msra.mxu0 %v3559
  %3607 = vmatpush.msra.mxu0 %v3557
  %3608 = vmatpush.msra.mxu0 %v3555
  %3609 = vmatpush.msra.mxu0 %v3553
  %3610 = vmatpush.msra.mxu0 %v3551
  %3611 = vmatpush.msra.mxu0 %v3549
  %3612 = vmatpush.msra.mxu0 %v3547
  %3613 = vmatpush.msra.mxu0 %v3545
  %3614 = vmatpush.msra.mxu0 %v3543
  %3615 = vmatpush.msra.mxu0 %v3541
  %3616 = vmatpush.msra.mxu0 %v3539
  %3617 = vmatpush.msra.mxu0 %v3537
  %3618 = vmatmul.f32.gmra.mxu0 %v3580
  %v3619 = vpop.f32.mrf.mxu0
  %v3620 = vadd.f32 %v3571, %v3619
  %3621 = vdwg.mxu0
  %v3622 = vtanh.pop %v3600
  %v3623 = vtanh.pop %v3620
  %v3624 = vld [vmem:[%s14] sm:$0xff]
  %v3625 = vld [vmem:[%s14 + $0x8] sm:$0xff]
  %v3626 = vld [vmem:[%s14 + $0x10] sm:$0xff]
  %v3627 = vld [vmem:[%s14 + $0x18] sm:$0xff]
  %v3628 = vld [vmem:[%s14 + $0x20] sm:$0xff]
  %v3629 = vld [vmem:[%s14 + $0x28] sm:$0xff]
  %v3630 = vld [vmem:[%s14 + $0x30] sm:$0xff]
  %v3631 = vld [vmem:[%s14 + $0x38] sm:$0xff]
  %v3632 = vld [vmem:[%s14 + $0x40] sm:$0xff]
  %v3633 = vld [vmem:[%s14 + $0x48] sm:$0xff]
  %v3634 = vld [vmem:[%s14 + $0x50] sm:$0xff]
  %v3635 = vld [vmem:[%s14 + $0x58] sm:$0xff]
  %v3636 = vld [vmem:[%s14 + $0x60] sm:$0xff]
  %v3637 = vld [vmem:[%s14 + $0x68] sm:$0xff]
  %v3638 = vld [vmem:[%s14 + $0x70] sm:$0xff]
  %v3639 = vld [vmem:[%s14 + $0x78] sm:$0xff]
  %v3640 = vld [vmem:[%s14 + $0x80] sm:$0xff]
  %v3641 = vld [vmem:[%s14 + $0x88] sm:$0xff]
  %v3642 = vld [vmem:[%s14 + $0x90] sm:$0xff]
  %v3643 = vld [vmem:[%s14 + $0x98] sm:$0xff]
  %v3644 = vld [vmem:[%s14 + $0xa0] sm:$0xff]
  %v3645 = vld [vmem:[%s14 + $0xa8] sm:$0xff]
  %v3646 = vld [vmem:[%s14 + $0xb0] sm:$0xff]
  %v3647 = vld [vmem:[%s14 + $0xb8] sm:$0xff]
  %v3648 = vld [vmem:[%s14 + $0xc0] sm:$0xff]
  %v3649 = vld [vmem:[%s14 + $0xc8] sm:$0xff]
  %v3650 = vld [vmem:[%s14 + $0xd0] sm:$0xff]
  %v3651 = vld [vmem:[%s14 + $0xd8] sm:$0xff]
  %v3652 = vld [vmem:[%s14 + $0xe0] sm:$0xff]
  %v3653 = vld [vmem:[%s14 + $0xe8] sm:$0xff]
  %v3654 = vld [vmem:[%s14 + $0xf0] sm:$0xff]
  %v3655 = vld [vmem:[%s14 + $0xf8] sm:$0xff]
  %v3656 = vld [vmem:[%s15] sm:$0x1]
  %v3658 = vperm.slane %v3656, 0
  %3660 = vmatpush.msra.mxu0 %v3639
  %3661 = vmatpush.msra.mxu0 %v3638
  %3662 = vmatpush.msra.mxu0 %v3637
  %3663 = vmatpush.msra.mxu0 %v3636
  %3664 = vmatpush.msra.mxu0 %v3635
  %3665 = vmatpush.msra.mxu0 %v3634
  %3666 = vmatpush.msra.mxu0 %v3633
  %3667 = vmatpush.msra.mxu0 %v3632
  %3668 = vmatpush.msra.mxu0 %v3631
  %3669 = vmatpush.msra.mxu0 %v3630
  %3670 = vmatpush.msra.mxu0 %v3629
  %3671 = vmatpush.msra.mxu0 %v3628
  %3672 = vmatpush.msra.mxu0 %v3627
  %3673 = vmatpush.msra.mxu0 %v3626
  %3674 = vmatpush.msra.mxu0 %v3625
  %3675 = vmatpush.msra.mxu0 %v3624
  %3676 = vmatmul.f32.gmra.mxu0 %v3622
  %v3677 = vpop.f32.mrf.mxu0
  %v3678 = vadd.f32 %v3658, %v3677
  %3679 = vdwg.mxu0
  %3680 = vmatpush.msra.mxu0 %v3655
  %3681 = vmatpush.msra.mxu0 %v3654
  %3682 = vmatpush.msra.mxu0 %v3653
  %3683 = vmatpush.msra.mxu0 %v3652
  %3684 = vmatpush.msra.mxu0 %v3651
  %3685 = vmatpush.msra.mxu0 %v3650
  %3686 = vmatpush.msra.mxu0 %v3649
  %3687 = vmatpush.msra.mxu0 %v3648
  %3688 = vmatpush.msra.mxu0 %v3647
  %3689 = vmatpush.msra.mxu0 %v3646
  %3690 = vmatpush.msra.mxu0 %v3645
  %3691 = vmatpush.msra.mxu0 %v3644
  %3692 = vmatpush.msra.mxu0 %v3643
  %3693 = vmatpush.msra.mxu0 %v3642
  %3694 = vmatpush.msra.mxu0 %v3641
  %3695 = vmatpush.msra.mxu0 %v3640
  %3696 = vmatmul.f32.gmra.mxu0 %v3623
  %v3697 = vpop.f32.mrf.mxu0
  %v3698 = vadd.f32 %v3678, %v3697
  %3699 = vdwg.mxu0
  %v3700 = vld [vmem:[%s4] sm:$0xf]
  %vm3701 = vcmp.gt.f32.partialorder %v3700, 0.0
  %v3702 = vsel %vm3701, 1, 0
  %3703 = vset.pattern.permute.xlu0 0
  %3704 = vperm.xlu0 %3703, %v3702
  %v3705 = vpop.permute.xlu0 %3704
  %vm3706 = vcmp.eq.s32.totalorder %v3705, 1
  %3708 = vrot.lane.b32.xlu0 %v3698, 3
  %v3709 = vpop.permute.xlu0 %3708
  %v3711 = vsel %vm3706, %v3698, %v3709
  %3713 = vrot.lane.b32.xlu0 %v3711, 125
  %v3714 = vpop.permute.xlu0 %3713
  %vm3716 = vcmask 19456
  %3717 = vst.msk [vmem:[%s17] sm:$0xf] %vm3716, %v3714
  // Predicated region
  $region66: #{forward.1} parent=0 // pred_check
    _
  $region67: #{forward.1} parent=0 // pred_check_branch
    %3719 = sbr.rel (0) target = $region69
  $region68: #{forward.1} parent=0 // pred_region
    _
  $region69: #{forward.1} parent=0 // pred_fallthru
    _
  // Predicated region
  $region70: #{forward.1} parent=0 // pred_check
    _
  $region71: #{forward.1} parent=0 // pred_check_branch
    %3721 = sbr.rel (0) target = $region73
  $region72: #{forward.1} parent=0 // pred_region
    _
  $region73: #{forward.1} parent=0 // pred_fallthru
    _
  // Predicated region
  $region74: #{forward.1} parent=0 // pred_check
    _
  $region75: #{forward.1} parent=0 // pred_check_branch
    %3723 = sbr.rel (0) target = $region77
  $region76: #{forward.1} parent=0 // pred_region
    _
  $region77: #{forward.1} parent=0 // pred_fallthru
    _
  // Predicated region
  $region78: #{forward.1} parent=0 // pred_check
    _
  $region79: #{forward.1} parent=0 // pred_check_branch
    %3725 = sbr.rel (0) target = $region81
  $region80: #{forward.1} parent=0 // pred_region
    _
  $region81: #{forward.1} parent=0 // pred_fallthru
    _

</llo_original>
